<compile_context>
chip_gen: v7x
topology: tpu7x:2x2x1
jax: 0.10.0
libtpu: 0.0.40
codegen_flags: <defaults>
</compile_context>

<pallas_src>
import numpy as np

import jax
import jax.numpy as jnp
from jax.experimental import pallas as pl
from jax.experimental.pallas import tpu as pltpu


# ---------------------------------------------------------------------------
# Model dimensions (same representative architecture as before)
# ---------------------------------------------------------------------------
IN_CH = 4
ZDIM = 16
H1, H2 = 16, 32          # encoder channel widths
SP = 16                  # input spatial size
SP2 = SP // 4            # after two stride-2 convs
FLAT = H2 * SP2 * SP2    # 32 * 4 * 4 = 512
LANE = SP2 * H2          # 128 lanes of the flattened conv feature map


# ---------------------------------------------------------------------------
# The single fused Pallas kernel
# ---------------------------------------------------------------------------
def _fused_kernel(
    x_ref, eps_ref,
    r1_ref, m1_ref, b1_ref,
    r2_ref, m2_ref, b2_ref,
    s_ref, wml_ref, bml_ref, pmu_ref, plv_ref,
    t_ref, wd_ref, bd_ref,
    r3_ref, m3_ref, b3_ref,
    r4_ref, m4_ref, b4_ref,
    mu_ref, lv_ref, z_ref, y_ref,
):
    f32 = jnp.float32

    def wdot(a, b):  # weight matmul: bf16 operands, f32 accumulation (MXU)
        return jnp.dot(a.astype(jnp.bfloat16), b.astype(jnp.bfloat16),
                       preferred_element_type=f32)

    def sdot(a, b):  # 0/1 selection matmul: kept exact in f32
        return jnp.dot(a, b, preferred_element_type=f32)

    def lrelu(v):    # LeakyReLU(0.01), PyTorch default
        return jnp.where(v > 0, v, 0.01 * v)

    def conv(x2d, r_ref_, m_ref_, bias, act):
        # y2d = sum_kh R[kh] @ (x2d @ M[kh]) + bias   (padding/stride/upsample
        # are folded into the constant R/M matrices)
        acc = sdot(r_ref_[0], wdot(x2d, m_ref_[0]))
        for kh in (1, 2):
            acc = acc + sdot(r_ref_[kh], wdot(x2d, m_ref_[kh]))
        acc = acc + bias
        return lrelu(acc) if act else acc

    # ---- encoder ------------------------------------------------------------
    x2d = x_ref[...]                                    # (B*16, 16*4)  = (32, 64)
    h1 = conv(x2d, r1_ref, m1_ref, b1_ref[...], True)   # (B*8,  8*16)  = (16, 128)
    h2 = conv(h1, r2_ref, m2_ref, b2_ref[...], True)    # (B*4,  4*32)  = (8, 128)

    # ---- fc mu || logvar (merged matmul) + fused reparameterization ---------
    stats = sdot(s_ref[0], wdot(h2, wml_ref[0]))
    for h in (1, 2, 3):
        stats = stats + sdot(s_ref[h], wdot(h2, wml_ref[h]))
    stats = stats + bml_ref[...]                        # (B, 2*ZDIM)
    mu = sdot(stats, pmu_ref[...])                      # (B, ZDIM)
    lv = sdot(stats, plv_ref[...])                      # (B, ZDIM)
    z = mu + eps_ref[...] * jnp.exp(0.5 * lv)           # reparameterize
    mu_ref[...] = mu
    lv_ref[...] = lv
    z_ref[...] = z

    # ---- decoder fc ----------------------------------------------------------
    d = sdot(t_ref[0], wdot(z, wd_ref[0]))
    for h in (1, 2, 3):
        d = d + sdot(t_ref[h], wdot(z, wd_ref[h]))
    d = lrelu(d + bd_ref[...])                          # (B*4, 4*32)   = (8, 128)

    # ---- decoder convs (2x nearest upsample folded into R/M) ----------------
    g = conv(d, r3_ref, m3_ref, b3_ref[...], True)      # (B*8,  8*16)  = (16, 128)
    y = conv(g, r4_ref, m4_ref, b4_ref[...], False)     # (B*16, 16*4)  = (32, 64)
    y_ref[...] = y


def _full_spec(shape):
    zeros = (0,) * len(shape)
    return pl.BlockSpec(shape, lambda i, _z=zeros: _z)


# ---------------------------------------------------------------------------
# Host-side packing: fold pad / stride / upsample / flatten into constant mats
# ---------------------------------------------------------------------------
def _conv_pack(w_oihw, bias, B, Hin, Win, Cin, stride, up):
    """Pack a 3x3 conv (optionally preceded by nearest 2x upsample) into
    R (3, B*Ho, B*Hin) and M (3, Win*Cin, Wo*Cout) such that
    y2d = sum_kh R[kh] @ (x2d @ M[kh]) with x2d[b*Hin+h, w*Cin+c] = x[b,h,w,c]."""
    w = np.asarray(w_oihw, np.float32)                  # (Cout, Cin, 3, 3)
    Cout = w.shape[0]
    assert w.shape[1] == Cin and w.shape[2] == 3 and w.shape[3] == 3
    Hc, Wc = Hin * up, Win * up                         # spatial size after upsample
    Ho = (Hc + 2 - 3) // stride + 1
    Wo = (Wc + 2 - 3) // stride + 1

    R = np.zeros((3, B * Ho, B * Hin), np.float32)
    for kh in range(3):
        for b in range(B):
            for oy in range(Ho):
                r = stride * oy + kh - 1                # row on padded/upsampled grid
                if 0 <= r < Hc:
                    R[kh, b * Ho + oy, b * Hin + r // up] = 1.0

    M = np.zeros((3, Win * Cin, Wo * Cout), np.float32)
    for kh in range(3):
        for ox in range(Wo):
            for kw in range(3):
                cx = stride * ox + kw - 1               # col on padded/upsampled grid
                if 0 <= cx < Wc:
                    iw = cx // up
                    M[kh, iw * Cin:(iw + 1) * Cin,
                      ox * Cout:(ox + 1) * Cout] += w[:, :, kh, kw].T

    brow = np.tile(np.asarray(bias, np.float32), Wo)[None, :]   # (1, Wo*Cout)
    return jnp.asarray(R), jnp.asarray(M), jnp.asarray(brow)


def pack_model(params, B):
    # encoder convs (stride 2, pad 1)
    R1, M1, b1 = _conv_pack(params["ec1_w"], params["ec1_b"], B, SP, SP, IN_CH, 2, 1)
    R2, M2, b2 = _conv_pack(params["ec2_w"], params["ec2_b"], B, SP // 2, SP // 2, H1, 2, 1)

    # merged fc_mu || fc_logvar, contracted per encoder row-group h
    Wml = np.concatenate([np.asarray(params["fc_mu_w"], np.float32),
                          np.asarray(params["fc_lv_w"], np.float32)], axis=1)   # (FLAT, 2Z)
    Wml_st = np.stack([Wml[h * LANE:(h + 1) * LANE] for h in range(SP2)])       # (4, 128, 2Z)
    S = np.zeros((SP2, B, B * SP2), np.float32)
    T = np.zeros((SP2, B * SP2, B), np.float32)
    for h in range(SP2):
        for b in range(B):
            S[h, b, b * SP2 + h] = 1.0
            T[h, b * SP2 + h, b] = 1.0
    bml = np.concatenate([np.asarray(params["fc_mu_b"], np.float32),
                          np.asarray(params["fc_lv_b"], np.float32)])[None, :]  # (1, 2Z)
    Pmu = np.concatenate([np.eye(ZDIM, dtype=np.float32),
                          np.zeros((ZDIM, ZDIM), np.float32)], axis=0)          # (2Z, Z)
    Plv = np.concatenate([np.zeros((ZDIM, ZDIM), np.float32),
                          np.eye(ZDIM, dtype=np.float32)], axis=0)              # (2Z, Z)

    # decoder fc, split per output row-group h
    Wd = np.asarray(params["dfc_w"], np.float32)                                # (Z, FLAT)
    Wd_st = np.stack([Wd[:, h * LANE:(h + 1) * LANE] for h in range(SP2)])      # (4, Z, 128)
    bd_img = np.tile(np.asarray(params["dfc_b"], np.float32).reshape(SP2, LANE),
                     (B, 1))                                                    # (B*4, 128)

    # decoder convs (stride 1, pad 1) with fused 2x nearest upsample
    R3, M3, b3 = _conv_pack(params["dc1_w"], params["dc1_b"], B, SP2, SP2, H2, 1, 2)
    R4, M4, b4 = _conv_pack(params["dc2_w"], params["dc2_b"], B, SP // 2, SP // 2, H1, 1, 2)

    j = jnp.asarray
    return (R1, M1, b1, R2, M2, b2,
            j(S), j(Wml_st), j(bml), j(Pmu), j(Plv),
            j(T), j(Wd_st), j(bd_img),
            R3, M3, b3, R4, M4, b4)


# ---------------------------------------------------------------------------
# Forward pass: one pallas_call for the entire model
# ---------------------------------------------------------------------------
def baur_forward(packed, x_nchw, eps):
    """Equivalent of BaurModel.forward: returns (mu, logvar, z, y_nchw)."""
    B = x_nchw.shape[0]
    # NCHW -> lane-dense 2-D layout (B*H, W*C); input-side glue only.
    x2d = jnp.transpose(x_nchw, (0, 2, 3, 1)).reshape(B * SP, SP * IN_CH)
    args = (x2d.astype(jnp.float32), eps.astype(jnp.float32)) + tuple(packed)

    out_shapes = (
        jax.ShapeDtypeStruct((B, ZDIM), jnp.float32),             # mu
        jax.ShapeDtypeStruct((B, ZDIM), jnp.float32),             # logvar
        jax.ShapeDtypeStruct((B, ZDIM), jnp.float32),             # z
        jax.ShapeDtypeStruct((B * SP, SP * IN_CH), jnp.float32),  # y (2-D layout)
    )
    mu, logvar, z, y2d = pl.pallas_call(
        _fused_kernel,
        out_shape=out_shapes,
        grid=(1,),
        in_specs=[_full_spec(a.shape) for a in args],
        out_specs=[_full_spec(s.shape) for s in out_shapes],
        compiler_params=pltpu.CompilerParams(dimension_semantics=("arbitrary",)),
    )(*args)

    y_nchw = jnp.transpose(y2d.reshape(B, SP, SP, IN_CH), (0, 3, 1, 2))
    return mu, logvar, z, y_nchw


# ---------------------------------------------------------------------------
# Parameters (same deterministic synthetic weights as before) + pure-JAX ref
# ---------------------------------------------------------------------------
def init_params(key):
    ks = jax.random.split(key, 12)

    def w(k, shape, scale=0.05):
        return scale * jax.random.normal(k, shape, jnp.float32)

    return {
        # encoder
        "ec1_w": w(ks[0], (H1, IN_CH, 3, 3)), "ec1_b": jnp.zeros((H1,), jnp.float32),
        "ec2_w": w(ks[1], (H2, H1, 3, 3)),    "ec2_b": jnp.zeros((H2,), jnp.float32),
        "fc_mu_w": w(ks[2], (FLAT, ZDIM)),    "fc_mu_b": jnp.zeros((ZDIM,), jnp.float32),
        "fc_lv_w": w(ks[3], (FLAT, ZDIM)),    "fc_lv_b": jnp.zeros((ZDIM,), jnp.float32),
        # decoder
        "dfc_w": w(ks[4], (ZDIM, FLAT)),      "dfc_b": jnp.zeros((FLAT,), jnp.float32),
        "dc1_w": w(ks[5], (H1, H2, 3, 3)),    "dc1_b": jnp.zeros((H1,), jnp.float32),
        "dc2_w": w(ks[6], (IN_CH, H1, 3, 3)), "dc2_b": jnp.zeros((IN_CH,), jnp.float32),
    }


def _ref_conv(x_nhwc, w, b, stride, pad, act):
    y = jax.lax.conv_general_dilated(
        x_nhwc, w, window_strides=(stride, stride),
        padding=[(pad, pad), (pad, pad)],
        dimension_numbers=("NHWC", "OIHW", "NHWC"),
        preferred_element_type=jnp.float32)
    y = y + b.reshape(1, 1, 1, -1)
    return jnp.where(y > 0, y, 0.01 * y) if act else y


def _ref_forward(params, x_nchw, eps):
    x = jnp.transpose(x_nchw, (0, 2, 3, 1))
    h = _ref_conv(x, params["ec1_w"], params["ec1_b"], 2, 1, True)
    h = _ref_conv(h, params["ec2_w"], params["ec2_b"], 2, 1, True)
    hf = h.reshape(h.shape[0], -1)
    mu = hf @ params["fc_mu_w"] + params["fc_mu_b"]
    lv = hf @ params["fc_lv_w"] + params["fc_lv_b"]
    z = mu + eps * jnp.exp(0.5 * lv)
    d = z @ params["dfc_w"] + params["dfc_b"]
    d = jnp.where(d > 0, d, 0.01 * d)
    d = d.reshape(z.shape[0], SP2, SP2, H2)
    d = jnp.repeat(jnp.repeat(d, 2, axis=1), 2, axis=2)
    d = _ref_conv(d, params["dc1_w"], params["dc1_b"], 1, 1, True)
    d = jnp.repeat(jnp.repeat(d, 2, axis=1), 2, axis=2)
    y = _ref_conv(d, params["dc2_w"], params["dc2_b"], 1, 1, False)
    return mu, lv, z, jnp.transpose(y, (0, 3, 1, 2))


# ---------------------------------------------------------------------------
if __name__ == "__main__":
    key = jax.random.PRNGKey(0)
    kx, kp, ke = jax.random.split(key, 3)

    B = 2
    x = jax.random.normal(kx, (B, IN_CH, SP, SP), jnp.float32)   # NCHW like torch
    params = init_params(kp)
    eps = jax.random.normal(ke, (B, ZDIM), jnp.float32)          # reparam noise

    packed = pack_model(params, B)                               # host-side, once

    fwd = jax.jit(baur_forward)
    mu, logvar, z, y = fwd(packed, x, eps)
    jax.block_until_ready((mu, logvar, z, y))

    # shape / finiteness checks
    assert mu.shape == (B, ZDIM) and logvar.shape == (B, ZDIM) and z.shape == (B, ZDIM)
    assert y.shape == (B, IN_CH, SP, SP)
    assert all(bool(jnp.all(jnp.isfinite(a))) for a in (mu, logvar, z, y))

    # pure-JAX reference check (bf16 MXU inputs -> loose tolerance)
    rmu, rlv, rz, ry = jax.jit(_ref_forward)(params, x, eps)
    for got, ref in ((mu, rmu), (logvar, rlv), (z, rz), (y, ry)):
        assert got.shape == ref.shape
        assert bool(jnp.allclose(got, ref, atol=3e-2, rtol=3e-2)), \
            float(jnp.max(jnp.abs(got - ref)))

    print("KERNEL_OK")
</pallas_src>

<mosaic_0001>
module attributes {stable_mosaic.version = 11 : i64} {
  func.func @_fused_kernel(%arg0: i32, %arg1: memref<32x64xf32, #tpu.memory_space<vmem>>, %arg2: memref<2x16xf32, #tpu.memory_space<vmem>>, %arg3: memref<3x16x32xf32, #tpu.memory_space<vmem>>, %arg4: memref<3x64x128xf32, #tpu.memory_space<vmem>>, %arg5: memref<1x128xf32, #tpu.memory_space<vmem>>, %arg6: memref<3x8x16xf32, #tpu.memory_space<vmem>>, %arg7: memref<3x128x128xf32, #tpu.memory_space<vmem>>, %arg8: memref<1x128xf32, #tpu.memory_space<vmem>>, %arg9: memref<4x2x8xf32, #tpu.memory_space<vmem>>, %arg10: memref<4x128x32xf32, #tpu.memory_space<vmem>>, %arg11: memref<1x32xf32, #tpu.memory_space<vmem>>, %arg12: memref<32x16xf32, #tpu.memory_space<vmem>>, %arg13: memref<32x16xf32, #tpu.memory_space<vmem>>, %arg14: memref<4x8x2xf32, #tpu.memory_space<vmem>>, %arg15: memref<4x16x128xf32, #tpu.memory_space<vmem>>, %arg16: memref<8x128xf32, #tpu.memory_space<vmem>>, %arg17: memref<3x16x8xf32, #tpu.memory_space<vmem>>, %arg18: memref<3x128x128xf32, #tpu.memory_space<vmem>>, %arg19: memref<1x128xf32, #tpu.memory_space<vmem>>, %arg20: memref<3x32x16xf32, #tpu.memory_space<vmem>>, %arg21: memref<3x128x64xf32, #tpu.memory_space<vmem>>, %arg22: memref<1x64xf32, #tpu.memory_space<vmem>>, %arg23: memref<2x16xf32, #tpu.memory_space<vmem>>, %arg24: memref<2x16xf32, #tpu.memory_space<vmem>>, %arg25: memref<2x16xf32, #tpu.memory_space<vmem>>, %arg26: memref<32x64xf32, #tpu.memory_space<vmem>>) attributes {dimension_semantics = [#tpu.dimension_semantics<arbitrary>], iteration_bounds = array<i64: 1>, scalar_prefetch = 0 : i64, scratch_operands = 0 : i64, tpu.core_type = #tpu.core_type<tc>, window_params = [{pipeline_mode = #tpu.pipeline_mode<synchronous>, transform_indices = @transform_0, window_bounds = array<i64: 32, 64>}, {pipeline_mode = #tpu.pipeline_mode<synchronous>, transform_indices = @transform_1, window_bounds = array<i64: 2, 16>}, {pipeline_mode = #tpu.pipeline_mode<synchronous>, transform_indices = @transform_2, window_bounds = array<i64: 3, 16, 32>}, {pipeline_mode = #tpu.pipeline_mode<synchronous>, transform_indices = @transform_3, window_bounds = array<i64: 3, 64, 128>}, {pipeline_mode = #tpu.pipeline_mode<synchronous>, transform_indices = @transform_4, window_bounds = array<i64: 1, 128>}, {pipeline_mode = #tpu.pipeline_mode<synchronous>, transform_indices = @transform_5, window_bounds = array<i64: 3, 8, 16>}, {pipeline_mode = #tpu.pipeline_mode<synchronous>, transform_indices = @transform_6, window_bounds = array<i64: 3, 128, 128>}, {pipeline_mode = #tpu.pipeline_mode<synchronous>, transform_indices = @transform_7, window_bounds = array<i64: 1, 128>}, {pipeline_mode = #tpu.pipeline_mode<synchronous>, transform_indices = @transform_8, window_bounds = array<i64: 4, 2, 8>}, {pipeline_mode = #tpu.pipeline_mode<synchronous>, transform_indices = @transform_9, window_bounds = array<i64: 4, 128, 32>}, {pipeline_mode = #tpu.pipeline_mode<synchronous>, transform_indices = @transform_10, window_bounds = array<i64: 1, 32>}, {pipeline_mode = #tpu.pipeline_mode<synchronous>, transform_indices = @transform_11, window_bounds = array<i64: 32, 16>}, {pipeline_mode = #tpu.pipeline_mode<synchronous>, transform_indices = @transform_12, window_bounds = array<i64: 32, 16>}, {pipeline_mode = #tpu.pipeline_mode<synchronous>, transform_indices = @transform_13, window_bounds = array<i64: 4, 8, 2>}, {pipeline_mode = #tpu.pipeline_mode<synchronous>, transform_indices = @transform_14, window_bounds = array<i64: 4, 16, 128>}, {pipeline_mode = #tpu.pipeline_mode<synchronous>, transform_indices = @transform_15, window_bounds = array<i64: 8, 128>}, {pipeline_mode = #tpu.pipeline_mode<synchronous>, transform_indices = @transform_16, window_bounds = array<i64: 3, 16, 8>}, {pipeline_mode = #tpu.pipeline_mode<synchronous>, transform_indices = @transform_17, window_bounds = array<i64: 3, 128, 128>}, {pipeline_mode = #tpu.pipeline_mode<synchronous>, transform_indices = @transform_18, window_bounds = array<i64: 1, 128>}, {pipeline_mode = #tpu.pipeline_mode<synchronous>, transform_indices = @transform_19, window_bounds = array<i64: 3, 32, 16>}, {pipeline_mode = #tpu.pipeline_mode<synchronous>, transform_indices = @transform_20, window_bounds = array<i64: 3, 128, 64>}, {pipeline_mode = #tpu.pipeline_mode<synchronous>, transform_indices = @transform_21, window_bounds = array<i64: 1, 64>}, {pipeline_mode = #tpu.pipeline_mode<synchronous>, transform_indices = @transform_22, window_bounds = array<i64: 2, 16>}, {pipeline_mode = #tpu.pipeline_mode<synchronous>, transform_indices = @transform_23, window_bounds = array<i64: 2, 16>}, {pipeline_mode = #tpu.pipeline_mode<synchronous>, transform_indices = @transform_24, window_bounds = array<i64: 2, 16>}, {pipeline_mode = #tpu.pipeline_mode<synchronous>, transform_indices = @transform_25, window_bounds = array<i64: 32, 64>}]} {
    %c0 = arith.constant 0 : index
    %c0_0 = arith.constant 0 : index
    %0 = vector.load %arg1[%c0, %c0_0] : memref<32x64xf32, #tpu.memory_space<vmem>>, vector<32x64xf32>
    %c0_1 = arith.constant 0 : index
    %c0_2 = arith.constant 0 : index
    %1 = vector.load %arg5[%c0_1, %c0_2] : memref<1x128xf32, #tpu.memory_space<vmem>>, vector<1x128xf32>
    %c0_3 = arith.constant 0 : index
    %c0_4 = arith.constant 0 : index
    %c0_5 = arith.constant 0 : index
    %2 = vector.load %arg3[%c0_3, %c0_4, %c0_5] : memref<3x16x32xf32, #tpu.memory_space<vmem>>, vector<1x16x32xf32>
    %3 = vector.shape_cast %2 : vector<1x16x32xf32> to vector<16x32xf32>
    %c0_6 = arith.constant 0 : index
    %c0_7 = arith.constant 0 : index
    %c0_8 = arith.constant 0 : index
    %4 = vector.load %arg4[%c0_6, %c0_7, %c0_8] : memref<3x64x128xf32, #tpu.memory_space<vmem>>, vector<1x64x128xf32>
    %5 = vector.shape_cast %4 : vector<1x64x128xf32> to vector<64x128xf32>
    %6 = arith.truncf %0 : vector<32x64xf32> to vector<32x64xbf16>
    %7 = arith.truncf %5 : vector<64x128xf32> to vector<64x128xbf16>
    %cst = arith.constant dense<0.000000e+00> : vector<32x128xf32>
    %8 = tpu.matmul %6, %7, %cst {dimension_numbers = #tpu.dot_dimension_numbers<[1], [0], [0], [1], [0, 0, 1, 1], [], []>} : vector<32x64xbf16>, vector<64x128xbf16>, vector<32x128xf32> -> vector<32x128xf32>
    %cst_9 = arith.constant dense<0.000000e+00> : vector<16x128xf32>
    %9 = tpu.matmul %3, %8, %cst_9 {dimension_numbers = #tpu.dot_dimension_numbers<[1], [0], [0], [1], [0, 0, 1, 1], [], []>} : vector<16x32xf32>, vector<32x128xf32>, vector<16x128xf32> -> vector<16x128xf32>
    %c1 = arith.constant 1 : index
    %c0_10 = arith.constant 0 : index
    %c0_11 = arith.constant 0 : index
    %10 = vector.load %arg3[%c1, %c0_10, %c0_11] : memref<3x16x32xf32, #tpu.memory_space<vmem>>, vector<1x16x32xf32>
    %11 = vector.shape_cast %10 : vector<1x16x32xf32> to vector<16x32xf32>
    %c1_12 = arith.constant 1 : index
    %c0_13 = arith.constant 0 : index
    %c0_14 = arith.constant 0 : index
    %12 = vector.load %arg4[%c1_12, %c0_13, %c0_14] : memref<3x64x128xf32, #tpu.memory_space<vmem>>, vector<1x64x128xf32>
    %13 = vector.shape_cast %12 : vector<1x64x128xf32> to vector<64x128xf32>
    %14 = arith.truncf %0 : vector<32x64xf32> to vector<32x64xbf16>
    %15 = arith.truncf %13 : vector<64x128xf32> to vector<64x128xbf16>
    %cst_15 = arith.constant dense<0.000000e+00> : vector<32x128xf32>
    %16 = tpu.matmul %14, %15, %cst_15 {dimension_numbers = #tpu.dot_dimension_numbers<[1], [0], [0], [1], [0, 0, 1, 1], [], []>} : vector<32x64xbf16>, vector<64x128xbf16>, vector<32x128xf32> -> vector<32x128xf32>
    %cst_16 = arith.constant dense<0.000000e+00> : vector<16x128xf32>
    %17 = tpu.matmul %11, %16, %cst_16 {dimension_numbers = #tpu.dot_dimension_numbers<[1], [0], [0], [1], [0, 0, 1, 1], [], []>} : vector<16x32xf32>, vector<32x128xf32>, vector<16x128xf32> -> vector<16x128xf32>
    %18 = arith.addf %9, %17 : vector<16x128xf32>
    %c2 = arith.constant 2 : index
    %c0_17 = arith.constant 0 : index
    %c0_18 = arith.constant 0 : index
    %19 = vector.load %arg3[%c2, %c0_17, %c0_18] : memref<3x16x32xf32, #tpu.memory_space<vmem>>, vector<1x16x32xf32>
    %20 = vector.shape_cast %19 : vector<1x16x32xf32> to vector<16x32xf32>
    %c2_19 = arith.constant 2 : index
    %c0_20 = arith.constant 0 : index
    %c0_21 = arith.constant 0 : index
    %21 = vector.load %arg4[%c2_19, %c0_20, %c0_21] : memref<3x64x128xf32, #tpu.memory_space<vmem>>, vector<1x64x128xf32>
    %22 = vector.shape_cast %21 : vector<1x64x128xf32> to vector<64x128xf32>
    %23 = arith.truncf %0 : vector<32x64xf32> to vector<32x64xbf16>
    %24 = arith.truncf %22 : vector<64x128xf32> to vector<64x128xbf16>
    %cst_22 = arith.constant dense<0.000000e+00> : vector<32x128xf32>
    %25 = tpu.matmul %23, %24, %cst_22 {dimension_numbers = #tpu.dot_dimension_numbers<[1], [0], [0], [1], [0, 0, 1, 1], [], []>} : vector<32x64xbf16>, vector<64x128xbf16>, vector<32x128xf32> -> vector<32x128xf32>
    %cst_23 = arith.constant dense<0.000000e+00> : vector<16x128xf32>
    %26 = tpu.matmul %20, %25, %cst_23 {dimension_numbers = #tpu.dot_dimension_numbers<[1], [0], [0], [1], [0, 0, 1, 1], [], []>} : vector<16x32xf32>, vector<32x128xf32>, vector<16x128xf32> -> vector<16x128xf32>
    %27 = arith.addf %18, %26 : vector<16x128xf32>
    %28 = vector.broadcast %1 : vector<1x128xf32> to vector<16x128xf32>
    %29 = arith.addf %27, %28 : vector<16x128xf32>
    %cst_24 = arith.constant 0.000000e+00 : f32
    %30 = vector.broadcast %cst_24 : f32 to vector<16x128xf32>
    %31 = arith.cmpf ogt, %29, %30 : vector<16x128xf32>
    %cst_25 = arith.constant 0.00999999977 : f32
    %32 = vector.broadcast %cst_25 : f32 to vector<16x128xf32>
    %33 = arith.mulf %32, %29 : vector<16x128xf32>
    %34 = arith.select %31, %29, %33 : vector<16x128xi1>, vector<16x128xf32>
    %c0_26 = arith.constant 0 : index
    %c0_27 = arith.constant 0 : index
    %35 = vector.load %arg8[%c0_26, %c0_27] : memref<1x128xf32, #tpu.memory_space<vmem>>, vector<1x128xf32>
    %c0_28 = arith.constant 0 : index
    %c0_29 = arith.constant 0 : index
    %c0_30 = arith.constant 0 : index
    %36 = vector.load %arg6[%c0_28, %c0_29, %c0_30] : memref<3x8x16xf32, #tpu.memory_space<vmem>>, vector<1x8x16xf32>
    %37 = vector.shape_cast %36 : vector<1x8x16xf32> to vector<8x16xf32>
    %c0_31 = arith.constant 0 : index
    %c0_32 = arith.constant 0 : index
    %c0_33 = arith.constant 0 : index
    %38 = vector.load %arg7[%c0_31, %c0_32, %c0_33] : memref<3x128x128xf32, #tpu.memory_space<vmem>>, vector<1x128x128xf32>
    %39 = vector.shape_cast %38 : vector<1x128x128xf32> to vector<128x128xf32>
    %40 = arith.truncf %34 : vector<16x128xf32> to vector<16x128xbf16>
    %41 = arith.truncf %39 : vector<128x128xf32> to vector<128x128xbf16>
    %cst_34 = arith.constant dense<0.000000e+00> : vector<16x128xf32>
    %42 = tpu.matmul %40, %41, %cst_34 {dimension_numbers = #tpu.dot_dimension_numbers<[1], [0], [0], [1], [0, 0, 1, 1], [], []>} : vector<16x128xbf16>, vector<128x128xbf16>, vector<16x128xf32> -> vector<16x128xf32>
    %cst_35 = arith.constant dense<0.000000e+00> : vector<8x128xf32>
    %43 = tpu.matmul %37, %42, %cst_35 {dimension_numbers = #tpu.dot_dimension_numbers<[1], [0], [0], [1], [0, 0, 1, 1], [], []>} : vector<8x16xf32>, vector<16x128xf32>, vector<8x128xf32> -> vector<8x128xf32>
    %c1_36 = arith.constant 1 : index
    %c0_37 = arith.constant 0 : index
    %c0_38 = arith.constant 0 : index
    %44 = vector.load %arg6[%c1_36, %c0_37, %c0_38] : memref<3x8x16xf32, #tpu.memory_space<vmem>>, vector<1x8x16xf32>
    %45 = vector.shape_cast %44 : vector<1x8x16xf32> to vector<8x16xf32>
    %c1_39 = arith.constant 1 : index
    %c0_40 = arith.constant 0 : index
    %c0_41 = arith.constant 0 : index
    %46 = vector.load %arg7[%c1_39, %c0_40, %c0_41] : memref<3x128x128xf32, #tpu.memory_space<vmem>>, vector<1x128x128xf32>
    %47 = vector.shape_cast %46 : vector<1x128x128xf32> to vector<128x128xf32>
    %48 = arith.truncf %34 : vector<16x128xf32> to vector<16x128xbf16>
    %49 = arith.truncf %47 : vector<128x128xf32> to vector<128x128xbf16>
    %cst_42 = arith.constant dense<0.000000e+00> : vector<16x128xf32>
    %50 = tpu.matmul %48, %49, %cst_42 {dimension_numbers = #tpu.dot_dimension_numbers<[1], [0], [0], [1], [0, 0, 1, 1], [], []>} : vector<16x128xbf16>, vector<128x128xbf16>, vector<16x128xf32> -> vector<16x128xf32>
    %cst_43 = arith.constant dense<0.000000e+00> : vector<8x128xf32>
    %51 = tpu.matmul %45, %50, %cst_43 {dimension_numbers = #tpu.dot_dimension_numbers<[1], [0], [0], [1], [0, 0, 1, 1], [], []>} : vector<8x16xf32>, vector<16x128xf32>, vector<8x128xf32> -> vector<8x128xf32>
    %52 = arith.addf %43, %51 : vector<8x128xf32>
    %c2_44 = arith.constant 2 : index
    %c0_45 = arith.constant 0 : index
    %c0_46 = arith.constant 0 : index
    %53 = vector.load %arg6[%c2_44, %c0_45, %c0_46] : memref<3x8x16xf32, #tpu.memory_space<vmem>>, vector<1x8x16xf32>
    %54 = vector.shape_cast %53 : vector<1x8x16xf32> to vector<8x16xf32>
    %c2_47 = arith.constant 2 : index
    %c0_48 = arith.constant 0 : index
    %c0_49 = arith.constant 0 : index
    %55 = vector.load %arg7[%c2_47, %c0_48, %c0_49] : memref<3x128x128xf32, #tpu.memory_space<vmem>>, vector<1x128x128xf32>
    %56 = vector.shape_cast %55 : vector<1x128x128xf32> to vector<128x128xf32>
    %57 = arith.truncf %34 : vector<16x128xf32> to vector<16x128xbf16>
    %58 = arith.truncf %56 : vector<128x128xf32> to vector<128x128xbf16>
    %cst_50 = arith.constant dense<0.000000e+00> : vector<16x128xf32>
    %59 = tpu.matmul %57, %58, %cst_50 {dimension_numbers = #tpu.dot_dimension_numbers<[1], [0], [0], [1], [0, 0, 1, 1], [], []>} : vector<16x128xbf16>, vector<128x128xbf16>, vector<16x128xf32> -> vector<16x128xf32>
    %cst_51 = arith.constant dense<0.000000e+00> : vector<8x128xf32>
    %60 = tpu.matmul %54, %59, %cst_51 {dimension_numbers = #tpu.dot_dimension_numbers<[1], [0], [0], [1], [0, 0, 1, 1], [], []>} : vector<8x16xf32>, vector<16x128xf32>, vector<8x128xf32> -> vector<8x128xf32>
    %61 = arith.addf %52, %60 : vector<8x128xf32>
    %62 = vector.broadcast %35 : vector<1x128xf32> to vector<8x128xf32>
    %63 = arith.addf %61, %62 : vector<8x128xf32>
    %cst_52 = arith.constant 0.000000e+00 : f32
    %64 = vector.broadcast %cst_52 : f32 to vector<8x128xf32>
    %65 = arith.cmpf ogt, %63, %64 : vector<8x128xf32>
    %cst_53 = arith.constant 0.00999999977 : f32
    %66 = vector.broadcast %cst_53 : f32 to vector<8x128xf32>
    %67 = arith.mulf %66, %63 : vector<8x128xf32>
    %68 = arith.select %65, %63, %67 : vector<8x128xi1>, vector<8x128xf32>
    %c0_54 = arith.constant 0 : index
    %c0_55 = arith.constant 0 : index
    %c0_56 = arith.constant 0 : index
    %69 = vector.load %arg9[%c0_54, %c0_55, %c0_56] : memref<4x2x8xf32, #tpu.memory_space<vmem>>, vector<1x2x8xf32>
    %70 = vector.shape_cast %69 : vector<1x2x8xf32> to vector<2x8xf32>
    %c0_57 = arith.constant 0 : index
    %c0_58 = arith.constant 0 : index
    %c0_59 = arith.constant 0 : index
    %71 = vector.load %arg10[%c0_57, %c0_58, %c0_59] : memref<4x128x32xf32, #tpu.memory_space<vmem>>, vector<1x128x32xf32>
    %72 = vector.shape_cast %71 : vector<1x128x32xf32> to vector<128x32xf32>
    %73 = arith.truncf %68 : vector<8x128xf32> to vector<8x128xbf16>
    %74 = arith.truncf %72 : vector<128x32xf32> to vector<128x32xbf16>
    %cst_60 = arith.constant dense<0.000000e+00> : vector<8x32xf32>
    %75 = tpu.matmul %73, %74, %cst_60 {dimension_numbers = #tpu.dot_dimension_numbers<[1], [0], [0], [1], [0, 0, 1, 1], [], []>} : vector<8x128xbf16>, vector<128x32xbf16>, vector<8x32xf32> -> vector<8x32xf32>
    %cst_61 = arith.constant dense<0.000000e+00> : vector<2x32xf32>
    %76 = tpu.matmul %70, %75, %cst_61 {dimension_numbers = #tpu.dot_dimension_numbers<[1], [0], [0], [1], [0, 0, 1, 1], [], []>} : vector<2x8xf32>, vector<8x32xf32>, vector<2x32xf32> -> vector<2x32xf32>
    %c1_62 = arith.constant 1 : index
    %c0_63 = arith.constant 0 : index
    %c0_64 = arith.constant 0 : index
    %77 = vector.load %arg9[%c1_62, %c0_63, %c0_64] : memref<4x2x8xf32, #tpu.memory_space<vmem>>, vector<1x2x8xf32>
    %78 = vector.shape_cast %77 : vector<1x2x8xf32> to vector<2x8xf32>
    %c1_65 = arith.constant 1 : index
    %c0_66 = arith.constant 0 : index
    %c0_67 = arith.constant 0 : index
    %79 = vector.load %arg10[%c1_65, %c0_66, %c0_67] : memref<4x128x32xf32, #tpu.memory_space<vmem>>, vector<1x128x32xf32>
    %80 = vector.shape_cast %79 : vector<1x128x32xf32> to vector<128x32xf32>
    %81 = arith.truncf %68 : vector<8x128xf32> to vector<8x128xbf16>
    %82 = arith.truncf %80 : vector<128x32xf32> to vector<128x32xbf16>
    %cst_68 = arith.constant dense<0.000000e+00> : vector<8x32xf32>
    %83 = tpu.matmul %81, %82, %cst_68 {dimension_numbers = #tpu.dot_dimension_numbers<[1], [0], [0], [1], [0, 0, 1, 1], [], []>} : vector<8x128xbf16>, vector<128x32xbf16>, vector<8x32xf32> -> vector<8x32xf32>
    %cst_69 = arith.constant dense<0.000000e+00> : vector<2x32xf32>
    %84 = tpu.matmul %78, %83, %cst_69 {dimension_numbers = #tpu.dot_dimension_numbers<[1], [0], [0], [1], [0, 0, 1, 1], [], []>} : vector<2x8xf32>, vector<8x32xf32>, vector<2x32xf32> -> vector<2x32xf32>
    %85 = arith.addf %76, %84 : vector<2x32xf32>
    %c2_70 = arith.constant 2 : index
    %c0_71 = arith.constant 0 : index
    %c0_72 = arith.constant 0 : index
    %86 = vector.load %arg9[%c2_70, %c0_71, %c0_72] : memref<4x2x8xf32, #tpu.memory_space<vmem>>, vector<1x2x8xf32>
    %87 = vector.shape_cast %86 : vector<1x2x8xf32> to vector<2x8xf32>
    %c2_73 = arith.constant 2 : index
    %c0_74 = arith.constant 0 : index
    %c0_75 = arith.constant 0 : index
    %88 = vector.load %arg10[%c2_73, %c0_74, %c0_75] : memref<4x128x32xf32, #tpu.memory_space<vmem>>, vector<1x128x32xf32>
    %89 = vector.shape_cast %88 : vector<1x128x32xf32> to vector<128x32xf32>
    %90 = arith.truncf %68 : vector<8x128xf32> to vector<8x128xbf16>
    %91 = arith.truncf %89 : vector<128x32xf32> to vector<128x32xbf16>
    %cst_76 = arith.constant dense<0.000000e+00> : vector<8x32xf32>
    %92 = tpu.matmul %90, %91, %cst_76 {dimension_numbers = #tpu.dot_dimension_numbers<[1], [0], [0], [1], [0, 0, 1, 1], [], []>} : vector<8x128xbf16>, vector<128x32xbf16>, vector<8x32xf32> -> vector<8x32xf32>
    %cst_77 = arith.constant dense<0.000000e+00> : vector<2x32xf32>
    %93 = tpu.matmul %87, %92, %cst_77 {dimension_numbers = #tpu.dot_dimension_numbers<[1], [0], [0], [1], [0, 0, 1, 1], [], []>} : vector<2x8xf32>, vector<8x32xf32>, vector<2x32xf32> -> vector<2x32xf32>
    %94 = arith.addf %85, %93 : vector<2x32xf32>
    %c3 = arith.constant 3 : index
    %c0_78 = arith.constant 0 : index
    %c0_79 = arith.constant 0 : index
    %95 = vector.load %arg9[%c3, %c0_78, %c0_79] : memref<4x2x8xf32, #tpu.memory_space<vmem>>, vector<1x2x8xf32>
    %96 = vector.shape_cast %95 : vector<1x2x8xf32> to vector<2x8xf32>
    %c3_80 = arith.constant 3 : index
    %c0_81 = arith.constant 0 : index
    %c0_82 = arith.constant 0 : index
    %97 = vector.load %arg10[%c3_80, %c0_81, %c0_82] : memref<4x128x32xf32, #tpu.memory_space<vmem>>, vector<1x128x32xf32>
    %98 = vector.shape_cast %97 : vector<1x128x32xf32> to vector<128x32xf32>
    %99 = arith.truncf %68 : vector<8x128xf32> to vector<8x128xbf16>
    %100 = arith.truncf %98 : vector<128x32xf32> to vector<128x32xbf16>
    %cst_83 = arith.constant dense<0.000000e+00> : vector<8x32xf32>
    %101 = tpu.matmul %99, %100, %cst_83 {dimension_numbers = #tpu.dot_dimension_numbers<[1], [0], [0], [1], [0, 0, 1, 1], [], []>} : vector<8x128xbf16>, vector<128x32xbf16>, vector<8x32xf32> -> vector<8x32xf32>
    %cst_84 = arith.constant dense<0.000000e+00> : vector<2x32xf32>
    %102 = tpu.matmul %96, %101, %cst_84 {dimension_numbers = #tpu.dot_dimension_numbers<[1], [0], [0], [1], [0, 0, 1, 1], [], []>} : vector<2x8xf32>, vector<8x32xf32>, vector<2x32xf32> -> vector<2x32xf32>
    %103 = arith.addf %94, %102 : vector<2x32xf32>
    %c0_85 = arith.constant 0 : index
    %c0_86 = arith.constant 0 : index
    %104 = vector.load %arg11[%c0_85, %c0_86] : memref<1x32xf32, #tpu.memory_space<vmem>>, vector<1x32xf32>
    %105 = vector.broadcast %104 : vector<1x32xf32> to vector<2x32xf32>
    %106 = arith.addf %103, %105 : vector<2x32xf32>
    %c0_87 = arith.constant 0 : index
    %c0_88 = arith.constant 0 : index
    %107 = vector.load %arg12[%c0_87, %c0_88] : memref<32x16xf32, #tpu.memory_space<vmem>>, vector<32x16xf32>
    %cst_89 = arith.constant dense<0.000000e+00> : vector<2x16xf32>
    %108 = tpu.matmul %106, %107, %cst_89 {dimension_numbers = #tpu.dot_dimension_numbers<[1], [0], [0], [1], [0, 0, 1, 1], [], []>} : vector<2x32xf32>, vector<32x16xf32>, vector<2x16xf32> -> vector<2x16xf32>
    %c0_90 = arith.constant 0 : index
    %c0_91 = arith.constant 0 : index
    %109 = vector.load %arg13[%c0_90, %c0_91] : memref<32x16xf32, #tpu.memory_space<vmem>>, vector<32x16xf32>
    %cst_92 = arith.constant dense<0.000000e+00> : vector<2x16xf32>
    %110 = tpu.matmul %106, %109, %cst_92 {dimension_numbers = #tpu.dot_dimension_numbers<[1], [0], [0], [1], [0, 0, 1, 1], [], []>} : vector<2x32xf32>, vector<32x16xf32>, vector<2x16xf32> -> vector<2x16xf32>
    %c0_93 = arith.constant 0 : index
    %c0_94 = arith.constant 0 : index
    %111 = vector.load %arg2[%c0_93, %c0_94] : memref<2x16xf32, #tpu.memory_space<vmem>>, vector<2x16xf32>
    %cst_95 = arith.constant 5.000000e-01 : f32
    %112 = vector.broadcast %cst_95 : f32 to vector<2x16xf32>
    %113 = arith.mulf %112, %110 : vector<2x16xf32>
    %114 = math.exp %113 : vector<2x16xf32>
    %115 = arith.mulf %111, %114 : vector<2x16xf32>
    %116 = arith.addf %108, %115 : vector<2x16xf32>
    %c0_96 = arith.constant 0 : index
    %c0_97 = arith.constant 0 : index
    %117 = vector.load %arg23[%c0_96, %c0_97] : memref<2x16xf32, #tpu.memory_space<vmem>>, vector<2x16xf32>
    tpu.vector_store %arg23[%c0_96, %c0_97], %108 {strides = array<i32>} : memref<2x16xf32, #tpu.memory_space<vmem>>, vector<2x16xf32>,
    %c0_98 = arith.constant 0 : index
    %c0_99 = arith.constant 0 : index
    %118 = vector.load %arg24[%c0_98, %c0_99] : memref<2x16xf32, #tpu.memory_space<vmem>>, vector<2x16xf32>
    tpu.vector_store %arg24[%c0_98, %c0_99], %110 {strides = array<i32>} : memref<2x16xf32, #tpu.memory_space<vmem>>, vector<2x16xf32>,
    %c0_100 = arith.constant 0 : index
    %c0_101 = arith.constant 0 : index
    %119 = vector.load %arg25[%c0_100, %c0_101] : memref<2x16xf32, #tpu.memory_space<vmem>>, vector<2x16xf32>
    tpu.vector_store %arg25[%c0_100, %c0_101], %116 {strides = array<i32>} : memref<2x16xf32, #tpu.memory_space<vmem>>, vector<2x16xf32>,
    %c0_102 = arith.constant 0 : index
    %c0_103 = arith.constant 0 : index
    %c0_104 = arith.constant 0 : index
    %120 = vector.load %arg14[%c0_102, %c0_103, %c0_104] : memref<4x8x2xf32, #tpu.memory_space<vmem>>, vector<1x8x2xf32>
    %121 = vector.shape_cast %120 : vector<1x8x2xf32> to vector<8x2xf32>
    %c0_105 = arith.constant 0 : index
    %c0_106 = arith.constant 0 : index
    %c0_107 = arith.constant 0 : index
    %122 = vector.load %arg15[%c0_105, %c0_106, %c0_107] : memref<4x16x128xf32, #tpu.memory_space<vmem>>, vector<1x16x128xf32>
    %123 = vector.shape_cast %122 : vector<1x16x128xf32> to vector<16x128xf32>
    %124 = arith.truncf %116 : vector<2x16xf32> to vector<2x16xbf16>
    %125 = arith.truncf %123 : vector<16x128xf32> to vector<16x128xbf16>
    %cst_108 = arith.constant dense<0.000000e+00> : vector<2x128xf32>
    %126 = tpu.matmul %124, %125, %cst_108 {dimension_numbers = #tpu.dot_dimension_numbers<[1], [0], [0], [1], [0, 0, 1, 1], [], []>} : vector<2x16xbf16>, vector<16x128xbf16>, vector<2x128xf32> -> vector<2x128xf32>
    %cst_109 = arith.constant dense<0.000000e+00> : vector<8x128xf32>
    %127 = tpu.matmul %121, %126, %cst_109 {dimension_numbers = #tpu.dot_dimension_numbers<[1], [0], [0], [1], [0, 0, 1, 1], [], []>} : vector<8x2xf32>, vector<2x128xf32>, vector<8x128xf32> -> vector<8x128xf32>
    %c1_110 = arith.constant 1 : index
    %c0_111 = arith.constant 0 : index
    %c0_112 = arith.constant 0 : index
    %128 = vector.load %arg14[%c1_110, %c0_111, %c0_112] : memref<4x8x2xf32, #tpu.memory_space<vmem>>, vector<1x8x2xf32>
    %129 = vector.shape_cast %128 : vector<1x8x2xf32> to vector<8x2xf32>
    %c1_113 = arith.constant 1 : index
    %c0_114 = arith.constant 0 : index
    %c0_115 = arith.constant 0 : index
    %130 = vector.load %arg15[%c1_113, %c0_114, %c0_115] : memref<4x16x128xf32, #tpu.memory_space<vmem>>, vector<1x16x128xf32>
    %131 = vector.shape_cast %130 : vector<1x16x128xf32> to vector<16x128xf32>
    %132 = arith.truncf %116 : vector<2x16xf32> to vector<2x16xbf16>
    %133 = arith.truncf %131 : vector<16x128xf32> to vector<16x128xbf16>
    %cst_116 = arith.constant dense<0.000000e+00> : vector<2x128xf32>
    %134 = tpu.matmul %132, %133, %cst_116 {dimension_numbers = #tpu.dot_dimension_numbers<[1], [0], [0], [1], [0, 0, 1, 1], [], []>} : vector<2x16xbf16>, vector<16x128xbf16>, vector<2x128xf32> -> vector<2x128xf32>
    %cst_117 = arith.constant dense<0.000000e+00> : vector<8x128xf32>
    %135 = tpu.matmul %129, %134, %cst_117 {dimension_numbers = #tpu.dot_dimension_numbers<[1], [0], [0], [1], [0, 0, 1, 1], [], []>} : vector<8x2xf32>, vector<2x128xf32>, vector<8x128xf32> -> vector<8x128xf32>
    %136 = arith.addf %127, %135 : vector<8x128xf32>
    %c2_118 = arith.constant 2 : index
    %c0_119 = arith.constant 0 : index
    %c0_120 = arith.constant 0 : index
    %137 = vector.load %arg14[%c2_118, %c0_119, %c0_120] : memref<4x8x2xf32, #tpu.memory_space<vmem>>, vector<1x8x2xf32>
    %138 = vector.shape_cast %137 : vector<1x8x2xf32> to vector<8x2xf32>
    %c2_121 = arith.constant 2 : index
    %c0_122 = arith.constant 0 : index
    %c0_123 = arith.constant 0 : index
    %139 = vector.load %arg15[%c2_121, %c0_122, %c0_123] : memref<4x16x128xf32, #tpu.memory_space<vmem>>, vector<1x16x128xf32>
    %140 = vector.shape_cast %139 : vector<1x16x128xf32> to vector<16x128xf32>
    %141 = arith.truncf %116 : vector<2x16xf32> to vector<2x16xbf16>
    %142 = arith.truncf %140 : vector<16x128xf32> to vector<16x128xbf16>
    %cst_124 = arith.constant dense<0.000000e+00> : vector<2x128xf32>
    %143 = tpu.matmul %141, %142, %cst_124 {dimension_numbers = #tpu.dot_dimension_numbers<[1], [0], [0], [1], [0, 0, 1, 1], [], []>} : vector<2x16xbf16>, vector<16x128xbf16>, vector<2x128xf32> -> vector<2x128xf32>
    %cst_125 = arith.constant dense<0.000000e+00> : vector<8x128xf32>
    %144 = tpu.matmul %138, %143, %cst_125 {dimension_numbers = #tpu.dot_dimension_numbers<[1], [0], [0], [1], [0, 0, 1, 1], [], []>} : vector<8x2xf32>, vector<2x128xf32>, vector<8x128xf32> -> vector<8x128xf32>
    %145 = arith.addf %136, %144 : vector<8x128xf32>
    %c3_126 = arith.constant 3 : index
    %c0_127 = arith.constant 0 : index
    %c0_128 = arith.constant 0 : index
    %146 = vector.load %arg14[%c3_126, %c0_127, %c0_128] : memref<4x8x2xf32, #tpu.memory_space<vmem>>, vector<1x8x2xf32>
    %147 = vector.shape_cast %146 : vector<1x8x2xf32> to vector<8x2xf32>
    %c3_129 = arith.constant 3 : index
    %c0_130 = arith.constant 0 : index
    %c0_131 = arith.constant 0 : index
    %148 = vector.load %arg15[%c3_129, %c0_130, %c0_131] : memref<4x16x128xf32, #tpu.memory_space<vmem>>, vector<1x16x128xf32>
    %149 = vector.shape_cast %148 : vector<1x16x128xf32> to vector<16x128xf32>
    %150 = arith.truncf %116 : vector<2x16xf32> to vector<2x16xbf16>
    %151 = arith.truncf %149 : vector<16x128xf32> to vector<16x128xbf16>
    %cst_132 = arith.constant dense<0.000000e+00> : vector<2x128xf32>
    %152 = tpu.matmul %150, %151, %cst_132 {dimension_numbers = #tpu.dot_dimension_numbers<[1], [0], [0], [1], [0, 0, 1, 1], [], []>} : vector<2x16xbf16>, vector<16x128xbf16>, vector<2x128xf32> -> vector<2x128xf32>
    %cst_133 = arith.constant dense<0.000000e+00> : vector<8x128xf32>
    %153 = tpu.matmul %147, %152, %cst_133 {dimension_numbers = #tpu.dot_dimension_numbers<[1], [0], [0], [1], [0, 0, 1, 1], [], []>} : vector<8x2xf32>, vector<2x128xf32>, vector<8x128xf32> -> vector<8x128xf32>
    %154 = arith.addf %145, %153 : vector<8x128xf32>
    %c0_134 = arith.constant 0 : index
    %c0_135 = arith.constant 0 : index
    %155 = vector.load %arg16[%c0_134, %c0_135] : memref<8x128xf32, #tpu.memory_space<vmem>>, vector<8x128xf32>
    %156 = arith.addf %154, %155 : vector<8x128xf32>
    %cst_136 = arith.constant 0.000000e+00 : f32
    %157 = vector.broadcast %cst_136 : f32 to vector<8x128xf32>
    %158 = arith.cmpf ogt, %156, %157 : vector<8x128xf32>
    %cst_137 = arith.constant 0.00999999977 : f32
    %159 = vector.broadcast %cst_137 : f32 to vector<8x128xf32>
    %160 = arith.mulf %159, %156 : vector<8x128xf32>
    %161 = arith.select %158, %156, %160 : vector<8x128xi1>, vector<8x128xf32>
    %c0_138 = arith.constant 0 : index
    %c0_139 = arith.constant 0 : index
    %162 = vector.load %arg19[%c0_138, %c0_139] : memref<1x128xf32, #tpu.memory_space<vmem>>, vector<1x128xf32>
    %c0_140 = arith.constant 0 : index
    %c0_141 = arith.constant 0 : index
    %c0_142 = arith.constant 0 : index
    %163 = vector.load %arg17[%c0_140, %c0_141, %c0_142] : memref<3x16x8xf32, #tpu.memory_space<vmem>>, vector<1x16x8xf32>
    %164 = vector.shape_cast %163 : vector<1x16x8xf32> to vector<16x8xf32>
    %c0_143 = arith.constant 0 : index
    %c0_144 = arith.constant 0 : index
    %c0_145 = arith.constant 0 : index
    %165 = vector.load %arg18[%c0_143, %c0_144, %c0_145] : memref<3x128x128xf32, #tpu.memory_space<vmem>>, vector<1x128x128xf32>
    %166 = vector.shape_cast %165 : vector<1x128x128xf32> to vector<128x128xf32>
    %167 = arith.truncf %161 : vector<8x128xf32> to vector<8x128xbf16>
    %168 = arith.truncf %166 : vector<128x128xf32> to vector<128x128xbf16>
    %cst_146 = arith.constant dense<0.000000e+00> : vector<8x128xf32>
    %169 = tpu.matmul %167, %168, %cst_146 {dimension_numbers = #tpu.dot_dimension_numbers<[1], [0], [0], [1], [0, 0, 1, 1], [], []>} : vector<8x128xbf16>, vector<128x128xbf16>, vector<8x128xf32> -> vector<8x128xf32>
    %cst_147 = arith.constant dense<0.000000e+00> : vector<16x128xf32>
    %170 = tpu.matmul %164, %169, %cst_147 {dimension_numbers = #tpu.dot_dimension_numbers<[1], [0], [0], [1], [0, 0, 1, 1], [], []>} : vector<16x8xf32>, vector<8x128xf32>, vector<16x128xf32> -> vector<16x128xf32>
    %c1_148 = arith.constant 1 : index
    %c0_149 = arith.constant 0 : index
    %c0_150 = arith.constant 0 : index
    %171 = vector.load %arg17[%c1_148, %c0_149, %c0_150] : memref<3x16x8xf32, #tpu.memory_space<vmem>>, vector<1x16x8xf32>
    %172 = vector.shape_cast %171 : vector<1x16x8xf32> to vector<16x8xf32>
    %c1_151 = arith.constant 1 : index
    %c0_152 = arith.constant 0 : index
    %c0_153 = arith.constant 0 : index
    %173 = vector.load %arg18[%c1_151, %c0_152, %c0_153] : memref<3x128x128xf32, #tpu.memory_space<vmem>>, vector<1x128x128xf32>
    %174 = vector.shape_cast %173 : vector<1x128x128xf32> to vector<128x128xf32>
    %175 = arith.truncf %161 : vector<8x128xf32> to vector<8x128xbf16>
    %176 = arith.truncf %174 : vector<128x128xf32> to vector<128x128xbf16>
    %cst_154 = arith.constant dense<0.000000e+00> : vector<8x128xf32>
    %177 = tpu.matmul %175, %176, %cst_154 {dimension_numbers = #tpu.dot_dimension_numbers<[1], [0], [0], [1], [0, 0, 1, 1], [], []>} : vector<8x128xbf16>, vector<128x128xbf16>, vector<8x128xf32> -> vector<8x128xf32>
    %cst_155 = arith.constant dense<0.000000e+00> : vector<16x128xf32>
    %178 = tpu.matmul %172, %177, %cst_155 {dimension_numbers = #tpu.dot_dimension_numbers<[1], [0], [0], [1], [0, 0, 1, 1], [], []>} : vector<16x8xf32>, vector<8x128xf32>, vector<16x128xf32> -> vector<16x128xf32>
    %179 = arith.addf %170, %178 : vector<16x128xf32>
    %c2_156 = arith.constant 2 : index
    %c0_157 = arith.constant 0 : index
    %c0_158 = arith.constant 0 : index
    %180 = vector.load %arg17[%c2_156, %c0_157, %c0_158] : memref<3x16x8xf32, #tpu.memory_space<vmem>>, vector<1x16x8xf32>
    %181 = vector.shape_cast %180 : vector<1x16x8xf32> to vector<16x8xf32>
    %c2_159 = arith.constant 2 : index
    %c0_160 = arith.constant 0 : index
    %c0_161 = arith.constant 0 : index
    %182 = vector.load %arg18[%c2_159, %c0_160, %c0_161] : memref<3x128x128xf32, #tpu.memory_space<vmem>>, vector<1x128x128xf32>
    %183 = vector.shape_cast %182 : vector<1x128x128xf32> to vector<128x128xf32>
    %184 = arith.truncf %161 : vector<8x128xf32> to vector<8x128xbf16>
    %185 = arith.truncf %183 : vector<128x128xf32> to vector<128x128xbf16>
    %cst_162 = arith.constant dense<0.000000e+00> : vector<8x128xf32>
    %186 = tpu.matmul %184, %185, %cst_162 {dimension_numbers = #tpu.dot_dimension_numbers<[1], [0], [0], [1], [0, 0, 1, 1], [], []>} : vector<8x128xbf16>, vector<128x128xbf16>, vector<8x128xf32> -> vector<8x128xf32>
    %cst_163 = arith.constant dense<0.000000e+00> : vector<16x128xf32>
    %187 = tpu.matmul %181, %186, %cst_163 {dimension_numbers = #tpu.dot_dimension_numbers<[1], [0], [0], [1], [0, 0, 1, 1], [], []>} : vector<16x8xf32>, vector<8x128xf32>, vector<16x128xf32> -> vector<16x128xf32>
    %188 = arith.addf %179, %187 : vector<16x128xf32>
    %189 = vector.broadcast %162 : vector<1x128xf32> to vector<16x128xf32>
    %190 = arith.addf %188, %189 : vector<16x128xf32>
    %cst_164 = arith.constant 0.000000e+00 : f32
    %191 = vector.broadcast %cst_164 : f32 to vector<16x128xf32>
    %192 = arith.cmpf ogt, %190, %191 : vector<16x128xf32>
    %cst_165 = arith.constant 0.00999999977 : f32
    %193 = vector.broadcast %cst_165 : f32 to vector<16x128xf32>
    %194 = arith.mulf %193, %190 : vector<16x128xf32>
    %195 = arith.select %192, %190, %194 : vector<16x128xi1>, vector<16x128xf32>
    %c0_166 = arith.constant 0 : index
    %c0_167 = arith.constant 0 : index
    %196 = vector.load %arg22[%c0_166, %c0_167] : memref<1x64xf32, #tpu.memory_space<vmem>>, vector<1x64xf32>
    %c0_168 = arith.constant 0 : index
    %c0_169 = arith.constant 0 : index
    %c0_170 = arith.constant 0 : index
    %197 = vector.load %arg20[%c0_168, %c0_169, %c0_170] : memref<3x32x16xf32, #tpu.memory_space<vmem>>, vector<1x32x16xf32>
    %198 = vector.shape_cast %197 : vector<1x32x16xf32> to vector<32x16xf32>
    %c0_171 = arith.constant 0 : index
    %c0_172 = arith.constant 0 : index
    %c0_173 = arith.constant 0 : index
    %199 = vector.load %arg21[%c0_171, %c0_172, %c0_173] : memref<3x128x64xf32, #tpu.memory_space<vmem>>, vector<1x128x64xf32>
    %200 = vector.shape_cast %199 : vector<1x128x64xf32> to vector<128x64xf32>
    %201 = arith.truncf %195 : vector<16x128xf32> to vector<16x128xbf16>
    %202 = arith.truncf %200 : vector<128x64xf32> to vector<128x64xbf16>
    %cst_174 = arith.constant dense<0.000000e+00> : vector<16x64xf32>
    %203 = tpu.matmul %201, %202, %cst_174 {dimension_numbers = #tpu.dot_dimension_numbers<[1], [0], [0], [1], [0, 0, 1, 1], [], []>} : vector<16x128xbf16>, vector<128x64xbf16>, vector<16x64xf32> -> vector<16x64xf32>
    %cst_175 = arith.constant dense<0.000000e+00> : vector<32x64xf32>
    %204 = tpu.matmul %198, %203, %cst_175 {dimension_numbers = #tpu.dot_dimension_numbers<[1], [0], [0], [1], [0, 0, 1, 1], [], []>} : vector<32x16xf32>, vector<16x64xf32>, vector<32x64xf32> -> vector<32x64xf32>
    %c1_176 = arith.constant 1 : index
    %c0_177 = arith.constant 0 : index
    %c0_178 = arith.constant 0 : index
    %205 = vector.load %arg20[%c1_176, %c0_177, %c0_178] : memref<3x32x16xf32, #tpu.memory_space<vmem>>, vector<1x32x16xf32>
    %206 = vector.shape_cast %205 : vector<1x32x16xf32> to vector<32x16xf32>
    %c1_179 = arith.constant 1 : index
    %c0_180 = arith.constant 0 : index
    %c0_181 = arith.constant 0 : index
    %207 = vector.load %arg21[%c1_179, %c0_180, %c0_181] : memref<3x128x64xf32, #tpu.memory_space<vmem>>, vector<1x128x64xf32>
    %208 = vector.shape_cast %207 : vector<1x128x64xf32> to vector<128x64xf32>
    %209 = arith.truncf %195 : vector<16x128xf32> to vector<16x128xbf16>
    %210 = arith.truncf %208 : vector<128x64xf32> to vector<128x64xbf16>
    %cst_182 = arith.constant dense<0.000000e+00> : vector<16x64xf32>
    %211 = tpu.matmul %209, %210, %cst_182 {dimension_numbers = #tpu.dot_dimension_numbers<[1], [0], [0], [1], [0, 0, 1, 1], [], []>} : vector<16x128xbf16>, vector<128x64xbf16>, vector<16x64xf32> -> vector<16x64xf32>
    %cst_183 = arith.constant dense<0.000000e+00> : vector<32x64xf32>
    %212 = tpu.matmul %206, %211, %cst_183 {dimension_numbers = #tpu.dot_dimension_numbers<[1], [0], [0], [1], [0, 0, 1, 1], [], []>} : vector<32x16xf32>, vector<16x64xf32>, vector<32x64xf32> -> vector<32x64xf32>
    %213 = arith.addf %204, %212 : vector<32x64xf32>
    %c2_184 = arith.constant 2 : index
    %c0_185 = arith.constant 0 : index
    %c0_186 = arith.constant 0 : index
    %214 = vector.load %arg20[%c2_184, %c0_185, %c0_186] : memref<3x32x16xf32, #tpu.memory_space<vmem>>, vector<1x32x16xf32>
    %215 = vector.shape_cast %214 : vector<1x32x16xf32> to vector<32x16xf32>
    %c2_187 = arith.constant 2 : index
    %c0_188 = arith.constant 0 : index
    %c0_189 = arith.constant 0 : index
    %216 = vector.load %arg21[%c2_187, %c0_188, %c0_189] : memref<3x128x64xf32, #tpu.memory_space<vmem>>, vector<1x128x64xf32>
    %217 = vector.shape_cast %216 : vector<1x128x64xf32> to vector<128x64xf32>
    %218 = arith.truncf %195 : vector<16x128xf32> to vector<16x128xbf16>
    %219 = arith.truncf %217 : vector<128x64xf32> to vector<128x64xbf16>
    %cst_190 = arith.constant dense<0.000000e+00> : vector<16x64xf32>
    %220 = tpu.matmul %218, %219, %cst_190 {dimension_numbers = #tpu.dot_dimension_numbers<[1], [0], [0], [1], [0, 0, 1, 1], [], []>} : vector<16x128xbf16>, vector<128x64xbf16>, vector<16x64xf32> -> vector<16x64xf32>
    %cst_191 = arith.constant dense<0.000000e+00> : vector<32x64xf32>
    %221 = tpu.matmul %215, %220, %cst_191 {dimension_numbers = #tpu.dot_dimension_numbers<[1], [0], [0], [1], [0, 0, 1, 1], [], []>} : vector<32x16xf32>, vector<16x64xf32>, vector<32x64xf32> -> vector<32x64xf32>
    %222 = arith.addf %213, %221 : vector<32x64xf32>
    %223 = vector.broadcast %196 : vector<1x64xf32> to vector<32x64xf32>
    %224 = arith.addf %222, %223 : vector<32x64xf32>
    %c0_192 = arith.constant 0 : index
    %c0_193 = arith.constant 0 : index
    %225 = vector.load %arg26[%c0_192, %c0_193] : memref<32x64xf32, #tpu.memory_space<vmem>>, vector<32x64xf32>
    tpu.vector_store %arg26[%c0_192, %c0_193], %224 {strides = array<i32>} : memref<32x64xf32, #tpu.memory_space<vmem>>, vector<32x64xf32>,
    return
  }
  func.func @transform_0(%arg0: i32) -> (i32, i32) {
    %c0_i32 = arith.constant 0 : i32
    %c0_i32_0 = arith.constant 0 : i32
    %c0_i32_1 = arith.constant 0 : i32
    return %c0_i32, %c0_i32_0 : i32, i32
  }
  func.func @transform_1(%arg0: i32) -> (i32, i32) {
    %c0_i32 = arith.constant 0 : i32
    %c0_i32_0 = arith.constant 0 : i32
    %c0_i32_1 = arith.constant 0 : i32
    return %c0_i32, %c0_i32_0 : i32, i32
  }
  func.func @transform_2(%arg0: i32) -> (i32, i32, i32) {
    %c0_i32 = arith.constant 0 : i32
    %c0_i32_0 = arith.constant 0 : i32
    %c0_i32_1 = arith.constant 0 : i32
    %c0_i32_2 = arith.constant 0 : i32
    return %c0_i32, %c0_i32_0, %c0_i32_1 : i32, i32, i32
  }
  func.func @transform_3(%arg0: i32) -> (i32, i32, i32) {
    %c0_i32 = arith.constant 0 : i32
    %c0_i32_0 = arith.constant 0 : i32
    %c0_i32_1 = arith.constant 0 : i32
    %c0_i32_2 = arith.constant 0 : i32
    return %c0_i32, %c0_i32_0, %c0_i32_1 : i32, i32, i32
  }
  func.func @transform_4(%arg0: i32) -> (i32, i32) {
    %c0_i32 = arith.constant 0 : i32
    %c0_i32_0 = arith.constant 0 : i32
    %c0_i32_1 = arith.constant 0 : i32
    return %c0_i32, %c0_i32_0 : i32, i32
  }
  func.func @transform_5(%arg0: i32) -> (i32, i32, i32) {
    %c0_i32 = arith.constant 0 : i32
    %c0_i32_0 = arith.constant 0 : i32
    %c0_i32_1 = arith.constant 0 : i32
    %c0_i32_2 = arith.constant 0 : i32
    return %c0_i32, %c0_i32_0, %c0_i32_1 : i32, i32, i32
  }
  func.func @transform_6(%arg0: i32) -> (i32, i32, i32) {
    %c0_i32 = arith.constant 0 : i32
    %c0_i32_0 = arith.constant 0 : i32
    %c0_i32_1 = arith.constant 0 : i32
    %c0_i32_2 = arith.constant 0 : i32
    return %c0_i32, %c0_i32_0, %c0_i32_1 : i32, i32, i32
  }
  func.func @transform_7(%arg0: i32) -> (i32, i32) {
    %c0_i32 = arith.constant 0 : i32
    %c0_i32_0 = arith.constant 0 : i32
    %c0_i32_1 = arith.constant 0 : i32
    return %c0_i32, %c0_i32_0 : i32, i32
  }
  func.func @transform_8(%arg0: i32) -> (i32, i32, i32) {
    %c0_i32 = arith.constant 0 : i32
    %c0_i32_0 = arith.constant 0 : i32
    %c0_i32_1 = arith.constant 0 : i32
    %c0_i32_2 = arith.constant 0 : i32
    return %c0_i32, %c0_i32_0, %c0_i32_1 : i32, i32, i32
  }
  func.func @transform_9(%arg0: i32) -> (i32, i32, i32) {
    %c0_i32 = arith.constant 0 : i32
    %c0_i32_0 = arith.constant 0 : i32
    %c0_i32_1 = arith.constant 0 : i32
    %c0_i32_2 = arith.constant 0 : i32
    return %c0_i32, %c0_i32_0, %c0_i32_1 : i32, i32, i32
  }
  func.func @transform_10(%arg0: i32) -> (i32, i32) {
    %c0_i32 = arith.constant 0 : i32
    %c0_i32_0 = arith.constant 0 : i32
    %c0_i32_1 = arith.constant 0 : i32
    return %c0_i32, %c0_i32_0 : i32, i32
  }
  func.func @transform_11(%arg0: i32) -> (i32, i32) {
    %c0_i32 = arith.constant 0 : i32
    %c0_i32_0 = arith.constant 0 : i32
    %c0_i32_1 = arith.constant 0 : i32
    return %c0_i32, %c0_i32_0 : i32, i32
  }
  func.func @transform_12(%arg0: i32) -> (i32, i32) {
    %c0_i32 = arith.constant 0 : i32
    %c0_i32_0 = arith.constant 0 : i32
    %c0_i32_1 = arith.constant 0 : i32
    return %c0_i32, %c0_i32_0 : i32, i32
  }
  func.func @transform_13(%arg0: i32) -> (i32, i32, i32) {
    %c0_i32 = arith.constant 0 : i32
    %c0_i32_0 = arith.constant 0 : i32
    %c0_i32_1 = arith.constant 0 : i32
    %c0_i32_2 = arith.constant 0 : i32
    return %c0_i32, %c0_i32_0, %c0_i32_1 : i32, i32, i32
  }
  func.func @transform_14(%arg0: i32) -> (i32, i32, i32) {
    %c0_i32 = arith.constant 0 : i32
    %c0_i32_0 = arith.constant 0 : i32
    %c0_i32_1 = arith.constant 0 : i32
    %c0_i32_2 = arith.constant 0 : i32
    return %c0_i32, %c0_i32_0, %c0_i32_1 : i32, i32, i32
  }
  func.func @transform_15(%arg0: i32) -> (i32, i32) {
    %c0_i32 = arith.constant 0 : i32
    %c0_i32_0 = arith.constant 0 : i32
    %c0_i32_1 = arith.constant 0 : i32
    return %c0_i32, %c0_i32_0 : i32, i32
  }
  func.func @transform_16(%arg0: i32) -> (i32, i32, i32) {
    %c0_i32 = arith.constant 0 : i32
    %c0_i32_0 = arith.constant 0 : i32
    %c0_i32_1 = arith.constant 0 : i32
    %c0_i32_2 = arith.constant 0 : i32
    return %c0_i32, %c0_i32_0, %c0_i32_1 : i32, i32, i32
  }
  func.func @transform_17(%arg0: i32) -> (i32, i32, i32) {
    %c0_i32 = arith.constant 0 : i32
    %c0_i32_0 = arith.constant 0 : i32
    %c0_i32_1 = arith.constant 0 : i32
    %c0_i32_2 = arith.constant 0 : i32
    return %c0_i32, %c0_i32_0, %c0_i32_1 : i32, i32, i32
  }
  func.func @transform_18(%arg0: i32) -> (i32, i32) {
    %c0_i32 = arith.constant 0 : i32
    %c0_i32_0 = arith.constant 0 : i32
    %c0_i32_1 = arith.constant 0 : i32
    return %c0_i32, %c0_i32_0 : i32, i32
  }
  func.func @transform_19(%arg0: i32) -> (i32, i32, i32) {
    %c0_i32 = arith.constant 0 : i32
    %c0_i32_0 = arith.constant 0 : i32
    %c0_i32_1 = arith.constant 0 : i32
    %c0_i32_2 = arith.constant 0 : i32
    return %c0_i32, %c0_i32_0, %c0_i32_1 : i32, i32, i32
  }
  func.func @transform_20(%arg0: i32) -> (i32, i32, i32) {
    %c0_i32 = arith.constant 0 : i32
    %c0_i32_0 = arith.constant 0 : i32
    %c0_i32_1 = arith.constant 0 : i32
    %c0_i32_2 = arith.constant 0 : i32
    return %c0_i32, %c0_i32_0, %c0_i32_1 : i32, i32, i32
  }
  func.func @transform_21(%arg0: i32) -> (i32, i32) {
    %c0_i32 = arith.constant 0 : i32
    %c0_i32_0 = arith.constant 0 : i32
    %c0_i32_1 = arith.constant 0 : i32
    return %c0_i32, %c0_i32_0 : i32, i32
  }
  func.func @transform_22(%arg0: i32) -> (i32, i32) {
    %c0_i32 = arith.constant 0 : i32
    %c0_i32_0 = arith.constant 0 : i32
    %c0_i32_1 = arith.constant 0 : i32
    return %c0_i32, %c0_i32_0 : i32, i32
  }
  func.func @transform_23(%arg0: i32) -> (i32, i32) {
    %c0_i32 = arith.constant 0 : i32
    %c0_i32_0 = arith.constant 0 : i32
    %c0_i32_1 = arith.constant 0 : i32
    return %c0_i32, %c0_i32_0 : i32, i32
  }
  func.func @transform_24(%arg0: i32) -> (i32, i32) {
    %c0_i32 = arith.constant 0 : i32
    %c0_i32_0 = arith.constant 0 : i32
    %c0_i32_1 = arith.constant 0 : i32
    return %c0_i32, %c0_i32_0 : i32, i32
  }
  func.func @transform_25(%arg0: i32) -> (i32, i32) {
    %c0_i32 = arith.constant 0 : i32
    %c0_i32_0 = arith.constant 0 : i32
    %c0_i32_1 = arith.constant 0 : i32
    return %c0_i32, %c0_i32_0 : i32, i32
  }
}

</mosaic_0001>

<llo_original>
// kernel: baur_forward.1
$region0: #{baur_forward.1}
  #allocation0 [shape = 'u32[]', space=smem, size = 0x4, offset = 0x4, fixed_abs, tag = 'smem constant byte address 0x4 - core index']
  #allocation1 [shape = 'u32[144,128]{1,0:T(1,128)}', space=vmem, size = 0x12000, scoped, tag = 'internal scratch']
  %s0 = inlined_call_operand.vmem [shape: f32[32,64], index: 0, kind: input, shape index: {}]
  %s1 = inlined_call_operand.vmem [shape: f32[2,16], index: 1, kind: input, shape index: {}]
  %s2 = inlined_call_operand.vmem [shape: f32[3,16,32], index: 2, kind: input, shape index: {}]
  %s3 = inlined_call_operand.vmem [shape: f32[3,64,128], index: 3, kind: input, shape index: {}]
  %s4 = inlined_call_operand.vmem [shape: f32[1,128], index: 4, kind: input, shape index: {}]
  %s5 = inlined_call_operand.vmem [shape: f32[3,8,16], index: 5, kind: input, shape index: {}]
  %s6 = inlined_call_operand.vmem [shape: f32[3,128,128], index: 6, kind: input, shape index: {}]
  %s7 = inlined_call_operand.vmem [shape: f32[1,128], index: 7, kind: input, shape index: {}]
  %s8 = inlined_call_operand.vmem [shape: f32[4,2,8], index: 8, kind: input, shape index: {}]
  %s9 = inlined_call_operand.vmem [shape: f32[4,128,32], index: 9, kind: input, shape index: {}]
  %s10 = inlined_call_operand.vmem [shape: f32[1,32], index: 10, kind: input, shape index: {}]
  %s11 = inlined_call_operand.vmem [shape: f32[32,16], index: 11, kind: input, shape index: {}]
  %s12 = inlined_call_operand.vmem [shape: f32[32,16], index: 12, kind: input, shape index: {}]
  %s13 = inlined_call_operand.vmem [shape: f32[4,8,2], index: 13, kind: input, shape index: {}]
  %s14 = inlined_call_operand.vmem [shape: f32[4,16,128], index: 14, kind: input, shape index: {}]
  %s15 = inlined_call_operand.vmem [shape: f32[8,128], index: 15, kind: input, shape index: {}]
  %s16 = inlined_call_operand.vmem [shape: f32[3,16,8], index: 16, kind: input, shape index: {}]
  %s17 = inlined_call_operand.vmem [shape: f32[3,128,128], index: 17, kind: input, shape index: {}]
  %s18 = inlined_call_operand.vmem [shape: f32[1,128], index: 18, kind: input, shape index: {}]
  %s19 = inlined_call_operand.vmem [shape: f32[3,32,16], index: 19, kind: input, shape index: {}]
  %s20 = inlined_call_operand.vmem [shape: f32[3,128,64], index: 20, kind: input, shape index: {}]
  %s21 = inlined_call_operand.vmem [shape: f32[1,64], index: 21, kind: input, shape index: {}]
  %s22 = inlined_call_operand.hbm [shape: f32[2,16], index: 22, kind: output, shape index: {0}]
  %s23 = inlined_call_operand.hbm [shape: f32[2,16], index: 23, kind: output, shape index: {1}]
  %s24 = inlined_call_operand.hbm [shape: f32[2,16], index: 24, kind: output, shape index: {2}]
  %s25 = inlined_call_operand.vmem [shape: f32[32,64], index: 25, kind: output, shape index: {3}]
  %26 = xla_tuple %s22, %s23, %s24, %s25
  %s27 = sld [smem:[#allocation0]]
  $region122: #{baur_forward.1} parent=0
    _
  %s29 = ssub.s32 1, %s27
  %s30 = scalar_select 0, %s29, %s27
  $region1: #{baur_forward.1} parent=0
    #allocation2 [shape = 'u8[1024]{0}', space=vmem, size = 0x400, scoped, tag = 'output window, operand 0, single buffered']
    #allocation3 [shape = 's32[1]{0}', space=sflag, size = 0x4, scoped, tag = 'scoped memory for baur_forward.1']
    #allocation4 [shape = 'u8[1024]{0}', space=vmem, size = 0x400, scoped, tag = 'output window, operand 1, single buffered']
    #allocation5 [shape = 's32[1]{0}', space=sflag, size = 0x4, scoped, tag = 'scoped memory for baur_forward.1']
    #allocation6 [shape = 'u8[1024]{0}', space=vmem, size = 0x400, scoped, tag = 'output window, operand 2, single buffered']
    %31 = vsyncpa [#allocation3], 0
    %32 = vsyncpa [#allocation5], 0
    // Predicated region
    $region2: #{baur_forward.1} parent=1 // pred_check
      _
    $region3: #{baur_forward.1} parent=1 // pred_check_branch
      %34 = sbr.rel (0) target = $region5
    $region4: #{baur_forward.1} parent=1 // pred_region
      _
    $region5: #{baur_forward.1} parent=1 // pred_fallthru
      _
    // Predicated region
    $region6: #{baur_forward.1} parent=1 // pred_check
      _
    $region7: #{baur_forward.1} parent=1 // pred_check_branch
      %36 = sbr.rel (0) target = $region9
    $region8: #{baur_forward.1} parent=1 // pred_region
      _
    $region9: #{baur_forward.1} parent=1 // pred_fallthru
      _
    // Predicated region
    $region10: #{baur_forward.1} parent=1 // pred_check
      _
    $region11: #{baur_forward.1} parent=1 // pred_check_branch
      %38 = sbr.rel (0) target = $region13
    $region12: #{baur_forward.1} parent=1 // pred_region
      _
    $region13: #{baur_forward.1} parent=1 // pred_fallthru
      _
    // Predicated region
    $region14: #{baur_forward.1} parent=1 // pred_check
      _
    $region15: #{baur_forward.1} parent=1 // pred_check_branch
      %40 = sbr.rel (0) target = $region17
    $region16: #{baur_forward.1} parent=1 // pred_region
      _
    $region17: #{baur_forward.1} parent=1 // pred_fallthru
      _
    // Predicated region
    $region18: #{baur_forward.1} parent=1 // pred_check
      _
    $region19: #{baur_forward.1} parent=1 // pred_check_branch
      %42 = sbr.rel (0) target = $region21
    $region20: #{baur_forward.1} parent=1 // pred_region
      _
    $region21: #{baur_forward.1} parent=1 // pred_fallthru
      _
    // Predicated region
    $region22: #{baur_forward.1} parent=1 // pred_check
      _
    $region23: #{baur_forward.1} parent=1 // pred_check_branch
      %44 = sbr.rel (0) target = $region25
    $region24: #{baur_forward.1} parent=1 // pred_region
      _
    $region25: #{baur_forward.1} parent=1 // pred_fallthru
      _
    // Predicated region
    $region26: #{baur_forward.1} parent=1 // pred_check
      _
    $region27: #{baur_forward.1} parent=1 // pred_check_branch
      %46 = sbr.rel (0) target = $region29
    $region28: #{baur_forward.1} parent=1 // pred_region
      _
    $region29: #{baur_forward.1} parent=1 // pred_fallthru
      _
    // Predicated region
    $region30: #{baur_forward.1} parent=1 // pred_check
      _
    $region31: #{baur_forward.1} parent=1 // pred_check_branch
      %48 = sbr.rel (0) target = $region33
    $region32: #{baur_forward.1} parent=1 // pred_region
      _
    $region33: #{baur_forward.1} parent=1 // pred_fallthru
      _
    // Predicated region
    $region34: #{baur_forward.1} parent=1 // pred_check
      _
    $region35: #{baur_forward.1} parent=1 // pred_check_branch
      %50 = sbr.rel (0) target = $region37
    $region36: #{baur_forward.1} parent=1 // pred_region
      _
    $region37: #{baur_forward.1} parent=1 // pred_fallthru
      _
    // Predicated region
    $region38: #{baur_forward.1} parent=1 // pred_check
      _
    $region39: #{baur_forward.1} parent=1 // pred_check_branch
      %52 = sbr.rel (0) target = $region41
    $region40: #{baur_forward.1} parent=1 // pred_region
      _
    $region41: #{baur_forward.1} parent=1 // pred_fallthru
      _
    // Predicated region
    $region42: #{baur_forward.1} parent=1 // pred_check
      _
    $region43: #{baur_forward.1} parent=1 // pred_check_branch
      %54 = sbr.rel (0) target = $region45
    $region44: #{baur_forward.1} parent=1 // pred_region
      _
    $region45: #{baur_forward.1} parent=1 // pred_fallthru
      _
    // Predicated region
    $region46: #{baur_forward.1} parent=1 // pred_check
      _
    $region47: #{baur_forward.1} parent=1 // pred_check_branch
      %56 = sbr.rel (0) target = $region49
    $region48: #{baur_forward.1} parent=1 // pred_region
      _
    $region49: #{baur_forward.1} parent=1 // pred_fallthru
      _
    // Predicated region
    $region50: #{baur_forward.1} parent=1 // pred_check
      _
    $region51: #{baur_forward.1} parent=1 // pred_check_branch
      %58 = sbr.rel (0) target = $region53
    $region52: #{baur_forward.1} parent=1 // pred_region
      _
    $region53: #{baur_forward.1} parent=1 // pred_fallthru
      _
    // Predicated region
    $region54: #{baur_forward.1} parent=1 // pred_check
      _
    $region55: #{baur_forward.1} parent=1 // pred_check_branch
      %60 = sbr.rel (0) target = $region57
    $region56: #{baur_forward.1} parent=1 // pred_region
      _
    $region57: #{baur_forward.1} parent=1 // pred_fallthru
      _
    // Predicated region
    $region58: #{baur_forward.1} parent=1 // pred_check
      _
    $region59: #{baur_forward.1} parent=1 // pred_check_branch
      %62 = sbr.rel (0) target = $region61
    $region60: #{baur_forward.1} parent=1 // pred_region
      _
    $region61: #{baur_forward.1} parent=1 // pred_fallthru
      _
    // Predicated region
    $region62: #{baur_forward.1} parent=1 // pred_check
      _
    $region63: #{baur_forward.1} parent=1 // pred_check_branch
      %64 = sbr.rel (0) target = $region65
    $region64: #{baur_forward.1} parent=1 // pred_region
      _
    $region65: #{baur_forward.1} parent=1 // pred_fallthru
      _
    // Predicated region
    $region66: #{baur_forward.1} parent=1 // pred_check
      _
    $region67: #{baur_forward.1} parent=1 // pred_check_branch
      %66 = sbr.rel (0) target = $region69
    $region68: #{baur_forward.1} parent=1 // pred_region
      _
    $region69: #{baur_forward.1} parent=1 // pred_fallthru
      _
    // Predicated region
    $region70: #{baur_forward.1} parent=1 // pred_check
      _
    $region71: #{baur_forward.1} parent=1 // pred_check_branch
      %68 = sbr.rel (0) target = $region73
    $region72: #{baur_forward.1} parent=1 // pred_region
      _
    $region73: #{baur_forward.1} parent=1 // pred_fallthru
      _
    // Predicated region
    $region74: #{baur_forward.1} parent=1 // pred_check
      _
    $region75: #{baur_forward.1} parent=1 // pred_check_branch
      %70 = sbr.rel (0) target = $region77
    $region76: #{baur_forward.1} parent=1 // pred_region
      _
    $region77: #{baur_forward.1} parent=1 // pred_fallthru
      _
    // Predicated region
    $region78: #{baur_forward.1} parent=1 // pred_check
      _
    $region79: #{baur_forward.1} parent=1 // pred_check_branch
      %72 = sbr.rel (0) target = $region81
    $region80: #{baur_forward.1} parent=1 // pred_region
      _
    $region81: #{baur_forward.1} parent=1 // pred_fallthru
      _
    // Predicated region
    $region82: #{baur_forward.1} parent=1 // pred_check
      _
    $region83: #{baur_forward.1} parent=1 // pred_check_branch
      %74 = sbr.rel (0) target = $region85
    $region84: #{baur_forward.1} parent=1 // pred_region
      _
    $region85: #{baur_forward.1} parent=1 // pred_fallthru
      _
    // Predicated region
    $region86: #{baur_forward.1} parent=1 // pred_check
      _
    $region87: #{baur_forward.1} parent=1 // pred_check_branch
      %76 = sbr.rel (0) target = $region89
    $region88: #{baur_forward.1} parent=1 // pred_region
      _
    $region89: #{baur_forward.1} parent=1 // pred_fallthru
      _
    %v78 = vld [vmem:[%s0] sm:$0xff]
    %v79 = vld [vmem:[%s0 + $0x8] sm:$0xff]
    %v80 = vld [vmem:[%s0 + $0x10] sm:$0xff]
    %v81 = vld [vmem:[%s0 + $0x18] sm:$0xff]
    %v82 = vld [vmem:[%s4] sm:$0x1]
    %v83 = vld [vmem:[%s2] sm:$0xff]
    %v84 = vld [vmem:[%s2 + $0x8] sm:$0xff]
    %v85 = vld [vmem:[%s3] sm:$0xff]
    %v86 = vld [vmem:[%s3 + $0x8] sm:$0xff]
    %v87 = vld [vmem:[%s3 + $0x10] sm:$0xff]
    %v88 = vld [vmem:[%s3 + $0x18] sm:$0xff]
    %v89 = vld [vmem:[%s3 + $0x20] sm:$0xff]
    %v90 = vld [vmem:[%s3 + $0x28] sm:$0xff]
    %v91 = vld [vmem:[%s3 + $0x30] sm:$0xff]
    %v92 = vld [vmem:[%s3 + $0x38] sm:$0xff]
    %v93 = vpack.c.bf16 %v79, %v78
    %v94 = vpack.c.bf16 %v81, %v80
    %v95 = vpack.c.bf16 %v86, %v85
    %v96 = vpack.c.bf16 %v88, %v87
    %v97 = vpack.c.bf16 %v90, %v89
    %v98 = vpack.c.bf16 %v92, %v91
    %vm99 = vcmask 523264
    %v101 = vsel %vm99, %v93, 0
    %v104 = vsel %vm99, %v94, 0
    %106 = vmatprep.subr.bf16.mxu0 0
    %107 = vmatpush1.bf16.msra.mxu0 %v95
    %108 = vmatprep.subr.bf16.mxu0 0
    %109 = vmatpush1.bf16.msra.mxu0 %v96
    %110 = vmatprep.subr.bf16.mxu0 0
    %111 = vmatpush1.bf16.msra.mxu0 %v97
    %112 = vmatprep.subr.bf16.mxu0 0
    %113 = vmatpush1.bf16.msra.mxu0 %v98
    %114 = vmatprep.subr.bf16.mxu0 0
    %115 = vmatpush1.bf16.msra.mxu0 0
    %116 = vmatprep.subr.bf16.mxu0 0
    %117 = vmatpush1.bf16.msra.mxu0 0
    %118 = vmatprep.subr.bf16.mxu0 0
    %119 = vmatpush1.bf16.msra.mxu0 0
    %120 = vmatprep.subr.bf16.mxu0 0
    %121 = vmatpush1.bf16.msra.mxu0 0
    %122 = vmatprep.subr.bf16.mxu0 0
    %123 = vmatpush1.bf16.msra.mxu0 0
    %124 = vmatprep.subr.bf16.mxu0 0
    %125 = vmatpush1.bf16.msra.mxu0 0
    %126 = vmatprep.subr.bf16.mxu0 0
    %127 = vmatpush1.bf16.msra.mxu0 0
    %128 = vmatprep.subr.bf16.mxu0 0
    %129 = vmatpush1.bf16.msra.mxu0 0
    %130 = vmatprep.subr.bf16.mxu0 0
    %131 = vmatpush1.bf16.msra.mxu0 0
    %132 = vmatprep.subr.bf16.mxu0 0
    %133 = vmatpush1.bf16.msra.mxu0 0
    %134 = vmatprep.subr.bf16.mxu0 0
    %135 = vmatpush1.bf16.msra.mxu0 0
    %136 = vmatprep.subr.bf16.mxu0 0
    %137 = vmatpush1.bf16.msra.mxu0 0
    %138 = vmatprep.mubr.bf16.mxu0 0
    %139 = vmatmul.mubr.bf16.gmra.mrb[0].mxu0 %v101
    %v140 = vpop.f32.mrb[0].mxu0
    %v141 = vadd.f32 0.0, %v140
    %v142 = vpop.f32.mrb[0].mxu0
    %v143 = vpop.f32.mrb[0].mxu0
    %v144 = vadd.f32 0.0, %v143
    %v145 = vpop.f32.mrb[0].mxu0
    %146 = vmatprep.mubr.bf16.mxu0 0
    %147 = vmatmul.mubr.bf16.gmra.mrb[0].mxu0 %v104
    %v148 = vpop.f32.mrb[0].mxu0
    %v149 = vadd.f32 0.0, %v148
    %v150 = vpop.f32.mrb[0].mxu0
    %v151 = vpop.f32.mrb[0].mxu0
    %v152 = vadd.f32 0.0, %v151
    %v153 = vpop.f32.mrb[0].mxu0
    %154 = vdwg.mxu0
    %s155 = scalar_lea.vmem %s2, 16
    %v156 = vld [vmem:[%s155] sm:$0xff]
    %v157 = vld [vmem:[%s155 + $0x8] sm:$0xff]
    %s158 = scalar_lea.vmem %s3, 64
    %v159 = vld [vmem:[%s158] sm:$0xff]
    %v160 = vld [vmem:[%s158 + $0x8] sm:$0xff]
    %v161 = vld [vmem:[%s158 + $0x10] sm:$0xff]
    %v162 = vld [vmem:[%s158 + $0x18] sm:$0xff]
    %v163 = vld [vmem:[%s158 + $0x20] sm:$0xff]
    %v164 = vld [vmem:[%s158 + $0x28] sm:$0xff]
    %v165 = vld [vmem:[%s158 + $0x30] sm:$0xff]
    %v166 = vld [vmem:[%s158 + $0x38] sm:$0xff]
    %v167 = vpack.c.bf16 %v160, %v159
    %v168 = vpack.c.bf16 %v162, %v161
    %v169 = vpack.c.bf16 %v164, %v163
    %v170 = vpack.c.bf16 %v166, %v165
    %171 = vmatprep.subr.bf16.mxu0 0
    %172 = vmatpush1.bf16.msra.mxu0 %v167
    %173 = vmatprep.subr.bf16.mxu0 0
    %174 = vmatpush1.bf16.msra.mxu0 %v168
    %175 = vmatprep.subr.bf16.mxu0 0
    %176 = vmatpush1.bf16.msra.mxu0 %v169
    %177 = vmatprep.subr.bf16.mxu0 0
    %178 = vmatpush1.bf16.msra.mxu0 %v170
    %179 = vmatprep.subr.bf16.mxu0 0
    %180 = vmatpush1.bf16.msra.mxu0 0
    %181 = vmatprep.subr.bf16.mxu0 0
    %182 = vmatpush1.bf16.msra.mxu0 0
    %183 = vmatprep.subr.bf16.mxu0 0
    %184 = vmatpush1.bf16.msra.mxu0 0
    %185 = vmatprep.subr.bf16.mxu0 0
    %186 = vmatpush1.bf16.msra.mxu0 0
    %187 = vmatprep.subr.bf16.mxu0 0
    %188 = vmatpush1.bf16.msra.mxu0 0
    %189 = vmatprep.subr.bf16.mxu0 0
    %190 = vmatpush1.bf16.msra.mxu0 0
    %191 = vmatprep.subr.bf16.mxu0 0
    %192 = vmatpush1.bf16.msra.mxu0 0
    %193 = vmatprep.subr.bf16.mxu0 0
    %194 = vmatpush1.bf16.msra.mxu0 0
    %195 = vmatprep.subr.bf16.mxu0 0
    %196 = vmatpush1.bf16.msra.mxu0 0
    %197 = vmatprep.subr.bf16.mxu0 0
    %198 = vmatpush1.bf16.msra.mxu0 0
    %199 = vmatprep.subr.bf16.mxu0 0
    %200 = vmatpush1.bf16.msra.mxu0 0
    %201 = vmatprep.subr.bf16.mxu0 0
    %202 = vmatpush1.bf16.msra.mxu0 0
    %203 = vmatprep.mubr.bf16.mxu0 0
    %204 = vmatmul.mubr.bf16.gmra.mrb[0].mxu0 %v101
    %v205 = vpop.f32.mrb[0].mxu0
    %v206 = vadd.f32 0.0, %v205
    %v207 = vpop.f32.mrb[0].mxu0
    %v208 = vpop.f32.mrb[0].mxu0
    %v209 = vadd.f32 0.0, %v208
    %v210 = vpop.f32.mrb[0].mxu0
    %211 = vmatprep.mubr.bf16.mxu0 0
    %212 = vmatmul.mubr.bf16.gmra.mrb[0].mxu0 %v104
    %v213 = vpop.f32.mrb[0].mxu0
    %v214 = vadd.f32 0.0, %v213
    %v215 = vpop.f32.mrb[0].mxu0
    %v216 = vpop.f32.mrb[0].mxu0
    %v217 = vadd.f32 0.0, %v216
    %v218 = vpop.f32.mrb[0].mxu0
    %219 = vdwg.mxu0
    %vm220 = vcmask 261120
    %v222 = vsel %vm220, %v156, 0
    %v225 = vsel %vm220, %v157, 0
    %227 = vmatprep.subr.mxu0 0.0
    %228 = vmatpush1.msra.mxu0 %v206
    %229 = vmatprep.subr.mxu0 0.0
    %230 = vmatpush1.msra.mxu0 %v209
    %231 = vmatprep.subr.mxu0 0.0
    %232 = vmatpush1.msra.mxu0 %v214
    %233 = vmatprep.subr.mxu0 0.0
    %234 = vmatpush1.msra.mxu0 %v217
    %235 = vmatprep.subr.mxu0 0.0
    %236 = vmatpush1.msra.mxu0 0.0
    %237 = vmatprep.subr.mxu0 0.0
    %238 = vmatpush1.msra.mxu0 0.0
    %239 = vmatprep.subr.mxu0 0.0
    %240 = vmatpush1.msra.mxu0 0.0
    %241 = vmatprep.subr.mxu0 0.0
    %242 = vmatpush1.msra.mxu0 0.0
    %243 = vmatprep.subr.mxu0 0.0
    %244 = vmatpush1.msra.mxu0 0.0
    %245 = vmatprep.subr.mxu0 0.0
    %246 = vmatpush1.msra.mxu0 0.0
    %247 = vmatprep.subr.mxu0 0.0
    %248 = vmatpush1.msra.mxu0 0.0
    %249 = vmatprep.subr.mxu0 0.0
    %250 = vmatpush1.msra.mxu0 0.0
    %251 = vmatprep.subr.mxu0 0.0
    %252 = vmatpush1.msra.mxu0 0.0
    %253 = vmatprep.subr.mxu0 0.0
    %254 = vmatpush1.msra.mxu0 0.0
    %255 = vmatprep.subr.mxu0 0.0
    %256 = vmatpush1.msra.mxu0 0.0
    %257 = vmatprep.subr.mxu0 0.0
    %258 = vmatpush1.msra.mxu0 0.0
    %259 = vmatprep.subr.mxu0 0.0
    %260 = vmatpush1.msra.mxu0 0.0
    %261 = vmatprep.subr.mxu0 0.0
    %262 = vmatpush1.msra.mxu0 0.0
    %263 = vmatprep.subr.mxu0 0.0
    %264 = vmatpush1.msra.mxu0 0.0
    %265 = vmatprep.subr.mxu0 0.0
    %266 = vmatpush1.msra.mxu0 0.0
    %267 = vmatprep.subr.mxu0 0.0
    %268 = vmatpush1.msra.mxu0 0.0
    %269 = vmatprep.subr.mxu0 0.0
    %270 = vmatpush1.msra.mxu0 0.0
    %271 = vmatprep.subr.mxu0 0.0
    %272 = vmatpush1.msra.mxu0 0.0
    %273 = vmatprep.subr.mxu0 0.0
    %274 = vmatpush1.msra.mxu0 0.0
    %275 = vmatprep.subr.mxu0 0.0
    %276 = vmatpush1.msra.mxu0 0.0
    %277 = vmatprep.subr.mxu0 0.0
    %278 = vmatpush1.msra.mxu0 0.0
    %279 = vmatprep.subr.mxu0 0.0
    %280 = vmatpush1.msra.mxu0 0.0
    %281 = vmatprep.subr.mxu0 0.0
    %282 = vmatpush1.msra.mxu0 0.0
    %283 = vmatprep.subr.mxu0 0.0
    %284 = vmatpush1.msra.mxu0 0.0
    %285 = vmatprep.subr.mxu0 0.0
    %286 = vmatpush1.msra.mxu0 0.0
    %287 = vmatprep.subr.mxu0 0.0
    %288 = vmatpush1.msra.mxu0 0.0
    %289 = vmatprep.subr.mxu0 0.0
    %290 = vmatpush1.msra.mxu0 0.0
    %291 = vmatprep.mubr.f32.mxu0 0.0
    %292 = vmatmul.mubr.f32.gmra.mrb[0].mxu0 %v222
    %v293 = vpop.f32.mrb[0].mxu0
    %v294 = vadd.f32 0.0, %v293
    %v295 = vpop.f32.mrb[0].mxu0
    %296 = vmatprep.mubr.f32.mxu0 0.0
    %297 = vmatmul.mubr.f32.gmra.mrb[0].mxu0 %v225
    %v298 = vpop.f32.mrb[0].mxu0
    %v299 = vadd.f32 0.0, %v298
    %v300 = vpop.f32.mrb[0].mxu0
    %301 = vdwg.mxu0
    %v303 = vsel %vm220, %v83, 0
    %v306 = vsel %vm220, %v84, 0
    %308 = vmatprep.subr.mxu0 0.0
    %309 = vmatpush1.msra.mxu0 %v141
    %310 = vmatprep.subr.mxu0 0.0
    %311 = vmatpush1.msra.mxu0 %v144
    %312 = vmatprep.subr.mxu0 0.0
    %313 = vmatpush1.msra.mxu0 %v149
    %314 = vmatprep.subr.mxu0 0.0
    %315 = vmatpush1.msra.mxu0 %v152
    %316 = vmatprep.subr.mxu0 0.0
    %317 = vmatpush1.msra.mxu0 0.0
    %318 = vmatprep.subr.mxu0 0.0
    %319 = vmatpush1.msra.mxu0 0.0
    %320 = vmatprep.subr.mxu0 0.0
    %321 = vmatpush1.msra.mxu0 0.0
    %322 = vmatprep.subr.mxu0 0.0
    %323 = vmatpush1.msra.mxu0 0.0
    %324 = vmatprep.subr.mxu0 0.0
    %325 = vmatpush1.msra.mxu0 0.0
    %326 = vmatprep.subr.mxu0 0.0
    %327 = vmatpush1.msra.mxu0 0.0
    %328 = vmatprep.subr.mxu0 0.0
    %329 = vmatpush1.msra.mxu0 0.0
    %330 = vmatprep.subr.mxu0 0.0
    %331 = vmatpush1.msra.mxu0 0.0
    %332 = vmatprep.subr.mxu0 0.0
    %333 = vmatpush1.msra.mxu0 0.0
    %334 = vmatprep.subr.mxu0 0.0
    %335 = vmatpush1.msra.mxu0 0.0
    %336 = vmatprep.subr.mxu0 0.0
    %337 = vmatpush1.msra.mxu0 0.0
    %338 = vmatprep.subr.mxu0 0.0
    %339 = vmatpush1.msra.mxu0 0.0
    %340 = vmatprep.subr.mxu0 0.0
    %341 = vmatpush1.msra.mxu0 0.0
    %342 = vmatprep.subr.mxu0 0.0
    %343 = vmatpush1.msra.mxu0 0.0
    %344 = vmatprep.subr.mxu0 0.0
    %345 = vmatpush1.msra.mxu0 0.0
    %346 = vmatprep.subr.mxu0 0.0
    %347 = vmatpush1.msra.mxu0 0.0
    %348 = vmatprep.subr.mxu0 0.0
    %349 = vmatpush1.msra.mxu0 0.0
    %350 = vmatprep.subr.mxu0 0.0
    %351 = vmatpush1.msra.mxu0 0.0
    %352 = vmatprep.subr.mxu0 0.0
    %353 = vmatpush1.msra.mxu0 0.0
    %354 = vmatprep.subr.mxu0 0.0
    %355 = vmatpush1.msra.mxu0 0.0
    %356 = vmatprep.subr.mxu0 0.0
    %357 = vmatpush1.msra.mxu0 0.0
    %358 = vmatprep.subr.mxu0 0.0
    %359 = vmatpush1.msra.mxu0 0.0
    %360 = vmatprep.subr.mxu0 0.0
    %361 = vmatpush1.msra.mxu0 0.0
    %362 = vmatprep.subr.mxu0 0.0
    %363 = vmatpush1.msra.mxu0 0.0
    %364 = vmatprep.subr.mxu0 0.0
    %365 = vmatpush1.msra.mxu0 0.0
    %366 = vmatprep.subr.mxu0 0.0
    %367 = vmatpush1.msra.mxu0 0.0
    %368 = vmatprep.subr.mxu0 0.0
    %369 = vmatpush1.msra.mxu0 0.0
    %370 = vmatprep.subr.mxu0 0.0
    %371 = vmatpush1.msra.mxu0 0.0
    %372 = vmatprep.mubr.f32.mxu0 0.0
    %373 = vmatmul.mubr.f32.gmra.mrb[0].mxu0 %v303
    %v374 = vpop.f32.mrb[0].mxu0
    %v375 = vadd.f32 %v294, %v374
    %v376 = vpop.f32.mrb[0].mxu0
    %377 = vmatprep.mubr.f32.mxu0 0.0
    %378 = vmatmul.mubr.f32.gmra.mrb[0].mxu0 %v306
    %v379 = vpop.f32.mrb[0].mxu0
    %v380 = vadd.f32 %v299, %v379
    %v381 = vpop.f32.mrb[0].mxu0
    %382 = vdwg.mxu0
    %s383 = scalar_lea.vmem %s2, 32
    %v384 = vld [vmem:[%s383] sm:$0xff]
    %v385 = vld [vmem:[%s383 + $0x8] sm:$0xff]
    %s386 = scalar_lea.vmem %s3, 128
    %v387 = vld [vmem:[%s386] sm:$0xff]
    %v388 = vld [vmem:[%s386 + $0x8] sm:$0xff]
    %v389 = vld [vmem:[%s386 + $0x10] sm:$0xff]
    %v390 = vld [vmem:[%s386 + $0x18] sm:$0xff]
    %v391 = vld [vmem:[%s386 + $0x20] sm:$0xff]
    %v392 = vld [vmem:[%s386 + $0x28] sm:$0xff]
    %v393 = vld [vmem:[%s386 + $0x30] sm:$0xff]
    %v394 = vld [vmem:[%s386 + $0x38] sm:$0xff]
    %v395 = vpack.c.bf16 %v388, %v387
    %v396 = vpack.c.bf16 %v390, %v389
    %v397 = vpack.c.bf16 %v392, %v391
    %v398 = vpack.c.bf16 %v394, %v393
    %399 = vmatprep.subr.bf16.mxu0 0
    %400 = vmatpush1.bf16.msra.mxu0 %v395
    %401 = vmatprep.subr.bf16.mxu0 0
    %402 = vmatpush1.bf16.msra.mxu0 %v396
    %403 = vmatprep.subr.bf16.mxu0 0
    %404 = vmatpush1.bf16.msra.mxu0 %v397
    %405 = vmatprep.subr.bf16.mxu0 0
    %406 = vmatpush1.bf16.msra.mxu0 %v398
    %407 = vmatprep.subr.bf16.mxu0 0
    %408 = vmatpush1.bf16.msra.mxu0 0
    %409 = vmatprep.subr.bf16.mxu0 0
    %410 = vmatpush1.bf16.msra.mxu0 0
    %411 = vmatprep.subr.bf16.mxu0 0
    %412 = vmatpush1.bf16.msra.mxu0 0
    %413 = vmatprep.subr.bf16.mxu0 0
    %414 = vmatpush1.bf16.msra.mxu0 0
    %415 = vmatprep.subr.bf16.mxu0 0
    %416 = vmatpush1.bf16.msra.mxu0 0
    %417 = vmatprep.subr.bf16.mxu0 0
    %418 = vmatpush1.bf16.msra.mxu0 0
    %419 = vmatprep.subr.bf16.mxu0 0
    %420 = vmatpush1.bf16.msra.mxu0 0
    %421 = vmatprep.subr.bf16.mxu0 0
    %422 = vmatpush1.bf16.msra.mxu0 0
    %423 = vmatprep.subr.bf16.mxu0 0
    %424 = vmatpush1.bf16.msra.mxu0 0
    %425 = vmatprep.subr.bf16.mxu0 0
    %426 = vmatpush1.bf16.msra.mxu0 0
    %427 = vmatprep.subr.bf16.mxu0 0
    %428 = vmatpush1.bf16.msra.mxu0 0
    %429 = vmatprep.subr.bf16.mxu0 0
    %430 = vmatpush1.bf16.msra.mxu0 0
    %431 = vmatprep.mubr.bf16.mxu0 0
    %432 = vmatmul.mubr.bf16.gmra.mrb[0].mxu0 %v101
    %v433 = vpop.f32.mrb[0].mxu0
    %v434 = vadd.f32 0.0, %v433
    %v435 = vpop.f32.mrb[0].mxu0
    %v436 = vpop.f32.mrb[0].mxu0
    %v437 = vadd.f32 0.0, %v436
    %v438 = vpop.f32.mrb[0].mxu0
    %439 = vmatprep.mubr.bf16.mxu0 0
    %440 = vmatmul.mubr.bf16.gmra.mrb[0].mxu0 %v104
    %v441 = vpop.f32.mrb[0].mxu0
    %v442 = vadd.f32 0.0, %v441
    %v443 = vpop.f32.mrb[0].mxu0
    %v444 = vpop.f32.mrb[0].mxu0
    %v445 = vadd.f32 0.0, %v444
    %v446 = vpop.f32.mrb[0].mxu0
    %447 = vdwg.mxu0
    %v449 = vsel %vm220, %v384, 0
    %v452 = vsel %vm220, %v385, 0
    %454 = vmatprep.subr.mxu0 0.0
    %455 = vmatpush1.msra.mxu0 %v434
    %456 = vmatprep.subr.mxu0 0.0
    %457 = vmatpush1.msra.mxu0 %v437
    %458 = vmatprep.subr.mxu0 0.0
    %459 = vmatpush1.msra.mxu0 %v442
    %460 = vmatprep.subr.mxu0 0.0
    %461 = vmatpush1.msra.mxu0 %v445
    %462 = vmatprep.subr.mxu0 0.0
    %463 = vmatpush1.msra.mxu0 0.0
    %464 = vmatprep.subr.mxu0 0.0
    %465 = vmatpush1.msra.mxu0 0.0
    %466 = vmatprep.subr.mxu0 0.0
    %467 = vmatpush1.msra.mxu0 0.0
    %468 = vmatprep.subr.mxu0 0.0
    %469 = vmatpush1.msra.mxu0 0.0
    %470 = vmatprep.subr.mxu0 0.0
    %471 = vmatpush1.msra.mxu0 0.0
    %472 = vmatprep.subr.mxu0 0.0
    %473 = vmatpush1.msra.mxu0 0.0
    %474 = vmatprep.subr.mxu0 0.0
    %475 = vmatpush1.msra.mxu0 0.0
    %476 = vmatprep.subr.mxu0 0.0
    %477 = vmatpush1.msra.mxu0 0.0
    %478 = vmatprep.subr.mxu0 0.0
    %479 = vmatpush1.msra.mxu0 0.0
    %480 = vmatprep.subr.mxu0 0.0
    %481 = vmatpush1.msra.mxu0 0.0
    %482 = vmatprep.subr.mxu0 0.0
    %483 = vmatpush1.msra.mxu0 0.0
    %484 = vmatprep.subr.mxu0 0.0
    %485 = vmatpush1.msra.mxu0 0.0
    %486 = vmatprep.subr.mxu0 0.0
    %487 = vmatpush1.msra.mxu0 0.0
    %488 = vmatprep.subr.mxu0 0.0
    %489 = vmatpush1.msra.mxu0 0.0
    %490 = vmatprep.subr.mxu0 0.0
    %491 = vmatpush1.msra.mxu0 0.0
    %492 = vmatprep.subr.mxu0 0.0
    %493 = vmatpush1.msra.mxu0 0.0
    %494 = vmatprep.subr.mxu0 0.0
    %495 = vmatpush1.msra.mxu0 0.0
    %496 = vmatprep.subr.mxu0 0.0
    %497 = vmatpush1.msra.mxu0 0.0
    %498 = vmatprep.subr.mxu0 0.0
    %499 = vmatpush1.msra.mxu0 0.0
    %500 = vmatprep.subr.mxu0 0.0
    %501 = vmatpush1.msra.mxu0 0.0
    %502 = vmatprep.subr.mxu0 0.0
    %503 = vmatpush1.msra.mxu0 0.0
    %504 = vmatprep.subr.mxu0 0.0
    %505 = vmatpush1.msra.mxu0 0.0
    %506 = vmatprep.subr.mxu0 0.0
    %507 = vmatpush1.msra.mxu0 0.0
    %508 = vmatprep.subr.mxu0 0.0
    %509 = vmatpush1.msra.mxu0 0.0
    %510 = vmatprep.subr.mxu0 0.0
    %511 = vmatpush1.msra.mxu0 0.0
    %512 = vmatprep.subr.mxu0 0.0
    %513 = vmatpush1.msra.mxu0 0.0
    %514 = vmatprep.subr.mxu0 0.0
    %515 = vmatpush1.msra.mxu0 0.0
    %516 = vmatprep.subr.mxu0 0.0
    %517 = vmatpush1.msra.mxu0 0.0
    %518 = vmatprep.mubr.f32.mxu0 0.0
    %519 = vmatmul.mubr.f32.gmra.mrb[0].mxu0 %v449
    %v520 = vpop.f32.mrb[0].mxu0
    %v521 = vadd.f32 0.0, %v520
    %v522 = vpop.f32.mrb[0].mxu0
    %523 = vmatprep.mubr.f32.mxu0 0.0
    %524 = vmatmul.mubr.f32.gmra.mrb[0].mxu0 %v452
    %v525 = vpop.f32.mrb[0].mxu0
    %v526 = vadd.f32 0.0, %v525
    %v527 = vpop.f32.mrb[0].mxu0
    %528 = vdwg.mxu0
    %v529 = vadd.f32 %v375, %v521
    %v530 = vadd.f32 %v380, %v526
    %v532 = vlaneseq
    %v533 = vshrl.u32 %v532, 7
    %v534 = vsub.s32 0, %v533
    %v535 = vrot.slane %v82, %v534
    %v537 = vadd.f32 %v529, %v535
    %v538 = vadd.f32 %v530, %v535
    %vm539 = vcmp.gt.f32.partialorder %v537, 0.0
    %vm540 = vcmp.gt.f32.partialorder %v538, 0.0
    %v541 = vmul.f32 %v537, 0.01
    %v542 = vmul.f32 %v538, 0.01
    %v543 = vsel %vm539, %v537, %v541
    %v544 = vsel %vm540, %v538, %v542
    %v545 = vld [vmem:[%s7] sm:$0x1]
    %v546 = vld [vmem:[%s5] sm:$0xff]
    %v547 = vld [vmem:[%s6] sm:$0xff]
    %v548 = vld [vmem:[%s6 + $0x8] sm:$0xff]
    %v549 = vld [vmem:[%s6 + $0x10] sm:$0xff]
    %v550 = vld [vmem:[%s6 + $0x18] sm:$0xff]
    %v551 = vld [vmem:[%s6 + $0x20] sm:$0xff]
    %v552 = vld [vmem:[%s6 + $0x28] sm:$0xff]
    %v553 = vld [vmem:[%s6 + $0x30] sm:$0xff]
    %v554 = vld [vmem:[%s6 + $0x38] sm:$0xff]
    %v555 = vld [vmem:[%s6 + $0x40] sm:$0xff]
    %v556 = vld [vmem:[%s6 + $0x48] sm:$0xff]
    %v557 = vld [vmem:[%s6 + $0x50] sm:$0xff]
    %v558 = vld [vmem:[%s6 + $0x58] sm:$0xff]
    %v559 = vld [vmem:[%s6 + $0x60] sm:$0xff]
    %v560 = vld [vmem:[%s6 + $0x68] sm:$0xff]
    %v561 = vld [vmem:[%s6 + $0x70] sm:$0xff]
    %v562 = vld [vmem:[%s6 + $0x78] sm:$0xff]
    %v563 = vpack.c.bf16 %v544, %v543
    %v564 = vpack.c.bf16 %v548, %v547
    %v565 = vpack.c.bf16 %v550, %v549
    %v566 = vpack.c.bf16 %v552, %v551
    %v567 = vpack.c.bf16 %v554, %v553
    %v568 = vpack.c.bf16 %v556, %v555
    %v569 = vpack.c.bf16 %v558, %v557
    %v570 = vpack.c.bf16 %v560, %v559
    %v571 = vpack.c.bf16 %v562, %v561
    %572 = vmatprep.subr.bf16.mxu0 0
    %573 = vmatpush1.bf16.msra.mxu0 %v564
    %574 = vmatprep.subr.bf16.mxu0 0
    %575 = vmatpush1.bf16.msra.mxu0 %v565
    %576 = vmatprep.subr.bf16.mxu0 0
    %577 = vmatpush1.bf16.msra.mxu0 %v566
    %578 = vmatprep.subr.bf16.mxu0 0
    %579 = vmatpush1.bf16.msra.mxu0 %v567
    %580 = vmatprep.subr.bf16.mxu0 0
    %581 = vmatpush1.bf16.msra.mxu0 %v568
    %582 = vmatprep.subr.bf16.mxu0 0
    %583 = vmatpush1.bf16.msra.mxu0 %v569
    %584 = vmatprep.subr.bf16.mxu0 0
    %585 = vmatpush1.bf16.msra.mxu0 %v570
    %586 = vmatprep.subr.bf16.mxu0 0
    %587 = vmatpush1.bf16.msra.mxu0 %v571
    %588 = vmatprep.subr.bf16.mxu0 0
    %589 = vmatpush1.bf16.msra.mxu0 0
    %590 = vmatprep.subr.bf16.mxu0 0
    %591 = vmatpush1.bf16.msra.mxu0 0
    %592 = vmatprep.subr.bf16.mxu0 0
    %593 = vmatpush1.bf16.msra.mxu0 0
    %594 = vmatprep.subr.bf16.mxu0 0
    %595 = vmatpush1.bf16.msra.mxu0 0
    %596 = vmatprep.subr.bf16.mxu0 0
    %597 = vmatpush1.bf16.msra.mxu0 0
    %598 = vmatprep.subr.bf16.mxu0 0
    %599 = vmatpush1.bf16.msra.mxu0 0
    %600 = vmatprep.subr.bf16.mxu0 0
    %601 = vmatpush1.bf16.msra.mxu0 0
    %602 = vmatprep.subr.bf16.mxu0 0
    %603 = vmatpush1.bf16.msra.mxu0 0
    %604 = vmatprep.mubr.bf16.mxu0 0
    %605 = vmatmul.mubr.bf16.gmra.mrb[0].mxu0 %v563
    %v606 = vpop.f32.mrb[0].mxu0
    %v607 = vadd.f32 0.0, %v606
    %v608 = vpop.f32.mrb[0].mxu0
    %v609 = vpop.f32.mrb[0].mxu0
    %v610 = vadd.f32 0.0, %v609
    %v611 = vpop.f32.mrb[0].mxu0
    %612 = vdwg.mxu0
    %s613 = scalar_lea.vmem %s5, 8
    %v614 = vld [vmem:[%s613] sm:$0xff]
    %s615 = scalar_lea.vmem %s6, 128
    %v616 = vld [vmem:[%s615] sm:$0xff]
    %v617 = vld [vmem:[%s615 + $0x8] sm:$0xff]
    %v618 = vld [vmem:[%s615 + $0x10] sm:$0xff]
    %v619 = vld [vmem:[%s615 + $0x18] sm:$0xff]
    %v620 = vld [vmem:[%s615 + $0x20] sm:$0xff]
    %v621 = vld [vmem:[%s615 + $0x28] sm:$0xff]
    %v622 = vld [vmem:[%s615 + $0x30] sm:$0xff]
    %v623 = vld [vmem:[%s615 + $0x38] sm:$0xff]
    %v624 = vld [vmem:[%s615 + $0x40] sm:$0xff]
    %v625 = vld [vmem:[%s615 + $0x48] sm:$0xff]
    %v626 = vld [vmem:[%s615 + $0x50] sm:$0xff]
    %v627 = vld [vmem:[%s615 + $0x58] sm:$0xff]
    %v628 = vld [vmem:[%s615 + $0x60] sm:$0xff]
    %v629 = vld [vmem:[%s615 + $0x68] sm:$0xff]
    %v630 = vld [vmem:[%s615 + $0x70] sm:$0xff]
    %v631 = vld [vmem:[%s615 + $0x78] sm:$0xff]
    %v632 = vpack.c.bf16 %v617, %v616
    %v633 = vpack.c.bf16 %v619, %v618
    %v634 = vpack.c.bf16 %v621, %v620
    %v635 = vpack.c.bf16 %v623, %v622
    %v636 = vpack.c.bf16 %v625, %v624
    %v637 = vpack.c.bf16 %v627, %v626
    %v638 = vpack.c.bf16 %v629, %v628
    %v639 = vpack.c.bf16 %v631, %v630
    %640 = vmatprep.subr.bf16.mxu0 0
    %641 = vmatpush1.bf16.msra.mxu0 %v632
    %642 = vmatprep.subr.bf16.mxu0 0
    %643 = vmatpush1.bf16.msra.mxu0 %v633
    %644 = vmatprep.subr.bf16.mxu0 0
    %645 = vmatpush1.bf16.msra.mxu0 %v634
    %646 = vmatprep.subr.bf16.mxu0 0
    %647 = vmatpush1.bf16.msra.mxu0 %v635
    %648 = vmatprep.subr.bf16.mxu0 0
    %649 = vmatpush1.bf16.msra.mxu0 %v636
    %650 = vmatprep.subr.bf16.mxu0 0
    %651 = vmatpush1.bf16.msra.mxu0 %v637
    %652 = vmatprep.subr.bf16.mxu0 0
    %653 = vmatpush1.bf16.msra.mxu0 %v638
    %654 = vmatprep.subr.bf16.mxu0 0
    %655 = vmatpush1.bf16.msra.mxu0 %v639
    %656 = vmatprep.subr.bf16.mxu0 0
    %657 = vmatpush1.bf16.msra.mxu0 0
    %658 = vmatprep.subr.bf16.mxu0 0
    %659 = vmatpush1.bf16.msra.mxu0 0
    %660 = vmatprep.subr.bf16.mxu0 0
    %661 = vmatpush1.bf16.msra.mxu0 0
    %662 = vmatprep.subr.bf16.mxu0 0
    %663 = vmatpush1.bf16.msra.mxu0 0
    %664 = vmatprep.subr.bf16.mxu0 0
    %665 = vmatpush1.bf16.msra.mxu0 0
    %666 = vmatprep.subr.bf16.mxu0 0
    %667 = vmatpush1.bf16.msra.mxu0 0
    %668 = vmatprep.subr.bf16.mxu0 0
    %669 = vmatpush1.bf16.msra.mxu0 0
    %670 = vmatprep.subr.bf16.mxu0 0
    %671 = vmatpush1.bf16.msra.mxu0 0
    %672 = vmatprep.mubr.bf16.mxu0 0
    %673 = vmatmul.mubr.bf16.gmra.mrb[0].mxu0 %v563
    %v674 = vpop.f32.mrb[0].mxu0
    %v675 = vadd.f32 0.0, %v674
    %v676 = vpop.f32.mrb[0].mxu0
    %v677 = vpop.f32.mrb[0].mxu0
    %v678 = vadd.f32 0.0, %v677
    %v679 = vpop.f32.mrb[0].mxu0
    %680 = vdwg.mxu0
    %vm681 = vcmask 130048
    %v683 = vsel %vm681, %v614, 0
    %685 = vmatprep.subr.mxu0 0.0
    %686 = vmatpush1.msra.mxu0 %v675
    %687 = vmatprep.subr.mxu0 0.0
    %688 = vmatpush1.msra.mxu0 %v678
    %689 = vmatprep.subr.mxu0 0.0
    %690 = vmatpush1.msra.mxu0 0.0
    %691 = vmatprep.subr.mxu0 0.0
    %692 = vmatpush1.msra.mxu0 0.0
    %693 = vmatprep.subr.mxu0 0.0
    %694 = vmatpush1.msra.mxu0 0.0
    %695 = vmatprep.subr.mxu0 0.0
    %696 = vmatpush1.msra.mxu0 0.0
    %697 = vmatprep.subr.mxu0 0.0
    %698 = vmatpush1.msra.mxu0 0.0
    %699 = vmatprep.subr.mxu0 0.0
    %700 = vmatpush1.msra.mxu0 0.0
    %701 = vmatprep.subr.mxu0 0.0
    %702 = vmatpush1.msra.mxu0 0.0
    %703 = vmatprep.subr.mxu0 0.0
    %704 = vmatpush1.msra.mxu0 0.0
    %705 = vmatprep.subr.mxu0 0.0
    %706 = vmatpush1.msra.mxu0 0.0
    %707 = vmatprep.subr.mxu0 0.0
    %708 = vmatpush1.msra.mxu0 0.0
    %709 = vmatprep.subr.mxu0 0.0
    %710 = vmatpush1.msra.mxu0 0.0
    %711 = vmatprep.subr.mxu0 0.0
    %712 = vmatpush1.msra.mxu0 0.0
    %713 = vmatprep.subr.mxu0 0.0
    %714 = vmatpush1.msra.mxu0 0.0
    %715 = vmatprep.subr.mxu0 0.0
    %716 = vmatpush1.msra.mxu0 0.0
    %717 = vmatprep.subr.mxu0 0.0
    %718 = vmatpush1.msra.mxu0 0.0
    %719 = vmatprep.subr.mxu0 0.0
    %720 = vmatpush1.msra.mxu0 0.0
    %721 = vmatprep.subr.mxu0 0.0
    %722 = vmatpush1.msra.mxu0 0.0
    %723 = vmatprep.subr.mxu0 0.0
    %724 = vmatpush1.msra.mxu0 0.0
    %725 = vmatprep.subr.mxu0 0.0
    %726 = vmatpush1.msra.mxu0 0.0
    %727 = vmatprep.subr.mxu0 0.0
    %728 = vmatpush1.msra.mxu0 0.0
    %729 = vmatprep.subr.mxu0 0.0
    %730 = vmatpush1.msra.mxu0 0.0
    %731 = vmatprep.subr.mxu0 0.0
    %732 = vmatpush1.msra.mxu0 0.0
    %733 = vmatprep.subr.mxu0 0.0
    %734 = vmatpush1.msra.mxu0 0.0
    %735 = vmatprep.subr.mxu0 0.0
    %736 = vmatpush1.msra.mxu0 0.0
    %737 = vmatprep.subr.mxu0 0.0
    %738 = vmatpush1.msra.mxu0 0.0
    %739 = vmatprep.subr.mxu0 0.0
    %740 = vmatpush1.msra.mxu0 0.0
    %741 = vmatprep.subr.mxu0 0.0
    %742 = vmatpush1.msra.mxu0 0.0
    %743 = vmatprep.subr.mxu0 0.0
    %744 = vmatpush1.msra.mxu0 0.0
    %745 = vmatprep.subr.mxu0 0.0
    %746 = vmatpush1.msra.mxu0 0.0
    %747 = vmatprep.subr.mxu0 0.0
    %748 = vmatpush1.msra.mxu0 0.0
    %749 = vmatprep.mubr.f32.mxu0 0.0
    %750 = vmatmul.mubr.f32.gmra.mrb[0].mxu0 %v683
    %v751 = vpop.f32.mrb[0].mxu0
    %v752 = vadd.f32 0.0, %v751
    %v753 = vpop.f32.mrb[0].mxu0
    %754 = vdwg.mxu0
    %v756 = vsel %vm681, %v546, 0
    %758 = vmatprep.subr.mxu0 0.0
    %759 = vmatpush1.msra.mxu0 %v607
    %760 = vmatprep.subr.mxu0 0.0
    %761 = vmatpush1.msra.mxu0 %v610
    %762 = vmatprep.subr.mxu0 0.0
    %763 = vmatpush1.msra.mxu0 0.0
    %764 = vmatprep.subr.mxu0 0.0
    %765 = vmatpush1.msra.mxu0 0.0
    %766 = vmatprep.subr.mxu0 0.0
    %767 = vmatpush1.msra.mxu0 0.0
    %768 = vmatprep.subr.mxu0 0.0
    %769 = vmatpush1.msra.mxu0 0.0
    %770 = vmatprep.subr.mxu0 0.0
    %771 = vmatpush1.msra.mxu0 0.0
    %772 = vmatprep.subr.mxu0 0.0
    %773 = vmatpush1.msra.mxu0 0.0
    %774 = vmatprep.subr.mxu0 0.0
    %775 = vmatpush1.msra.mxu0 0.0
    %776 = vmatprep.subr.mxu0 0.0
    %777 = vmatpush1.msra.mxu0 0.0
    %778 = vmatprep.subr.mxu0 0.0
    %779 = vmatpush1.msra.mxu0 0.0
    %780 = vmatprep.subr.mxu0 0.0
    %781 = vmatpush1.msra.mxu0 0.0
    %782 = vmatprep.subr.mxu0 0.0
    %783 = vmatpush1.msra.mxu0 0.0
    %784 = vmatprep.subr.mxu0 0.0
    %785 = vmatpush1.msra.mxu0 0.0
    %786 = vmatprep.subr.mxu0 0.0
    %787 = vmatpush1.msra.mxu0 0.0
    %788 = vmatprep.subr.mxu0 0.0
    %789 = vmatpush1.msra.mxu0 0.0
    %790 = vmatprep.subr.mxu0 0.0
    %791 = vmatpush1.msra.mxu0 0.0
    %792 = vmatprep.subr.mxu0 0.0
    %793 = vmatpush1.msra.mxu0 0.0
    %794 = vmatprep.subr.mxu0 0.0
    %795 = vmatpush1.msra.mxu0 0.0
    %796 = vmatprep.subr.mxu0 0.0
    %797 = vmatpush1.msra.mxu0 0.0
    %798 = vmatprep.subr.mxu0 0.0
    %799 = vmatpush1.msra.mxu0 0.0
    %800 = vmatprep.subr.mxu0 0.0
    %801 = vmatpush1.msra.mxu0 0.0
    %802 = vmatprep.subr.mxu0 0.0
    %803 = vmatpush1.msra.mxu0 0.0
    %804 = vmatprep.subr.mxu0 0.0
    %805 = vmatpush1.msra.mxu0 0.0
    %806 = vmatprep.subr.mxu0 0.0
    %807 = vmatpush1.msra.mxu0 0.0
    %808 = vmatprep.subr.mxu0 0.0
    %809 = vmatpush1.msra.mxu0 0.0
    %810 = vmatprep.subr.mxu0 0.0
    %811 = vmatpush1.msra.mxu0 0.0
    %812 = vmatprep.subr.mxu0 0.0
    %813 = vmatpush1.msra.mxu0 0.0
    %814 = vmatprep.subr.mxu0 0.0
    %815 = vmatpush1.msra.mxu0 0.0
    %816 = vmatprep.subr.mxu0 0.0
    %817 = vmatpush1.msra.mxu0 0.0
    %818 = vmatprep.subr.mxu0 0.0
    %819 = vmatpush1.msra.mxu0 0.0
    %820 = vmatprep.subr.mxu0 0.0
    %821 = vmatpush1.msra.mxu0 0.0
    %822 = vmatprep.mubr.f32.mxu0 0.0
    %823 = vmatmul.mubr.f32.gmra.mrb[0].mxu0 %v756
    %v824 = vpop.f32.mrb[0].mxu0
    %v825 = vadd.f32 %v752, %v824
    %v826 = vpop.f32.mrb[0].mxu0
    %827 = vdwg.mxu0
    %s828 = scalar_lea.vmem %s5, 16
    %v829 = vld [vmem:[%s828] sm:$0xff]
    %s830 = scalar_lea.vmem %s6, 256
    %v831 = vld [vmem:[%s830] sm:$0xff]
    %v832 = vld [vmem:[%s830 + $0x8] sm:$0xff]
    %v833 = vld [vmem:[%s830 + $0x10] sm:$0xff]
    %v834 = vld [vmem:[%s830 + $0x18] sm:$0xff]
    %v835 = vld [vmem:[%s830 + $0x20] sm:$0xff]
    %v836 = vld [vmem:[%s830 + $0x28] sm:$0xff]
    %v837 = vld [vmem:[%s830 + $0x30] sm:$0xff]
    %v838 = vld [vmem:[%s830 + $0x38] sm:$0xff]
    %v839 = vld [vmem:[%s830 + $0x40] sm:$0xff]
    %v840 = vld [vmem:[%s830 + $0x48] sm:$0xff]
    %v841 = vld [vmem:[%s830 + $0x50] sm:$0xff]
    %v842 = vld [vmem:[%s830 + $0x58] sm:$0xff]
    %v843 = vld [vmem:[%s830 + $0x60] sm:$0xff]
    %v844 = vld [vmem:[%s830 + $0x68] sm:$0xff]
    %v845 = vld [vmem:[%s830 + $0x70] sm:$0xff]
    %v846 = vld [vmem:[%s830 + $0x78] sm:$0xff]
    %v847 = vpack.c.bf16 %v832, %v831
    %v848 = vpack.c.bf16 %v834, %v833
    %v849 = vpack.c.bf16 %v836, %v835
    %v850 = vpack.c.bf16 %v838, %v837
    %v851 = vpack.c.bf16 %v840, %v839
    %v852 = vpack.c.bf16 %v842, %v841
    %v853 = vpack.c.bf16 %v844, %v843
    %v854 = vpack.c.bf16 %v846, %v845
    %855 = vmatprep.subr.bf16.mxu0 0
    %856 = vmatpush1.bf16.msra.mxu0 %v847
    %857 = vmatprep.subr.bf16.mxu0 0
    %858 = vmatpush1.bf16.msra.mxu0 %v848
    %859 = vmatprep.subr.bf16.mxu0 0
    %860 = vmatpush1.bf16.msra.mxu0 %v849
    %861 = vmatprep.subr.bf16.mxu0 0
    %862 = vmatpush1.bf16.msra.mxu0 %v850
    %863 = vmatprep.subr.bf16.mxu0 0
    %864 = vmatpush1.bf16.msra.mxu0 %v851
    %865 = vmatprep.subr.bf16.mxu0 0
    %866 = vmatpush1.bf16.msra.mxu0 %v852
    %867 = vmatprep.subr.bf16.mxu0 0
    %868 = vmatpush1.bf16.msra.mxu0 %v853
    %869 = vmatprep.subr.bf16.mxu0 0
    %870 = vmatpush1.bf16.msra.mxu0 %v854
    %871 = vmatprep.subr.bf16.mxu0 0
    %872 = vmatpush1.bf16.msra.mxu0 0
    %873 = vmatprep.subr.bf16.mxu0 0
    %874 = vmatpush1.bf16.msra.mxu0 0
    %875 = vmatprep.subr.bf16.mxu0 0
    %876 = vmatpush1.bf16.msra.mxu0 0
    %877 = vmatprep.subr.bf16.mxu0 0
    %878 = vmatpush1.bf16.msra.mxu0 0
    %879 = vmatprep.subr.bf16.mxu0 0
    %880 = vmatpush1.bf16.msra.mxu0 0
    %881 = vmatprep.subr.bf16.mxu0 0
    %882 = vmatpush1.bf16.msra.mxu0 0
    %883 = vmatprep.subr.bf16.mxu0 0
    %884 = vmatpush1.bf16.msra.mxu0 0
    %885 = vmatprep.subr.bf16.mxu0 0
    %886 = vmatpush1.bf16.msra.mxu0 0
    %887 = vmatprep.mubr.bf16.mxu0 0
    %888 = vmatmul.mubr.bf16.gmra.mrb[0].mxu0 %v563
    %v889 = vpop.f32.mrb[0].mxu0
    %v890 = vadd.f32 0.0, %v889
    %v891 = vpop.f32.mrb[0].mxu0
    %v892 = vpop.f32.mrb[0].mxu0
    %v893 = vadd.f32 0.0, %v892
    %v894 = vpop.f32.mrb[0].mxu0
    %895 = vdwg.mxu0
    %v897 = vsel %vm681, %v829, 0
    %899 = vmatprep.subr.mxu0 0.0
    %900 = vmatpush1.msra.mxu0 %v890
    %901 = vmatprep.subr.mxu0 0.0
    %902 = vmatpush1.msra.mxu0 %v893
    %903 = vmatprep.subr.mxu0 0.0
    %904 = vmatpush1.msra.mxu0 0.0
    %905 = vmatprep.subr.mxu0 0.0
    %906 = vmatpush1.msra.mxu0 0.0
    %907 = vmatprep.subr.mxu0 0.0
    %908 = vmatpush1.msra.mxu0 0.0
    %909 = vmatprep.subr.mxu0 0.0
    %910 = vmatpush1.msra.mxu0 0.0
    %911 = vmatprep.subr.mxu0 0.0
    %912 = vmatpush1.msra.mxu0 0.0
    %913 = vmatprep.subr.mxu0 0.0
    %914 = vmatpush1.msra.mxu0 0.0
    %915 = vmatprep.subr.mxu0 0.0
    %916 = vmatpush1.msra.mxu0 0.0
    %917 = vmatprep.subr.mxu0 0.0
    %918 = vmatpush1.msra.mxu0 0.0
    %919 = vmatprep.subr.mxu0 0.0
    %920 = vmatpush1.msra.mxu0 0.0
    %921 = vmatprep.subr.mxu0 0.0
    %922 = vmatpush1.msra.mxu0 0.0
    %923 = vmatprep.subr.mxu0 0.0
    %924 = vmatpush1.msra.mxu0 0.0
    %925 = vmatprep.subr.mxu0 0.0
    %926 = vmatpush1.msra.mxu0 0.0
    %927 = vmatprep.subr.mxu0 0.0
    %928 = vmatpush1.msra.mxu0 0.0
    %929 = vmatprep.subr.mxu0 0.0
    %930 = vmatpush1.msra.mxu0 0.0
    %931 = vmatprep.subr.mxu0 0.0
    %932 = vmatpush1.msra.mxu0 0.0
    %933 = vmatprep.subr.mxu0 0.0
    %934 = vmatpush1.msra.mxu0 0.0
    %935 = vmatprep.subr.mxu0 0.0
    %936 = vmatpush1.msra.mxu0 0.0
    %937 = vmatprep.subr.mxu0 0.0
    %938 = vmatpush1.msra.mxu0 0.0
    %939 = vmatprep.subr.mxu0 0.0
    %940 = vmatpush1.msra.mxu0 0.0
    %941 = vmatprep.subr.mxu0 0.0
    %942 = vmatpush1.msra.mxu0 0.0
    %943 = vmatprep.subr.mxu0 0.0
    %944 = vmatpush1.msra.mxu0 0.0
    %945 = vmatprep.subr.mxu0 0.0
    %946 = vmatpush1.msra.mxu0 0.0
    %947 = vmatprep.subr.mxu0 0.0
    %948 = vmatpush1.msra.mxu0 0.0
    %949 = vmatprep.subr.mxu0 0.0
    %950 = vmatpush1.msra.mxu0 0.0
    %951 = vmatprep.subr.mxu0 0.0
    %952 = vmatpush1.msra.mxu0 0.0
    %953 = vmatprep.subr.mxu0 0.0
    %954 = vmatpush1.msra.mxu0 0.0
    %955 = vmatprep.subr.mxu0 0.0
    %956 = vmatpush1.msra.mxu0 0.0
    %957 = vmatprep.subr.mxu0 0.0
    %958 = vmatpush1.msra.mxu0 0.0
    %959 = vmatprep.subr.mxu0 0.0
    %960 = vmatpush1.msra.mxu0 0.0
    %961 = vmatprep.subr.mxu0 0.0
    %962 = vmatpush1.msra.mxu0 0.0
    %963 = vmatprep.mubr.f32.mxu0 0.0
    %964 = vmatmul.mubr.f32.gmra.mrb[0].mxu0 %v897
    %v965 = vpop.f32.mrb[0].mxu0
    %v966 = vadd.f32 0.0, %v965
    %v967 = vpop.f32.mrb[0].mxu0
    %968 = vdwg.mxu0
    %v969 = vadd.f32 %v825, %v966
    %v971 = vlaneseq
    %v972 = vshrl.u32 %v971, 7
    %v973 = vsub.s32 0, %v972
    %v974 = vrot.slane %v545, %v973
    %v976 = vadd.f32 %v969, %v974
    %vm977 = vcmp.gt.f32.partialorder %v976, 0.0
    %v978 = vmul.f32 %v976, 0.01
    %v979 = vsel %vm977, %v976, %v978
    %v980 = vld [vmem:[%s8] sm:$0x3]
    %v981 = vld [vmem:[%s9] sm:$0xff]
    %v982 = vld [vmem:[%s9 + $0x8] sm:$0xff]
    %v983 = vld [vmem:[%s9 + $0x10] sm:$0xff]
    %v984 = vld [vmem:[%s9 + $0x18] sm:$0xff]
    %v985 = vld [vmem:[%s9 + $0x20] sm:$0xff]
    %v986 = vld [vmem:[%s9 + $0x28] sm:$0xff]
    %v987 = vld [vmem:[%s9 + $0x30] sm:$0xff]
    %v988 = vld [vmem:[%s9 + $0x38] sm:$0xff]
    %v989 = vld [vmem:[%s9 + $0x40] sm:$0xff]
    %v990 = vld [vmem:[%s9 + $0x48] sm:$0xff]
    %v991 = vld [vmem:[%s9 + $0x50] sm:$0xff]
    %v992 = vld [vmem:[%s9 + $0x58] sm:$0xff]
    %v993 = vld [vmem:[%s9 + $0x60] sm:$0xff]
    %v994 = vld [vmem:[%s9 + $0x68] sm:$0xff]
    %v995 = vld [vmem:[%s9 + $0x70] sm:$0xff]
    %v996 = vld [vmem:[%s9 + $0x78] sm:$0xff]
    %v997 = vpack.c.bf16 %v979, %v979
    %v998 = vpack.c.bf16 %v982, %v981
    %v999 = vpack.c.bf16 %v984, %v983
    %v1000 = vpack.c.bf16 %v986, %v985
    %v1001 = vpack.c.bf16 %v988, %v987
    %v1002 = vpack.c.bf16 %v990, %v989
    %v1003 = vpack.c.bf16 %v992, %v991
    %v1004 = vpack.c.bf16 %v994, %v993
    %v1005 = vpack.c.bf16 %v996, %v995
    %1006 = vmatprep.subr.bf16.mxu0 0
    %1007 = vmatpush1.bf16.msra.mxu0 %v998
    %1008 = vmatprep.subr.bf16.mxu0 0
    %1009 = vmatpush1.bf16.msra.mxu0 %v999
    %1010 = vmatprep.subr.bf16.mxu0 0
    %1011 = vmatpush1.bf16.msra.mxu0 %v1000
    %1012 = vmatprep.subr.bf16.mxu0 0
    %1013 = vmatpush1.bf16.msra.mxu0 %v1001
    %1014 = vmatprep.subr.bf16.mxu0 0
    %1015 = vmatpush1.bf16.msra.mxu0 %v1002
    %1016 = vmatprep.subr.bf16.mxu0 0
    %1017 = vmatpush1.bf16.msra.mxu0 %v1003
    %1018 = vmatprep.subr.bf16.mxu0 0
    %1019 = vmatpush1.bf16.msra.mxu0 %v1004
    %1020 = vmatprep.subr.bf16.mxu0 0
    %1021 = vmatpush1.bf16.msra.mxu0 %v1005
    %1022 = vmatprep.subr.bf16.mxu0 0
    %1023 = vmatpush1.bf16.msra.mxu0 0
    %1024 = vmatprep.subr.bf16.mxu0 0
    %1025 = vmatpush1.bf16.msra.mxu0 0
    %1026 = vmatprep.subr.bf16.mxu0 0
    %1027 = vmatpush1.bf16.msra.mxu0 0
    %1028 = vmatprep.subr.bf16.mxu0 0
    %1029 = vmatpush1.bf16.msra.mxu0 0
    %1030 = vmatprep.subr.bf16.mxu0 0
    %1031 = vmatpush1.bf16.msra.mxu0 0
    %1032 = vmatprep.subr.bf16.mxu0 0
    %1033 = vmatpush1.bf16.msra.mxu0 0
    %1034 = vmatprep.subr.bf16.mxu0 0
    %1035 = vmatpush1.bf16.msra.mxu0 0
    %1036 = vmatprep.subr.bf16.mxu0 0
    %1037 = vmatpush1.bf16.msra.mxu0 0
    %1038 = vmatprep.mubr.bf16.mxu0 0
    %1039 = vmatmul.mubr.bf16.gmra.mrb[0].mxu0 %v997
    %v1040 = vpop.f32.mrb[0].mxu0
    %v1041 = vadd.f32 0.0, %v1040
    %v1042 = vpop.f32.mrb[0].mxu0
    %v1043 = vpop.f32.mrb[0].mxu0
    %v1044 = vpop.f32.mrb[0].mxu0
    %1045 = vdwg.mxu0
    %s1046 = scalar_lea.vmem %s8, 2
    %v1047 = vld [vmem:[%s1046] sm:$0x3]
    %s1048 = scalar_lea.vmem %s9, 128
    %v1049 = vld [vmem:[%s1048] sm:$0xff]
    %v1050 = vld [vmem:[%s1048 + $0x8] sm:$0xff]
    %v1051 = vld [vmem:[%s1048 + $0x10] sm:$0xff]
    %v1052 = vld [vmem:[%s1048 + $0x18] sm:$0xff]
    %v1053 = vld [vmem:[%s1048 + $0x20] sm:$0xff]
    %v1054 = vld [vmem:[%s1048 + $0x28] sm:$0xff]
    %v1055 = vld [vmem:[%s1048 + $0x30] sm:$0xff]
    %v1056 = vld [vmem:[%s1048 + $0x38] sm:$0xff]
    %v1057 = vld [vmem:[%s1048 + $0x40] sm:$0xff]
    %v1058 = vld [vmem:[%s1048 + $0x48] sm:$0xff]
    %v1059 = vld [vmem:[%s1048 + $0x50] sm:$0xff]
    %v1060 = vld [vmem:[%s1048 + $0x58] sm:$0xff]
    %v1061 = vld [vmem:[%s1048 + $0x60] sm:$0xff]
    %v1062 = vld [vmem:[%s1048 + $0x68] sm:$0xff]
    %v1063 = vld [vmem:[%s1048 + $0x70] sm:$0xff]
    %v1064 = vld [vmem:[%s1048 + $0x78] sm:$0xff]
    %v1065 = vpack.c.bf16 %v1050, %v1049
    %v1066 = vpack.c.bf16 %v1052, %v1051
    %v1067 = vpack.c.bf16 %v1054, %v1053
    %v1068 = vpack.c.bf16 %v1056, %v1055
    %v1069 = vpack.c.bf16 %v1058, %v1057
    %v1070 = vpack.c.bf16 %v1060, %v1059
    %v1071 = vpack.c.bf16 %v1062, %v1061
    %v1072 = vpack.c.bf16 %v1064, %v1063
    %1073 = vmatprep.subr.bf16.mxu0 0
    %1074 = vmatpush1.bf16.msra.mxu0 %v1065
    %1075 = vmatprep.subr.bf16.mxu0 0
    %1076 = vmatpush1.bf16.msra.mxu0 %v1066
    %1077 = vmatprep.subr.bf16.mxu0 0
    %1078 = vmatpush1.bf16.msra.mxu0 %v1067
    %1079 = vmatprep.subr.bf16.mxu0 0
    %1080 = vmatpush1.bf16.msra.mxu0 %v1068
    %1081 = vmatprep.subr.bf16.mxu0 0
    %1082 = vmatpush1.bf16.msra.mxu0 %v1069
    %1083 = vmatprep.subr.bf16.mxu0 0
    %1084 = vmatpush1.bf16.msra.mxu0 %v1070
    %1085 = vmatprep.subr.bf16.mxu0 0
    %1086 = vmatpush1.bf16.msra.mxu0 %v1071
    %1087 = vmatprep.subr.bf16.mxu0 0
    %1088 = vmatpush1.bf16.msra.mxu0 %v1072
    %1089 = vmatprep.subr.bf16.mxu0 0
    %1090 = vmatpush1.bf16.msra.mxu0 0
    %1091 = vmatprep.subr.bf16.mxu0 0
    %1092 = vmatpush1.bf16.msra.mxu0 0
    %1093 = vmatprep.subr.bf16.mxu0 0
    %1094 = vmatpush1.bf16.msra.mxu0 0
    %1095 = vmatprep.subr.bf16.mxu0 0
    %1096 = vmatpush1.bf16.msra.mxu0 0
    %1097 = vmatprep.subr.bf16.mxu0 0
    %1098 = vmatpush1.bf16.msra.mxu0 0
    %1099 = vmatprep.subr.bf16.mxu0 0
    %1100 = vmatpush1.bf16.msra.mxu0 0
    %1101 = vmatprep.subr.bf16.mxu0 0
    %1102 = vmatpush1.bf16.msra.mxu0 0
    %1103 = vmatprep.subr.bf16.mxu0 0
    %1104 = vmatpush1.bf16.msra.mxu0 0
    %1105 = vmatprep.mubr.bf16.mxu0 0
    %1106 = vmatmul.mubr.bf16.gmra.mrb[0].mxu0 %v997
    %v1107 = vpop.f32.mrb[0].mxu0
    %v1108 = vadd.f32 0.0, %v1107
    %v1109 = vpop.f32.mrb[0].mxu0
    %v1110 = vpop.f32.mrb[0].mxu0
    %v1111 = vpop.f32.mrb[0].mxu0
    %1112 = vdwg.mxu0
    %vm1113 = vcmask 64512
    %v1115 = vsel %vm1113, %v1047, 0
    %1117 = vmatprep.subr.mxu0 0.0
    %1118 = vmatpush1.msra.mxu0 %v1108
    %1119 = vmatprep.subr.mxu0 0.0
    %1120 = vmatpush1.msra.mxu0 0.0
    %1121 = vmatprep.subr.mxu0 0.0
    %1122 = vmatpush1.msra.mxu0 0.0
    %1123 = vmatprep.subr.mxu0 0.0
    %1124 = vmatpush1.msra.mxu0 0.0
    %1125 = vmatprep.subr.mxu0 0.0
    %1126 = vmatpush1.msra.mxu0 0.0
    %1127 = vmatprep.subr.mxu0 0.0
    %1128 = vmatpush1.msra.mxu0 0.0
    %1129 = vmatprep.subr.mxu0 0.0
    %1130 = vmatpush1.msra.mxu0 0.0
    %1131 = vmatprep.subr.mxu0 0.0
    %1132 = vmatpush1.msra.mxu0 0.0
    %1133 = vmatprep.subr.mxu0 0.0
    %1134 = vmatpush1.msra.mxu0 0.0
    %1135 = vmatprep.subr.mxu0 0.0
    %1136 = vmatpush1.msra.mxu0 0.0
    %1137 = vmatprep.subr.mxu0 0.0
    %1138 = vmatpush1.msra.mxu0 0.0
    %1139 = vmatprep.subr.mxu0 0.0
    %1140 = vmatpush1.msra.mxu0 0.0
    %1141 = vmatprep.subr.mxu0 0.0
    %1142 = vmatpush1.msra.mxu0 0.0
    %1143 = vmatprep.subr.mxu0 0.0
    %1144 = vmatpush1.msra.mxu0 0.0
    %1145 = vmatprep.subr.mxu0 0.0
    %1146 = vmatpush1.msra.mxu0 0.0
    %1147 = vmatprep.subr.mxu0 0.0
    %1148 = vmatpush1.msra.mxu0 0.0
    %1149 = vmatprep.subr.mxu0 0.0
    %1150 = vmatpush1.msra.mxu0 0.0
    %1151 = vmatprep.subr.mxu0 0.0
    %1152 = vmatpush1.msra.mxu0 0.0
    %1153 = vmatprep.subr.mxu0 0.0
    %1154 = vmatpush1.msra.mxu0 0.0
    %1155 = vmatprep.subr.mxu0 0.0
    %1156 = vmatpush1.msra.mxu0 0.0
    %1157 = vmatprep.subr.mxu0 0.0
    %1158 = vmatpush1.msra.mxu0 0.0
    %1159 = vmatprep.subr.mxu0 0.0
    %1160 = vmatpush1.msra.mxu0 0.0
    %1161 = vmatprep.subr.mxu0 0.0
    %1162 = vmatpush1.msra.mxu0 0.0
    %1163 = vmatprep.subr.mxu0 0.0
    %1164 = vmatpush1.msra.mxu0 0.0
    %1165 = vmatprep.subr.mxu0 0.0
    %1166 = vmatpush1.msra.mxu0 0.0
    %1167 = vmatprep.subr.mxu0 0.0
    %1168 = vmatpush1.msra.mxu0 0.0
    %1169 = vmatprep.subr.mxu0 0.0
    %1170 = vmatpush1.msra.mxu0 0.0
    %1171 = vmatprep.subr.mxu0 0.0
    %1172 = vmatpush1.msra.mxu0 0.0
    %1173 = vmatprep.subr.mxu0 0.0
    %1174 = vmatpush1.msra.mxu0 0.0
    %1175 = vmatprep.subr.mxu0 0.0
    %1176 = vmatpush1.msra.mxu0 0.0
    %1177 = vmatprep.subr.mxu0 0.0
    %1178 = vmatpush1.msra.mxu0 0.0
    %1179 = vmatprep.subr.mxu0 0.0
    %1180 = vmatpush1.msra.mxu0 0.0
    %1181 = vmatprep.mubr.f32.mxu0 0.0
    %1182 = vmatmul.mubr.f32.gmra.mrb[0].mxu0 %v1115
    %v1183 = vpop.f32.mrb[0].mxu0
    %v1184 = vadd.f32 0.0, %v1183
    %v1185 = vpop.f32.mrb[0].mxu0
    %1186 = vdwg.mxu0
    %v1188 = vsel %vm1113, %v980, 0
    %1190 = vmatprep.subr.mxu0 0.0
    %1191 = vmatpush1.msra.mxu0 %v1041
    %1192 = vmatprep.subr.mxu0 0.0
    %1193 = vmatpush1.msra.mxu0 0.0
    %1194 = vmatprep.subr.mxu0 0.0
    %1195 = vmatpush1.msra.mxu0 0.0
    %1196 = vmatprep.subr.mxu0 0.0
    %1197 = vmatpush1.msra.mxu0 0.0
    %1198 = vmatprep.subr.mxu0 0.0
    %1199 = vmatpush1.msra.mxu0 0.0
    %1200 = vmatprep.subr.mxu0 0.0
    %1201 = vmatpush1.msra.mxu0 0.0
    %1202 = vmatprep.subr.mxu0 0.0
    %1203 = vmatpush1.msra.mxu0 0.0
    %1204 = vmatprep.subr.mxu0 0.0
    %1205 = vmatpush1.msra.mxu0 0.0
    %1206 = vmatprep.subr.mxu0 0.0
    %1207 = vmatpush1.msra.mxu0 0.0
    %1208 = vmatprep.subr.mxu0 0.0
    %1209 = vmatpush1.msra.mxu0 0.0
    %1210 = vmatprep.subr.mxu0 0.0
    %1211 = vmatpush1.msra.mxu0 0.0
    %1212 = vmatprep.subr.mxu0 0.0
    %1213 = vmatpush1.msra.mxu0 0.0
    %1214 = vmatprep.subr.mxu0 0.0
    %1215 = vmatpush1.msra.mxu0 0.0
    %1216 = vmatprep.subr.mxu0 0.0
    %1217 = vmatpush1.msra.mxu0 0.0
    %1218 = vmatprep.subr.mxu0 0.0
    %1219 = vmatpush1.msra.mxu0 0.0
    %1220 = vmatprep.subr.mxu0 0.0
    %1221 = vmatpush1.msra.mxu0 0.0
    %1222 = vmatprep.subr.mxu0 0.0
    %1223 = vmatpush1.msra.mxu0 0.0
    %1224 = vmatprep.subr.mxu0 0.0
    %1225 = vmatpush1.msra.mxu0 0.0
    %1226 = vmatprep.subr.mxu0 0.0
    %1227 = vmatpush1.msra.mxu0 0.0
    %1228 = vmatprep.subr.mxu0 0.0
    %1229 = vmatpush1.msra.mxu0 0.0
    %1230 = vmatprep.subr.mxu0 0.0
    %1231 = vmatpush1.msra.mxu0 0.0
    %1232 = vmatprep.subr.mxu0 0.0
    %1233 = vmatpush1.msra.mxu0 0.0
    %1234 = vmatprep.subr.mxu0 0.0
    %1235 = vmatpush1.msra.mxu0 0.0
    %1236 = vmatprep.subr.mxu0 0.0
    %1237 = vmatpush1.msra.mxu0 0.0
    %1238 = vmatprep.subr.mxu0 0.0
    %1239 = vmatpush1.msra.mxu0 0.0
    %1240 = vmatprep.subr.mxu0 0.0
    %1241 = vmatpush1.msra.mxu0 0.0
    %1242 = vmatprep.subr.mxu0 0.0
    %1243 = vmatpush1.msra.mxu0 0.0
    %1244 = vmatprep.subr.mxu0 0.0
    %1245 = vmatpush1.msra.mxu0 0.0
    %1246 = vmatprep.subr.mxu0 0.0
    %1247 = vmatpush1.msra.mxu0 0.0
    %1248 = vmatprep.subr.mxu0 0.0
    %1249 = vmatpush1.msra.mxu0 0.0
    %1250 = vmatprep.subr.mxu0 0.0
    %1251 = vmatpush1.msra.mxu0 0.0
    %1252 = vmatprep.subr.mxu0 0.0
    %1253 = vmatpush1.msra.mxu0 0.0
    %1254 = vmatprep.mubr.f32.mxu0 0.0
    %1255 = vmatmul.mubr.f32.gmra.mrb[0].mxu0 %v1188
    %v1256 = vpop.f32.mrb[0].mxu0
    %v1257 = vadd.f32 %v1184, %v1256
    %v1258 = vpop.f32.mrb[0].mxu0
    %1259 = vdwg.mxu0
    %s1260 = scalar_lea.vmem %s8, 4
    %v1261 = vld [vmem:[%s1260] sm:$0x3]
    %s1262 = scalar_lea.vmem %s9, 256
    %v1263 = vld [vmem:[%s1262] sm:$0xff]
    %v1264 = vld [vmem:[%s1262 + $0x8] sm:$0xff]
    %v1265 = vld [vmem:[%s1262 + $0x10] sm:$0xff]
    %v1266 = vld [vmem:[%s1262 + $0x18] sm:$0xff]
    %v1267 = vld [vmem:[%s1262 + $0x20] sm:$0xff]
    %v1268 = vld [vmem:[%s1262 + $0x28] sm:$0xff]
    %v1269 = vld [vmem:[%s1262 + $0x30] sm:$0xff]
    %v1270 = vld [vmem:[%s1262 + $0x38] sm:$0xff]
    %v1271 = vld [vmem:[%s1262 + $0x40] sm:$0xff]
    %v1272 = vld [vmem:[%s1262 + $0x48] sm:$0xff]
    %v1273 = vld [vmem:[%s1262 + $0x50] sm:$0xff]
    %v1274 = vld [vmem:[%s1262 + $0x58] sm:$0xff]
    %v1275 = vld [vmem:[%s1262 + $0x60] sm:$0xff]
    %v1276 = vld [vmem:[%s1262 + $0x68] sm:$0xff]
    %v1277 = vld [vmem:[%s1262 + $0x70] sm:$0xff]
    %v1278 = vld [vmem:[%s1262 + $0x78] sm:$0xff]
    %v1279 = vpack.c.bf16 %v1264, %v1263
    %v1280 = vpack.c.bf16 %v1266, %v1265
    %v1281 = vpack.c.bf16 %v1268, %v1267
    %v1282 = vpack.c.bf16 %v1270, %v1269
    %v1283 = vpack.c.bf16 %v1272, %v1271
    %v1284 = vpack.c.bf16 %v1274, %v1273
    %v1285 = vpack.c.bf16 %v1276, %v1275
    %v1286 = vpack.c.bf16 %v1278, %v1277
    %1287 = vmatprep.subr.bf16.mxu0 0
    %1288 = vmatpush1.bf16.msra.mxu0 %v1279
    %1289 = vmatprep.subr.bf16.mxu0 0
    %1290 = vmatpush1.bf16.msra.mxu0 %v1280
    %1291 = vmatprep.subr.bf16.mxu0 0
    %1292 = vmatpush1.bf16.msra.mxu0 %v1281
    %1293 = vmatprep.subr.bf16.mxu0 0
    %1294 = vmatpush1.bf16.msra.mxu0 %v1282
    %1295 = vmatprep.subr.bf16.mxu0 0
    %1296 = vmatpush1.bf16.msra.mxu0 %v1283
    %1297 = vmatprep.subr.bf16.mxu0 0
    %1298 = vmatpush1.bf16.msra.mxu0 %v1284
    %1299 = vmatprep.subr.bf16.mxu0 0
    %1300 = vmatpush1.bf16.msra.mxu0 %v1285
    %1301 = vmatprep.subr.bf16.mxu0 0
    %1302 = vmatpush1.bf16.msra.mxu0 %v1286
    %1303 = vmatprep.subr.bf16.mxu0 0
    %1304 = vmatpush1.bf16.msra.mxu0 0
    %1305 = vmatprep.subr.bf16.mxu0 0
    %1306 = vmatpush1.bf16.msra.mxu0 0
    %1307 = vmatprep.subr.bf16.mxu0 0
    %1308 = vmatpush1.bf16.msra.mxu0 0
    %1309 = vmatprep.subr.bf16.mxu0 0
    %1310 = vmatpush1.bf16.msra.mxu0 0
    %1311 = vmatprep.subr.bf16.mxu0 0
    %1312 = vmatpush1.bf16.msra.mxu0 0
    %1313 = vmatprep.subr.bf16.mxu0 0
    %1314 = vmatpush1.bf16.msra.mxu0 0
    %1315 = vmatprep.subr.bf16.mxu0 0
    %1316 = vmatpush1.bf16.msra.mxu0 0
    %1317 = vmatprep.subr.bf16.mxu0 0
    %1318 = vmatpush1.bf16.msra.mxu0 0
    %1319 = vmatprep.mubr.bf16.mxu0 0
    %1320 = vmatmul.mubr.bf16.gmra.mrb[0].mxu0 %v997
    %v1321 = vpop.f32.mrb[0].mxu0
    %v1322 = vadd.f32 0.0, %v1321
    %v1323 = vpop.f32.mrb[0].mxu0
    %v1324 = vpop.f32.mrb[0].mxu0
    %v1325 = vpop.f32.mrb[0].mxu0
    %1326 = vdwg.mxu0
    %v1328 = vsel %vm1113, %v1261, 0
    %1330 = vmatprep.subr.mxu0 0.0
    %1331 = vmatpush1.msra.mxu0 %v1322
    %1332 = vmatprep.subr.mxu0 0.0
    %1333 = vmatpush1.msra.mxu0 0.0
    %1334 = vmatprep.subr.mxu0 0.0
    %1335 = vmatpush1.msra.mxu0 0.0
    %1336 = vmatprep.subr.mxu0 0.0
    %1337 = vmatpush1.msra.mxu0 0.0
    %1338 = vmatprep.subr.mxu0 0.0
    %1339 = vmatpush1.msra.mxu0 0.0
    %1340 = vmatprep.subr.mxu0 0.0
    %1341 = vmatpush1.msra.mxu0 0.0
    %1342 = vmatprep.subr.mxu0 0.0
    %1343 = vmatpush1.msra.mxu0 0.0
    %1344 = vmatprep.subr.mxu0 0.0
    %1345 = vmatpush1.msra.mxu0 0.0
    %1346 = vmatprep.subr.mxu0 0.0
    %1347 = vmatpush1.msra.mxu0 0.0
    %1348 = vmatprep.subr.mxu0 0.0
    %1349 = vmatpush1.msra.mxu0 0.0
    %1350 = vmatprep.subr.mxu0 0.0
    %1351 = vmatpush1.msra.mxu0 0.0
    %1352 = vmatprep.subr.mxu0 0.0
    %1353 = vmatpush1.msra.mxu0 0.0
    %1354 = vmatprep.subr.mxu0 0.0
    %1355 = vmatpush1.msra.mxu0 0.0
    %1356 = vmatprep.subr.mxu0 0.0
    %1357 = vmatpush1.msra.mxu0 0.0
    %1358 = vmatprep.subr.mxu0 0.0
    %1359 = vmatpush1.msra.mxu0 0.0
    %1360 = vmatprep.subr.mxu0 0.0
    %1361 = vmatpush1.msra.mxu0 0.0
    %1362 = vmatprep.subr.mxu0 0.0
    %1363 = vmatpush1.msra.mxu0 0.0
    %1364 = vmatprep.subr.mxu0 0.0
    %1365 = vmatpush1.msra.mxu0 0.0
    %1366 = vmatprep.subr.mxu0 0.0
    %1367 = vmatpush1.msra.mxu0 0.0
    %1368 = vmatprep.subr.mxu0 0.0
    %1369 = vmatpush1.msra.mxu0 0.0
    %1370 = vmatprep.subr.mxu0 0.0
    %1371 = vmatpush1.msra.mxu0 0.0
    %1372 = vmatprep.subr.mxu0 0.0
    %1373 = vmatpush1.msra.mxu0 0.0
    %1374 = vmatprep.subr.mxu0 0.0
    %1375 = vmatpush1.msra.mxu0 0.0
    %1376 = vmatprep.subr.mxu0 0.0
    %1377 = vmatpush1.msra.mxu0 0.0
    %1378 = vmatprep.subr.mxu0 0.0
    %1379 = vmatpush1.msra.mxu0 0.0
    %1380 = vmatprep.subr.mxu0 0.0
    %1381 = vmatpush1.msra.mxu0 0.0
    %1382 = vmatprep.subr.mxu0 0.0
    %1383 = vmatpush1.msra.mxu0 0.0
    %1384 = vmatprep.subr.mxu0 0.0
    %1385 = vmatpush1.msra.mxu0 0.0
    %1386 = vmatprep.subr.mxu0 0.0
    %1387 = vmatpush1.msra.mxu0 0.0
    %1388 = vmatprep.subr.mxu0 0.0
    %1389 = vmatpush1.msra.mxu0 0.0
    %1390 = vmatprep.subr.mxu0 0.0
    %1391 = vmatpush1.msra.mxu0 0.0
    %1392 = vmatprep.subr.mxu0 0.0
    %1393 = vmatpush1.msra.mxu0 0.0
    %1394 = vmatprep.mubr.f32.mxu0 0.0
    %1395 = vmatmul.mubr.f32.gmra.mrb[0].mxu0 %v1328
    %v1396 = vpop.f32.mrb[0].mxu0
    %v1397 = vadd.f32 0.0, %v1396
    %v1398 = vpop.f32.mrb[0].mxu0
    %1399 = vdwg.mxu0
    %v1400 = vadd.f32 %v1257, %v1397
    %s1401 = scalar_lea.vmem %s8, 6
    %v1402 = vld [vmem:[%s1401] sm:$0x3]
    %s1403 = scalar_lea.vmem %s9, 384
    %v1404 = vld [vmem:[%s1403] sm:$0xff]
    %v1405 = vld [vmem:[%s1403 + $0x8] sm:$0xff]
    %v1406 = vld [vmem:[%s1403 + $0x10] sm:$0xff]
    %v1407 = vld [vmem:[%s1403 + $0x18] sm:$0xff]
    %v1408 = vld [vmem:[%s1403 + $0x20] sm:$0xff]
    %v1409 = vld [vmem:[%s1403 + $0x28] sm:$0xff]
    %v1410 = vld [vmem:[%s1403 + $0x30] sm:$0xff]
    %v1411 = vld [vmem:[%s1403 + $0x38] sm:$0xff]
    %v1412 = vld [vmem:[%s1403 + $0x40] sm:$0xff]
    %v1413 = vld [vmem:[%s1403 + $0x48] sm:$0xff]
    %v1414 = vld [vmem:[%s1403 + $0x50] sm:$0xff]
    %v1415 = vld [vmem:[%s1403 + $0x58] sm:$0xff]
    %v1416 = vld [vmem:[%s1403 + $0x60] sm:$0xff]
    %v1417 = vld [vmem:[%s1403 + $0x68] sm:$0xff]
    %v1418 = vld [vmem:[%s1403 + $0x70] sm:$0xff]
    %v1419 = vld [vmem:[%s1403 + $0x78] sm:$0xff]
    %v1420 = vpack.c.bf16 %v1405, %v1404
    %v1421 = vpack.c.bf16 %v1407, %v1406
    %v1422 = vpack.c.bf16 %v1409, %v1408
    %v1423 = vpack.c.bf16 %v1411, %v1410
    %v1424 = vpack.c.bf16 %v1413, %v1412
    %v1425 = vpack.c.bf16 %v1415, %v1414
    %v1426 = vpack.c.bf16 %v1417, %v1416
    %v1427 = vpack.c.bf16 %v1419, %v1418
    %1428 = vmatprep.subr.bf16.mxu0 0
    %1429 = vmatpush1.bf16.msra.mxu0 %v1420
    %1430 = vmatprep.subr.bf16.mxu0 0
    %1431 = vmatpush1.bf16.msra.mxu0 %v1421
    %1432 = vmatprep.subr.bf16.mxu0 0
    %1433 = vmatpush1.bf16.msra.mxu0 %v1422
    %1434 = vmatprep.subr.bf16.mxu0 0
    %1435 = vmatpush1.bf16.msra.mxu0 %v1423
    %1436 = vmatprep.subr.bf16.mxu0 0
    %1437 = vmatpush1.bf16.msra.mxu0 %v1424
    %1438 = vmatprep.subr.bf16.mxu0 0
    %1439 = vmatpush1.bf16.msra.mxu0 %v1425
    %1440 = vmatprep.subr.bf16.mxu0 0
    %1441 = vmatpush1.bf16.msra.mxu0 %v1426
    %1442 = vmatprep.subr.bf16.mxu0 0
    %1443 = vmatpush1.bf16.msra.mxu0 %v1427
    %1444 = vmatprep.subr.bf16.mxu0 0
    %1445 = vmatpush1.bf16.msra.mxu0 0
    %1446 = vmatprep.subr.bf16.mxu0 0
    %1447 = vmatpush1.bf16.msra.mxu0 0
    %1448 = vmatprep.subr.bf16.mxu0 0
    %1449 = vmatpush1.bf16.msra.mxu0 0
    %1450 = vmatprep.subr.bf16.mxu0 0
    %1451 = vmatpush1.bf16.msra.mxu0 0
    %1452 = vmatprep.subr.bf16.mxu0 0
    %1453 = vmatpush1.bf16.msra.mxu0 0
    %1454 = vmatprep.subr.bf16.mxu0 0
    %1455 = vmatpush1.bf16.msra.mxu0 0
    %1456 = vmatprep.subr.bf16.mxu0 0
    %1457 = vmatpush1.bf16.msra.mxu0 0
    %1458 = vmatprep.subr.bf16.mxu0 0
    %1459 = vmatpush1.bf16.msra.mxu0 0
    %1460 = vmatprep.mubr.bf16.mxu0 0
    %1461 = vmatmul.mubr.bf16.gmra.mrb[0].mxu0 %v997
    %v1462 = vpop.f32.mrb[0].mxu0
    %v1463 = vadd.f32 0.0, %v1462
    %v1464 = vpop.f32.mrb[0].mxu0
    %v1465 = vpop.f32.mrb[0].mxu0
    %v1466 = vpop.f32.mrb[0].mxu0
    %1467 = vdwg.mxu0
    %v1469 = vsel %vm1113, %v1402, 0
    %1471 = vmatprep.subr.mxu0 0.0
    %1472 = vmatpush1.msra.mxu0 %v1463
    %1473 = vmatprep.subr.mxu0 0.0
    %1474 = vmatpush1.msra.mxu0 0.0
    %1475 = vmatprep.subr.mxu0 0.0
    %1476 = vmatpush1.msra.mxu0 0.0
    %1477 = vmatprep.subr.mxu0 0.0
    %1478 = vmatpush1.msra.mxu0 0.0
    %1479 = vmatprep.subr.mxu0 0.0
    %1480 = vmatpush1.msra.mxu0 0.0
    %1481 = vmatprep.subr.mxu0 0.0
    %1482 = vmatpush1.msra.mxu0 0.0
    %1483 = vmatprep.subr.mxu0 0.0
    %1484 = vmatpush1.msra.mxu0 0.0
    %1485 = vmatprep.subr.mxu0 0.0
    %1486 = vmatpush1.msra.mxu0 0.0
    %1487 = vmatprep.subr.mxu0 0.0
    %1488 = vmatpush1.msra.mxu0 0.0
    %1489 = vmatprep.subr.mxu0 0.0
    %1490 = vmatpush1.msra.mxu0 0.0
    %1491 = vmatprep.subr.mxu0 0.0
    %1492 = vmatpush1.msra.mxu0 0.0
    %1493 = vmatprep.subr.mxu0 0.0
    %1494 = vmatpush1.msra.mxu0 0.0
    %1495 = vmatprep.subr.mxu0 0.0
    %1496 = vmatpush1.msra.mxu0 0.0
    %1497 = vmatprep.subr.mxu0 0.0
    %1498 = vmatpush1.msra.mxu0 0.0
    %1499 = vmatprep.subr.mxu0 0.0
    %1500 = vmatpush1.msra.mxu0 0.0
    %1501 = vmatprep.subr.mxu0 0.0
    %1502 = vmatpush1.msra.mxu0 0.0
    %1503 = vmatprep.subr.mxu0 0.0
    %1504 = vmatpush1.msra.mxu0 0.0
    %1505 = vmatprep.subr.mxu0 0.0
    %1506 = vmatpush1.msra.mxu0 0.0
    %1507 = vmatprep.subr.mxu0 0.0
    %1508 = vmatpush1.msra.mxu0 0.0
    %1509 = vmatprep.subr.mxu0 0.0
    %1510 = vmatpush1.msra.mxu0 0.0
    %1511 = vmatprep.subr.mxu0 0.0
    %1512 = vmatpush1.msra.mxu0 0.0
    %1513 = vmatprep.subr.mxu0 0.0
    %1514 = vmatpush1.msra.mxu0 0.0
    %1515 = vmatprep.subr.mxu0 0.0
    %1516 = vmatpush1.msra.mxu0 0.0
    %1517 = vmatprep.subr.mxu0 0.0
    %1518 = vmatpush1.msra.mxu0 0.0
    %1519 = vmatprep.subr.mxu0 0.0
    %1520 = vmatpush1.msra.mxu0 0.0
    %1521 = vmatprep.subr.mxu0 0.0
    %1522 = vmatpush1.msra.mxu0 0.0
    %1523 = vmatprep.subr.mxu0 0.0
    %1524 = vmatpush1.msra.mxu0 0.0
    %1525 = vmatprep.subr.mxu0 0.0
    %1526 = vmatpush1.msra.mxu0 0.0
    %1527 = vmatprep.subr.mxu0 0.0
    %1528 = vmatpush1.msra.mxu0 0.0
    %1529 = vmatprep.subr.mxu0 0.0
    %1530 = vmatpush1.msra.mxu0 0.0
    %1531 = vmatprep.subr.mxu0 0.0
    %1532 = vmatpush1.msra.mxu0 0.0
    %1533 = vmatprep.subr.mxu0 0.0
    %1534 = vmatpush1.msra.mxu0 0.0
    %1535 = vmatprep.mubr.f32.mxu0 0.0
    %1536 = vmatmul.mubr.f32.gmra.mrb[0].mxu0 %v1469
    %v1537 = vpop.f32.mrb[0].mxu0
    %v1538 = vadd.f32 0.0, %v1537
    %v1539 = vpop.f32.mrb[0].mxu0
    %1540 = vdwg.mxu0
    %v1541 = vadd.f32 %v1400, %v1538
    %v1542 = vld [vmem:[%s10] sm:$0x1]
    %v1544 = vlaneseq
    %v1545 = vshrl.u32 %v1544, 7
    %v1546 = vsub.s32 0, %v1545
    %v1547 = vrot.slane %v1542, %v1546
    %v1549 = vadd.f32 %v1541, %v1547
    %v1550 = vld [vmem:[%s11] sm:$0xff]
    %v1551 = vld [vmem:[%s11 + $0x8] sm:$0xff]
    %v1552 = vld [vmem:[%s11 + $0x10] sm:$0xff]
    %v1553 = vld [vmem:[%s11 + $0x18] sm:$0xff]
    %v1555 = vsel %vm220, %v1549, 0
    %1557 = vmatprep.subr.mxu0 0.0
    %1558 = vmatpush1.msra.mxu0 %v1550
    %1559 = vmatprep.subr.mxu0 0.0
    %1560 = vmatpush1.msra.mxu0 %v1551
    %1561 = vmatprep.subr.mxu0 0.0
    %1562 = vmatpush1.msra.mxu0 %v1552
    %1563 = vmatprep.subr.mxu0 0.0
    %1564 = vmatpush1.msra.mxu0 %v1553
    %1565 = vmatprep.subr.mxu0 0.0
    %1566 = vmatpush1.msra.mxu0 0.0
    %1567 = vmatprep.subr.mxu0 0.0
    %1568 = vmatpush1.msra.mxu0 0.0
    %1569 = vmatprep.subr.mxu0 0.0
    %1570 = vmatpush1.msra.mxu0 0.0
    %1571 = vmatprep.subr.mxu0 0.0
    %1572 = vmatpush1.msra.mxu0 0.0
    %1573 = vmatprep.subr.mxu0 0.0
    %1574 = vmatpush1.msra.mxu0 0.0
    %1575 = vmatprep.subr.mxu0 0.0
    %1576 = vmatpush1.msra.mxu0 0.0
    %1577 = vmatprep.subr.mxu0 0.0
    %1578 = vmatpush1.msra.mxu0 0.0
    %1579 = vmatprep.subr.mxu0 0.0
    %1580 = vmatpush1.msra.mxu0 0.0
    %1581 = vmatprep.subr.mxu0 0.0
    %1582 = vmatpush1.msra.mxu0 0.0
    %1583 = vmatprep.subr.mxu0 0.0
    %1584 = vmatpush1.msra.mxu0 0.0
    %1585 = vmatprep.subr.mxu0 0.0
    %1586 = vmatpush1.msra.mxu0 0.0
    %1587 = vmatprep.subr.mxu0 0.0
    %1588 = vmatpush1.msra.mxu0 0.0
    %1589 = vmatprep.subr.mxu0 0.0
    %1590 = vmatpush1.msra.mxu0 0.0
    %1591 = vmatprep.subr.mxu0 0.0
    %1592 = vmatpush1.msra.mxu0 0.0
    %1593 = vmatprep.subr.mxu0 0.0
    %1594 = vmatpush1.msra.mxu0 0.0
    %1595 = vmatprep.subr.mxu0 0.0
    %1596 = vmatpush1.msra.mxu0 0.0
    %1597 = vmatprep.subr.mxu0 0.0
    %1598 = vmatpush1.msra.mxu0 0.0
    %1599 = vmatprep.subr.mxu0 0.0
    %1600 = vmatpush1.msra.mxu0 0.0
    %1601 = vmatprep.subr.mxu0 0.0
    %1602 = vmatpush1.msra.mxu0 0.0
    %1603 = vmatprep.subr.mxu0 0.0
    %1604 = vmatpush1.msra.mxu0 0.0
    %1605 = vmatprep.subr.mxu0 0.0
    %1606 = vmatpush1.msra.mxu0 0.0
    %1607 = vmatprep.subr.mxu0 0.0
    %1608 = vmatpush1.msra.mxu0 0.0
    %1609 = vmatprep.subr.mxu0 0.0
    %1610 = vmatpush1.msra.mxu0 0.0
    %1611 = vmatprep.subr.mxu0 0.0
    %1612 = vmatpush1.msra.mxu0 0.0
    %1613 = vmatprep.subr.mxu0 0.0
    %1614 = vmatpush1.msra.mxu0 0.0
    %1615 = vmatprep.subr.mxu0 0.0
    %1616 = vmatpush1.msra.mxu0 0.0
    %1617 = vmatprep.subr.mxu0 0.0
    %1618 = vmatpush1.msra.mxu0 0.0
    %1619 = vmatprep.subr.mxu0 0.0
    %1620 = vmatpush1.msra.mxu0 0.0
    %1621 = vmatprep.mubr.f32.mxu0 0.0
    %1622 = vmatmul.mubr.f32.gmra.mrb[0].mxu0 %v1555
    %v1623 = vpop.f32.mrb[0].mxu0
    %v1624 = vadd.f32 0.0, %v1623
    %v1625 = vpop.f32.mrb[0].mxu0
    %1626 = vdwg.mxu0
    %v1627 = vld [vmem:[%s12] sm:$0xff]
    %v1628 = vld [vmem:[%s12 + $0x8] sm:$0xff]
    %v1629 = vld [vmem:[%s12 + $0x10] sm:$0xff]
    %v1630 = vld [vmem:[%s12 + $0x18] sm:$0xff]
    %1631 = vmatprep.subr.mxu0 0.0
    %1632 = vmatpush1.msra.mxu0 %v1627
    %1633 = vmatprep.subr.mxu0 0.0
    %1634 = vmatpush1.msra.mxu0 %v1628
    %1635 = vmatprep.subr.mxu0 0.0
    %1636 = vmatpush1.msra.mxu0 %v1629
    %1637 = vmatprep.subr.mxu0 0.0
    %1638 = vmatpush1.msra.mxu0 %v1630
    %1639 = vmatprep.subr.mxu0 0.0
    %1640 = vmatpush1.msra.mxu0 0.0
    %1641 = vmatprep.subr.mxu0 0.0
    %1642 = vmatpush1.msra.mxu0 0.0
    %1643 = vmatprep.subr.mxu0 0.0
    %1644 = vmatpush1.msra.mxu0 0.0
    %1645 = vmatprep.subr.mxu0 0.0
    %1646 = vmatpush1.msra.mxu0 0.0
    %1647 = vmatprep.subr.mxu0 0.0
    %1648 = vmatpush1.msra.mxu0 0.0
    %1649 = vmatprep.subr.mxu0 0.0
    %1650 = vmatpush1.msra.mxu0 0.0
    %1651 = vmatprep.subr.mxu0 0.0
    %1652 = vmatpush1.msra.mxu0 0.0
    %1653 = vmatprep.subr.mxu0 0.0
    %1654 = vmatpush1.msra.mxu0 0.0
    %1655 = vmatprep.subr.mxu0 0.0
    %1656 = vmatpush1.msra.mxu0 0.0
    %1657 = vmatprep.subr.mxu0 0.0
    %1658 = vmatpush1.msra.mxu0 0.0
    %1659 = vmatprep.subr.mxu0 0.0
    %1660 = vmatpush1.msra.mxu0 0.0
    %1661 = vmatprep.subr.mxu0 0.0
    %1662 = vmatpush1.msra.mxu0 0.0
    %1663 = vmatprep.subr.mxu0 0.0
    %1664 = vmatpush1.msra.mxu0 0.0
    %1665 = vmatprep.subr.mxu0 0.0
    %1666 = vmatpush1.msra.mxu0 0.0
    %1667 = vmatprep.subr.mxu0 0.0
    %1668 = vmatpush1.msra.mxu0 0.0
    %1669 = vmatprep.subr.mxu0 0.0
    %1670 = vmatpush1.msra.mxu0 0.0
    %1671 = vmatprep.subr.mxu0 0.0
    %1672 = vmatpush1.msra.mxu0 0.0
    %1673 = vmatprep.subr.mxu0 0.0
    %1674 = vmatpush1.msra.mxu0 0.0
    %1675 = vmatprep.subr.mxu0 0.0
    %1676 = vmatpush1.msra.mxu0 0.0
    %1677 = vmatprep.subr.mxu0 0.0
    %1678 = vmatpush1.msra.mxu0 0.0
    %1679 = vmatprep.subr.mxu0 0.0
    %1680 = vmatpush1.msra.mxu0 0.0
    %1681 = vmatprep.subr.mxu0 0.0
    %1682 = vmatpush1.msra.mxu0 0.0
    %1683 = vmatprep.subr.mxu0 0.0
    %1684 = vmatpush1.msra.mxu0 0.0
    %1685 = vmatprep.subr.mxu0 0.0
    %1686 = vmatpush1.msra.mxu0 0.0
    %1687 = vmatprep.subr.mxu0 0.0
    %1688 = vmatpush1.msra.mxu0 0.0
    %1689 = vmatprep.subr.mxu0 0.0
    %1690 = vmatpush1.msra.mxu0 0.0
    %1691 = vmatprep.subr.mxu0 0.0
    %1692 = vmatpush1.msra.mxu0 0.0
    %1693 = vmatprep.subr.mxu0 0.0
    %1694 = vmatpush1.msra.mxu0 0.0
    %1695 = vmatprep.mubr.f32.mxu0 0.0
    %1696 = vmatmul.mubr.f32.gmra.mrb[0].mxu0 %v1555
    %v1697 = vpop.f32.mrb[0].mxu0
    %v1698 = vadd.f32 0.0, %v1697
    %v1699 = vpop.f32.mrb[0].mxu0
    %1700 = vdwg.mxu0
    %v1701 = vld [vmem:[%s1] sm:$0x3]
    %v1702 = vmul.f32 %v1698, 0.5
    %v1703 = vmul.f32 %v1702, 1.442695
    %v1704 = vpow.pop %v1703
    %v1705 = vmul.f32 %v1701, %v1704
    %v1706 = vadd.f32 %v1624, %v1705
    %vm1707 = vcmask 123904
    %1708 = vst.msk [vmem:[#allocation2] sm:$0x3] %vm1707, %v1624
    %1709 = vst.msk [vmem:[#allocation4] sm:$0x3] %vm1707, %v1698
    %1710 = vst.msk [vmem:[#allocation6] sm:$0x3] %vm1707, %v1706
    %v1711 = vld [vmem:[%s13] sm:$0xff]
    %v1712 = vld [vmem:[%s14] sm:$0xff]
    %v1713 = vld [vmem:[%s14 + $0x8] sm:$0xff]
    %v1714 = vpack.c.bf16 %v1706, %v1706
    %v1715 = vpack.c.bf16 %v1713, %v1712
    %v1717 = vsel %vm681, %v1714, 0
    %1719 = vmatprep.subr.bf16.mxu0 0
    %1720 = vmatpush1.bf16.msra.mxu0 %v1715
    %1721 = vmatprep.subr.bf16.mxu0 0
    %1722 = vmatpush1.bf16.msra.mxu0 0
    %1723 = vmatprep.subr.bf16.mxu0 0
    %1724 = vmatpush1.bf16.msra.mxu0 0
    %1725 = vmatprep.subr.bf16.mxu0 0
    %1726 = vmatpush1.bf16.msra.mxu0 0
    %1727 = vmatprep.subr.bf16.mxu0 0
    %1728 = vmatpush1.bf16.msra.mxu0 0
    %1729 = vmatprep.subr.bf16.mxu0 0
    %1730 = vmatpush1.bf16.msra.mxu0 0
    %1731 = vmatprep.subr.bf16.mxu0 0
    %1732 = vmatpush1.bf16.msra.mxu0 0
    %1733 = vmatprep.subr.bf16.mxu0 0
    %1734 = vmatpush1.bf16.msra.mxu0 0
    %1735 = vmatprep.subr.bf16.mxu0 0
    %1736 = vmatpush1.bf16.msra.mxu0 0
    %1737 = vmatprep.subr.bf16.mxu0 0
    %1738 = vmatpush1.bf16.msra.mxu0 0
    %1739 = vmatprep.subr.bf16.mxu0 0
    %1740 = vmatpush1.bf16.msra.mxu0 0
    %1741 = vmatprep.subr.bf16.mxu0 0
    %1742 = vmatpush1.bf16.msra.mxu0 0
    %1743 = vmatprep.subr.bf16.mxu0 0
    %1744 = vmatpush1.bf16.msra.mxu0 0
    %1745 = vmatprep.subr.bf16.mxu0 0
    %1746 = vmatpush1.bf16.msra.mxu0 0
    %1747 = vmatprep.subr.bf16.mxu0 0
    %1748 = vmatpush1.bf16.msra.mxu0 0
    %1749 = vmatprep.subr.bf16.mxu0 0
    %1750 = vmatpush1.bf16.msra.mxu0 0
    %1751 = vmatprep.mubr.bf16.mxu0 0
    %1752 = vmatmul.mubr.bf16.gmra.mrb[0].mxu0 %v1717
    %v1753 = vpop.f32.mrb[0].mxu0
    %v1754 = vadd.f32 0.0, %v1753
    %v1755 = vpop.f32.mrb[0].mxu0
    %v1756 = vpop.f32.mrb[0].mxu0
    %v1757 = vpop.f32.mrb[0].mxu0
    %1758 = vdwg.mxu0
    %s1759 = scalar_lea.vmem %s13, 8
    %v1760 = vld [vmem:[%s1759] sm:$0xff]
    %s1761 = scalar_lea.vmem %s14, 16
    %v1762 = vld [vmem:[%s1761] sm:$0xff]
    %v1763 = vld [vmem:[%s1761 + $0x8] sm:$0xff]
    %v1764 = vpack.c.bf16 %v1763, %v1762
    %1765 = vmatprep.subr.bf16.mxu0 0
    %1766 = vmatpush1.bf16.msra.mxu0 %v1764
    %1767 = vmatprep.subr.bf16.mxu0 0
    %1768 = vmatpush1.bf16.msra.mxu0 0
    %1769 = vmatprep.subr.bf16.mxu0 0
    %1770 = vmatpush1.bf16.msra.mxu0 0
    %1771 = vmatprep.subr.bf16.mxu0 0
    %1772 = vmatpush1.bf16.msra.mxu0 0
    %1773 = vmatprep.subr.bf16.mxu0 0
    %1774 = vmatpush1.bf16.msra.mxu0 0
    %1775 = vmatprep.subr.bf16.mxu0 0
    %1776 = vmatpush1.bf16.msra.mxu0 0
    %1777 = vmatprep.subr.bf16.mxu0 0
    %1778 = vmatpush1.bf16.msra.mxu0 0
    %1779 = vmatprep.subr.bf16.mxu0 0
    %1780 = vmatpush1.bf16.msra.mxu0 0
    %1781 = vmatprep.subr.bf16.mxu0 0
    %1782 = vmatpush1.bf16.msra.mxu0 0
    %1783 = vmatprep.subr.bf16.mxu0 0
    %1784 = vmatpush1.bf16.msra.mxu0 0
    %1785 = vmatprep.subr.bf16.mxu0 0
    %1786 = vmatpush1.bf16.msra.mxu0 0
    %1787 = vmatprep.subr.bf16.mxu0 0
    %1788 = vmatpush1.bf16.msra.mxu0 0
    %1789 = vmatprep.subr.bf16.mxu0 0
    %1790 = vmatpush1.bf16.msra.mxu0 0
    %1791 = vmatprep.subr.bf16.mxu0 0
    %1792 = vmatpush1.bf16.msra.mxu0 0
    %1793 = vmatprep.subr.bf16.mxu0 0
    %1794 = vmatpush1.bf16.msra.mxu0 0
    %1795 = vmatprep.subr.bf16.mxu0 0
    %1796 = vmatpush1.bf16.msra.mxu0 0
    %1797 = vmatprep.mubr.bf16.mxu0 0
    %1798 = vmatmul.mubr.bf16.gmra.mrb[0].mxu0 %v1717
    %v1799 = vpop.f32.mrb[0].mxu0
    %v1800 = vadd.f32 0.0, %v1799
    %v1801 = vpop.f32.mrb[0].mxu0
    %v1802 = vpop.f32.mrb[0].mxu0
    %v1803 = vpop.f32.mrb[0].mxu0
    %1804 = vdwg.mxu0
    %vm1805 = vcmask 15360
    %v1807 = vsel %vm1805, %v1760, 0
    %vm1809 = vcmask 1041408
    %v1811 = vsel %vm1809, %v1800, 0
    %1813 = vmatprep.subr.mxu0 0.0
    %1814 = vmatpush1.msra.mxu0 %v1811
    %1815 = vmatprep.subr.mxu0 0.0
    %1816 = vmatpush1.msra.mxu0 0.0
    %1817 = vmatprep.subr.mxu0 0.0
    %1818 = vmatpush1.msra.mxu0 0.0
    %1819 = vmatprep.subr.mxu0 0.0
    %1820 = vmatpush1.msra.mxu0 0.0
    %1821 = vmatprep.subr.mxu0 0.0
    %1822 = vmatpush1.msra.mxu0 0.0
    %1823 = vmatprep.subr.mxu0 0.0
    %1824 = vmatpush1.msra.mxu0 0.0
    %1825 = vmatprep.subr.mxu0 0.0
    %1826 = vmatpush1.msra.mxu0 0.0
    %1827 = vmatprep.subr.mxu0 0.0
    %1828 = vmatpush1.msra.mxu0 0.0
    %1829 = vmatprep.subr.mxu0 0.0
    %1830 = vmatpush1.msra.mxu0 0.0
    %1831 = vmatprep.subr.mxu0 0.0
    %1832 = vmatpush1.msra.mxu0 0.0
    %1833 = vmatprep.subr.mxu0 0.0
    %1834 = vmatpush1.msra.mxu0 0.0
    %1835 = vmatprep.subr.mxu0 0.0
    %1836 = vmatpush1.msra.mxu0 0.0
    %1837 = vmatprep.subr.mxu0 0.0
    %1838 = vmatpush1.msra.mxu0 0.0
    %1839 = vmatprep.subr.mxu0 0.0
    %1840 = vmatpush1.msra.mxu0 0.0
    %1841 = vmatprep.subr.mxu0 0.0
    %1842 = vmatpush1.msra.mxu0 0.0
    %1843 = vmatprep.subr.mxu0 0.0
    %1844 = vmatpush1.msra.mxu0 0.0
    %1845 = vmatprep.subr.mxu0 0.0
    %1846 = vmatpush1.msra.mxu0 0.0
    %1847 = vmatprep.subr.mxu0 0.0
    %1848 = vmatpush1.msra.mxu0 0.0
    %1849 = vmatprep.subr.mxu0 0.0
    %1850 = vmatpush1.msra.mxu0 0.0
    %1851 = vmatprep.subr.mxu0 0.0
    %1852 = vmatpush1.msra.mxu0 0.0
    %1853 = vmatprep.subr.mxu0 0.0
    %1854 = vmatpush1.msra.mxu0 0.0
    %1855 = vmatprep.subr.mxu0 0.0
    %1856 = vmatpush1.msra.mxu0 0.0
    %1857 = vmatprep.subr.mxu0 0.0
    %1858 = vmatpush1.msra.mxu0 0.0
    %1859 = vmatprep.subr.mxu0 0.0
    %1860 = vmatpush1.msra.mxu0 0.0
    %1861 = vmatprep.subr.mxu0 0.0
    %1862 = vmatpush1.msra.mxu0 0.0
    %1863 = vmatprep.subr.mxu0 0.0
    %1864 = vmatpush1.msra.mxu0 0.0
    %1865 = vmatprep.subr.mxu0 0.0
    %1866 = vmatpush1.msra.mxu0 0.0
    %1867 = vmatprep.subr.mxu0 0.0
    %1868 = vmatpush1.msra.mxu0 0.0
    %1869 = vmatprep.subr.mxu0 0.0
    %1870 = vmatpush1.msra.mxu0 0.0
    %1871 = vmatprep.subr.mxu0 0.0
    %1872 = vmatpush1.msra.mxu0 0.0
    %1873 = vmatprep.subr.mxu0 0.0
    %1874 = vmatpush1.msra.mxu0 0.0
    %1875 = vmatprep.subr.mxu0 0.0
    %1876 = vmatpush1.msra.mxu0 0.0
    %1877 = vmatprep.mubr.f32.mxu0 0.0
    %1878 = vmatmul.mubr.f32.gmra.mrb[0].mxu0 %v1807
    %v1879 = vpop.f32.mrb[0].mxu0
    %v1880 = vadd.f32 0.0, %v1879
    %v1881 = vpop.f32.mrb[0].mxu0
    %1882 = vdwg.mxu0
    %v1884 = vsel %vm1805, %v1711, 0
    %v1887 = vsel %vm1809, %v1754, 0
    %1889 = vmatprep.subr.mxu0 0.0
    %1890 = vmatpush1.msra.mxu0 %v1887
    %1891 = vmatprep.subr.mxu0 0.0
    %1892 = vmatpush1.msra.mxu0 0.0
    %1893 = vmatprep.subr.mxu0 0.0
    %1894 = vmatpush1.msra.mxu0 0.0
    %1895 = vmatprep.subr.mxu0 0.0
    %1896 = vmatpush1.msra.mxu0 0.0
    %1897 = vmatprep.subr.mxu0 0.0
    %1898 = vmatpush1.msra.mxu0 0.0
    %1899 = vmatprep.subr.mxu0 0.0
    %1900 = vmatpush1.msra.mxu0 0.0
    %1901 = vmatprep.subr.mxu0 0.0
    %1902 = vmatpush1.msra.mxu0 0.0
    %1903 = vmatprep.subr.mxu0 0.0
    %1904 = vmatpush1.msra.mxu0 0.0
    %1905 = vmatprep.subr.mxu0 0.0
    %1906 = vmatpush1.msra.mxu0 0.0
    %1907 = vmatprep.subr.mxu0 0.0
    %1908 = vmatpush1.msra.mxu0 0.0
    %1909 = vmatprep.subr.mxu0 0.0
    %1910 = vmatpush1.msra.mxu0 0.0
    %1911 = vmatprep.subr.mxu0 0.0
    %1912 = vmatpush1.msra.mxu0 0.0
    %1913 = vmatprep.subr.mxu0 0.0
    %1914 = vmatpush1.msra.mxu0 0.0
    %1915 = vmatprep.subr.mxu0 0.0
    %1916 = vmatpush1.msra.mxu0 0.0
    %1917 = vmatprep.subr.mxu0 0.0
    %1918 = vmatpush1.msra.mxu0 0.0
    %1919 = vmatprep.subr.mxu0 0.0
    %1920 = vmatpush1.msra.mxu0 0.0
    %1921 = vmatprep.subr.mxu0 0.0
    %1922 = vmatpush1.msra.mxu0 0.0
    %1923 = vmatprep.subr.mxu0 0.0
    %1924 = vmatpush1.msra.mxu0 0.0
    %1925 = vmatprep.subr.mxu0 0.0
    %1926 = vmatpush1.msra.mxu0 0.0
    %1927 = vmatprep.subr.mxu0 0.0
    %1928 = vmatpush1.msra.mxu0 0.0
    %1929 = vmatprep.subr.mxu0 0.0
    %1930 = vmatpush1.msra.mxu0 0.0
    %1931 = vmatprep.subr.mxu0 0.0
    %1932 = vmatpush1.msra.mxu0 0.0
    %1933 = vmatprep.subr.mxu0 0.0
    %1934 = vmatpush1.msra.mxu0 0.0
    %1935 = vmatprep.subr.mxu0 0.0
    %1936 = vmatpush1.msra.mxu0 0.0
    %1937 = vmatprep.subr.mxu0 0.0
    %1938 = vmatpush1.msra.mxu0 0.0
    %1939 = vmatprep.subr.mxu0 0.0
    %1940 = vmatpush1.msra.mxu0 0.0
    %1941 = vmatprep.subr.mxu0 0.0
    %1942 = vmatpush1.msra.mxu0 0.0
    %1943 = vmatprep.subr.mxu0 0.0
    %1944 = vmatpush1.msra.mxu0 0.0
    %1945 = vmatprep.subr.mxu0 0.0
    %1946 = vmatpush1.msra.mxu0 0.0
    %1947 = vmatprep.subr.mxu0 0.0
    %1948 = vmatpush1.msra.mxu0 0.0
    %1949 = vmatprep.subr.mxu0 0.0
    %1950 = vmatpush1.msra.mxu0 0.0
    %1951 = vmatprep.subr.mxu0 0.0
    %1952 = vmatpush1.msra.mxu0 0.0
    %1953 = vmatprep.mubr.f32.mxu0 0.0
    %1954 = vmatmul.mubr.f32.gmra.mrb[0].mxu0 %v1884
    %v1955 = vpop.f32.mrb[0].mxu0
    %v1956 = vadd.f32 %v1880, %v1955
    %v1957 = vpop.f32.mrb[0].mxu0
    %1958 = vdwg.mxu0
    %s1959 = scalar_lea.vmem %s13, 16
    %v1960 = vld [vmem:[%s1959] sm:$0xff]
    %s1961 = scalar_lea.vmem %s14, 32
    %v1962 = vld [vmem:[%s1961] sm:$0xff]
    %v1963 = vld [vmem:[%s1961 + $0x8] sm:$0xff]
    %v1964 = vpack.c.bf16 %v1963, %v1962
    %1965 = vmatprep.subr.bf16.mxu0 0
    %1966 = vmatpush1.bf16.msra.mxu0 %v1964
    %1967 = vmatprep.subr.bf16.mxu0 0
    %1968 = vmatpush1.bf16.msra.mxu0 0
    %1969 = vmatprep.subr.bf16.mxu0 0
    %1970 = vmatpush1.bf16.msra.mxu0 0
    %1971 = vmatprep.subr.bf16.mxu0 0
    %1972 = vmatpush1.bf16.msra.mxu0 0
    %1973 = vmatprep.subr.bf16.mxu0 0
    %1974 = vmatpush1.bf16.msra.mxu0 0
    %1975 = vmatprep.subr.bf16.mxu0 0
    %1976 = vmatpush1.bf16.msra.mxu0 0
    %1977 = vmatprep.subr.bf16.mxu0 0
    %1978 = vmatpush1.bf16.msra.mxu0 0
    %1979 = vmatprep.subr.bf16.mxu0 0
    %1980 = vmatpush1.bf16.msra.mxu0 0
    %1981 = vmatprep.subr.bf16.mxu0 0
    %1982 = vmatpush1.bf16.msra.mxu0 0
    %1983 = vmatprep.subr.bf16.mxu0 0
    %1984 = vmatpush1.bf16.msra.mxu0 0
    %1985 = vmatprep.subr.bf16.mxu0 0
    %1986 = vmatpush1.bf16.msra.mxu0 0
    %1987 = vmatprep.subr.bf16.mxu0 0
    %1988 = vmatpush1.bf16.msra.mxu0 0
    %1989 = vmatprep.subr.bf16.mxu0 0
    %1990 = vmatpush1.bf16.msra.mxu0 0
    %1991 = vmatprep.subr.bf16.mxu0 0
    %1992 = vmatpush1.bf16.msra.mxu0 0
    %1993 = vmatprep.subr.bf16.mxu0 0
    %1994 = vmatpush1.bf16.msra.mxu0 0
    %1995 = vmatprep.subr.bf16.mxu0 0
    %1996 = vmatpush1.bf16.msra.mxu0 0
    %1997 = vmatprep.mubr.bf16.mxu0 0
    %1998 = vmatmul.mubr.bf16.gmra.mrb[0].mxu0 %v1717
    %v1999 = vpop.f32.mrb[0].mxu0
    %v2000 = vadd.f32 0.0, %v1999
    %v2001 = vpop.f32.mrb[0].mxu0
    %v2002 = vpop.f32.mrb[0].mxu0
    %v2003 = vpop.f32.mrb[0].mxu0
    %2004 = vdwg.mxu0
    %v2006 = vsel %vm1805, %v1960, 0
    %v2009 = vsel %vm1809, %v2000, 0
    %2011 = vmatprep.subr.mxu0 0.0
    %2012 = vmatpush1.msra.mxu0 %v2009
    %2013 = vmatprep.subr.mxu0 0.0
    %2014 = vmatpush1.msra.mxu0 0.0
    %2015 = vmatprep.subr.mxu0 0.0
    %2016 = vmatpush1.msra.mxu0 0.0
    %2017 = vmatprep.subr.mxu0 0.0
    %2018 = vmatpush1.msra.mxu0 0.0
    %2019 = vmatprep.subr.mxu0 0.0
    %2020 = vmatpush1.msra.mxu0 0.0
    %2021 = vmatprep.subr.mxu0 0.0
    %2022 = vmatpush1.msra.mxu0 0.0
    %2023 = vmatprep.subr.mxu0 0.0
    %2024 = vmatpush1.msra.mxu0 0.0
    %2025 = vmatprep.subr.mxu0 0.0
    %2026 = vmatpush1.msra.mxu0 0.0
    %2027 = vmatprep.subr.mxu0 0.0
    %2028 = vmatpush1.msra.mxu0 0.0
    %2029 = vmatprep.subr.mxu0 0.0
    %2030 = vmatpush1.msra.mxu0 0.0
    %2031 = vmatprep.subr.mxu0 0.0
    %2032 = vmatpush1.msra.mxu0 0.0
    %2033 = vmatprep.subr.mxu0 0.0
    %2034 = vmatpush1.msra.mxu0 0.0
    %2035 = vmatprep.subr.mxu0 0.0
    %2036 = vmatpush1.msra.mxu0 0.0
    %2037 = vmatprep.subr.mxu0 0.0
    %2038 = vmatpush1.msra.mxu0 0.0
    %2039 = vmatprep.subr.mxu0 0.0
    %2040 = vmatpush1.msra.mxu0 0.0
    %2041 = vmatprep.subr.mxu0 0.0
    %2042 = vmatpush1.msra.mxu0 0.0
    %2043 = vmatprep.subr.mxu0 0.0
    %2044 = vmatpush1.msra.mxu0 0.0
    %2045 = vmatprep.subr.mxu0 0.0
    %2046 = vmatpush1.msra.mxu0 0.0
    %2047 = vmatprep.subr.mxu0 0.0
    %2048 = vmatpush1.msra.mxu0 0.0
    %2049 = vmatprep.subr.mxu0 0.0
    %2050 = vmatpush1.msra.mxu0 0.0
    %2051 = vmatprep.subr.mxu0 0.0
    %2052 = vmatpush1.msra.mxu0 0.0
    %2053 = vmatprep.subr.mxu0 0.0
    %2054 = vmatpush1.msra.mxu0 0.0
    %2055 = vmatprep.subr.mxu0 0.0
    %2056 = vmatpush1.msra.mxu0 0.0
    %2057 = vmatprep.subr.mxu0 0.0
    %2058 = vmatpush1.msra.mxu0 0.0
    %2059 = vmatprep.subr.mxu0 0.0
    %2060 = vmatpush1.msra.mxu0 0.0
    %2061 = vmatprep.subr.mxu0 0.0
    %2062 = vmatpush1.msra.mxu0 0.0
    %2063 = vmatprep.subr.mxu0 0.0
    %2064 = vmatpush1.msra.mxu0 0.0
    %2065 = vmatprep.subr.mxu0 0.0
    %2066 = vmatpush1.msra.mxu0 0.0
    %2067 = vmatprep.subr.mxu0 0.0
    %2068 = vmatpush1.msra.mxu0 0.0
    %2069 = vmatprep.subr.mxu0 0.0
    %2070 = vmatpush1.msra.mxu0 0.0
    %2071 = vmatprep.subr.mxu0 0.0
    %2072 = vmatpush1.msra.mxu0 0.0
    %2073 = vmatprep.subr.mxu0 0.0
    %2074 = vmatpush1.msra.mxu0 0.0
    %2075 = vmatprep.mubr.f32.mxu0 0.0
    %2076 = vmatmul.mubr.f32.gmra.mrb[0].mxu0 %v2006
    %v2077 = vpop.f32.mrb[0].mxu0
    %v2078 = vadd.f32 0.0, %v2077
    %v2079 = vpop.f32.mrb[0].mxu0
    %2080 = vdwg.mxu0
    %v2081 = vadd.f32 %v1956, %v2078
    %s2082 = scalar_lea.vmem %s13, 24
    %v2083 = vld [vmem:[%s2082] sm:$0xff]
    %s2084 = scalar_lea.vmem %s14, 48
    %v2085 = vld [vmem:[%s2084] sm:$0xff]
    %v2086 = vld [vmem:[%s2084 + $0x8] sm:$0xff]
    %v2087 = vpack.c.bf16 %v2086, %v2085
    %2088 = vmatprep.subr.bf16.mxu0 0
    %2089 = vmatpush1.bf16.msra.mxu0 %v2087
    %2090 = vmatprep.subr.bf16.mxu0 0
    %2091 = vmatpush1.bf16.msra.mxu0 0
    %2092 = vmatprep.subr.bf16.mxu0 0
    %2093 = vmatpush1.bf16.msra.mxu0 0
    %2094 = vmatprep.subr.bf16.mxu0 0
    %2095 = vmatpush1.bf16.msra.mxu0 0
    %2096 = vmatprep.subr.bf16.mxu0 0
    %2097 = vmatpush1.bf16.msra.mxu0 0
    %2098 = vmatprep.subr.bf16.mxu0 0
    %2099 = vmatpush1.bf16.msra.mxu0 0
    %2100 = vmatprep.subr.bf16.mxu0 0
    %2101 = vmatpush1.bf16.msra.mxu0 0
    %2102 = vmatprep.subr.bf16.mxu0 0
    %2103 = vmatpush1.bf16.msra.mxu0 0
    %2104 = vmatprep.subr.bf16.mxu0 0
    %2105 = vmatpush1.bf16.msra.mxu0 0
    %2106 = vmatprep.subr.bf16.mxu0 0
    %2107 = vmatpush1.bf16.msra.mxu0 0
    %2108 = vmatprep.subr.bf16.mxu0 0
    %2109 = vmatpush1.bf16.msra.mxu0 0
    %2110 = vmatprep.subr.bf16.mxu0 0
    %2111 = vmatpush1.bf16.msra.mxu0 0
    %2112 = vmatprep.subr.bf16.mxu0 0
    %2113 = vmatpush1.bf16.msra.mxu0 0
    %2114 = vmatprep.subr.bf16.mxu0 0
    %2115 = vmatpush1.bf16.msra.mxu0 0
    %2116 = vmatprep.subr.bf16.mxu0 0
    %2117 = vmatpush1.bf16.msra.mxu0 0
    %2118 = vmatprep.subr.bf16.mxu0 0
    %2119 = vmatpush1.bf16.msra.mxu0 0
    %2120 = vmatprep.mubr.bf16.mxu0 0
    %2121 = vmatmul.mubr.bf16.gmra.mrb[0].mxu0 %v1717
    %v2122 = vpop.f32.mrb[0].mxu0
    %v2123 = vadd.f32 0.0, %v2122
    %v2124 = vpop.f32.mrb[0].mxu0
    %v2125 = vpop.f32.mrb[0].mxu0
    %v2126 = vpop.f32.mrb[0].mxu0
    %2127 = vdwg.mxu0
    %v2129 = vsel %vm1805, %v2083, 0
    %v2132 = vsel %vm1809, %v2123, 0
    %2134 = vmatprep.subr.mxu0 0.0
    %2135 = vmatpush1.msra.mxu0 %v2132
    %2136 = vmatprep.subr.mxu0 0.0
    %2137 = vmatpush1.msra.mxu0 0.0
    %2138 = vmatprep.subr.mxu0 0.0
    %2139 = vmatpush1.msra.mxu0 0.0
    %2140 = vmatprep.subr.mxu0 0.0
    %2141 = vmatpush1.msra.mxu0 0.0
    %2142 = vmatprep.subr.mxu0 0.0
    %2143 = vmatpush1.msra.mxu0 0.0
    %2144 = vmatprep.subr.mxu0 0.0
    %2145 = vmatpush1.msra.mxu0 0.0
    %2146 = vmatprep.subr.mxu0 0.0
    %2147 = vmatpush1.msra.mxu0 0.0
    %2148 = vmatprep.subr.mxu0 0.0
    %2149 = vmatpush1.msra.mxu0 0.0
    %2150 = vmatprep.subr.mxu0 0.0
    %2151 = vmatpush1.msra.mxu0 0.0
    %2152 = vmatprep.subr.mxu0 0.0
    %2153 = vmatpush1.msra.mxu0 0.0
    %2154 = vmatprep.subr.mxu0 0.0
    %2155 = vmatpush1.msra.mxu0 0.0
    %2156 = vmatprep.subr.mxu0 0.0
    %2157 = vmatpush1.msra.mxu0 0.0
    %2158 = vmatprep.subr.mxu0 0.0
    %2159 = vmatpush1.msra.mxu0 0.0
    %2160 = vmatprep.subr.mxu0 0.0
    %2161 = vmatpush1.msra.mxu0 0.0
    %2162 = vmatprep.subr.mxu0 0.0
    %2163 = vmatpush1.msra.mxu0 0.0
    %2164 = vmatprep.subr.mxu0 0.0
    %2165 = vmatpush1.msra.mxu0 0.0
    %2166 = vmatprep.subr.mxu0 0.0
    %2167 = vmatpush1.msra.mxu0 0.0
    %2168 = vmatprep.subr.mxu0 0.0
    %2169 = vmatpush1.msra.mxu0 0.0
    %2170 = vmatprep.subr.mxu0 0.0
    %2171 = vmatpush1.msra.mxu0 0.0
    %2172 = vmatprep.subr.mxu0 0.0
    %2173 = vmatpush1.msra.mxu0 0.0
    %2174 = vmatprep.subr.mxu0 0.0
    %2175 = vmatpush1.msra.mxu0 0.0
    %2176 = vmatprep.subr.mxu0 0.0
    %2177 = vmatpush1.msra.mxu0 0.0
    %2178 = vmatprep.subr.mxu0 0.0
    %2179 = vmatpush1.msra.mxu0 0.0
    %2180 = vmatprep.subr.mxu0 0.0
    %2181 = vmatpush1.msra.mxu0 0.0
    %2182 = vmatprep.subr.mxu0 0.0
    %2183 = vmatpush1.msra.mxu0 0.0
    %2184 = vmatprep.subr.mxu0 0.0
    %2185 = vmatpush1.msra.mxu0 0.0
    %2186 = vmatprep.subr.mxu0 0.0
    %2187 = vmatpush1.msra.mxu0 0.0
    %2188 = vmatprep.subr.mxu0 0.0
    %2189 = vmatpush1.msra.mxu0 0.0
    %2190 = vmatprep.subr.mxu0 0.0
    %2191 = vmatpush1.msra.mxu0 0.0
    %2192 = vmatprep.subr.mxu0 0.0
    %2193 = vmatpush1.msra.mxu0 0.0
    %2194 = vmatprep.subr.mxu0 0.0
    %2195 = vmatpush1.msra.mxu0 0.0
    %2196 = vmatprep.subr.mxu0 0.0
    %2197 = vmatpush1.msra.mxu0 0.0
    %2198 = vmatprep.mubr.f32.mxu0 0.0
    %2199 = vmatmul.mubr.f32.gmra.mrb[0].mxu0 %v2129
    %v2200 = vpop.f32.mrb[0].mxu0
    %v2201 = vadd.f32 0.0, %v2200
    %v2202 = vpop.f32.mrb[0].mxu0
    %2203 = vdwg.mxu0
    %v2204 = vadd.f32 %v2081, %v2201
    %v2205 = vld [vmem:[%s15] sm:$0xff]
    %v2206 = vadd.f32 %v2204, %v2205
    %vm2207 = vcmp.gt.f32.partialorder %v2206, 0.0
    %v2208 = vmul.f32 %v2206, 0.01
    %v2209 = vsel %vm2207, %v2206, %v2208
    %v2210 = vld [vmem:[%s18] sm:$0x1]
    %v2211 = vld [vmem:[%s16] sm:$0xff]
    %v2212 = vld [vmem:[%s16 + $0x8] sm:$0xff]
    %v2213 = vld [vmem:[%s17] sm:$0xff]
    %v2214 = vld [vmem:[%s17 + $0x8] sm:$0xff]
    %v2215 = vld [vmem:[%s17 + $0x10] sm:$0xff]
    %v2216 = vld [vmem:[%s17 + $0x18] sm:$0xff]
    %v2217 = vld [vmem:[%s17 + $0x20] sm:$0xff]
    %v2218 = vld [vmem:[%s17 + $0x28] sm:$0xff]
    %v2219 = vld [vmem:[%s17 + $0x30] sm:$0xff]
    %v2220 = vld [vmem:[%s17 + $0x38] sm:$0xff]
    %v2221 = vld [vmem:[%s17 + $0x40] sm:$0xff]
    %v2222 = vld [vmem:[%s17 + $0x48] sm:$0xff]
    %v2223 = vld [vmem:[%s17 + $0x50] sm:$0xff]
    %v2224 = vld [vmem:[%s17 + $0x58] sm:$0xff]
    %v2225 = vld [vmem:[%s17 + $0x60] sm:$0xff]
    %v2226 = vld [vmem:[%s17 + $0x68] sm:$0xff]
    %v2227 = vld [vmem:[%s17 + $0x70] sm:$0xff]
    %v2228 = vld [vmem:[%s17 + $0x78] sm:$0xff]
    %v2229 = vpack.c.bf16 %v2209, %v2209
    %v2230 = vpack.c.bf16 %v2214, %v2213
    %v2231 = vpack.c.bf16 %v2216, %v2215
    %v2232 = vpack.c.bf16 %v2218, %v2217
    %v2233 = vpack.c.bf16 %v2220, %v2219
    %v2234 = vpack.c.bf16 %v2222, %v2221
    %v2235 = vpack.c.bf16 %v2224, %v2223
    %v2236 = vpack.c.bf16 %v2226, %v2225
    %v2237 = vpack.c.bf16 %v2228, %v2227
    %2238 = vmatprep.subr.bf16.mxu0 0
    %2239 = vmatpush1.bf16.msra.mxu0 %v2230
    %2240 = vmatprep.subr.bf16.mxu0 0
    %2241 = vmatpush1.bf16.msra.mxu0 %v2231
    %2242 = vmatprep.subr.bf16.mxu0 0
    %2243 = vmatpush1.bf16.msra.mxu0 %v2232
    %2244 = vmatprep.subr.bf16.mxu0 0
    %2245 = vmatpush1.bf16.msra.mxu0 %v2233
    %2246 = vmatprep.subr.bf16.mxu0 0
    %2247 = vmatpush1.bf16.msra.mxu0 %v2234
    %2248 = vmatprep.subr.bf16.mxu0 0
    %2249 = vmatpush1.bf16.msra.mxu0 %v2235
    %2250 = vmatprep.subr.bf16.mxu0 0
    %2251 = vmatpush1.bf16.msra.mxu0 %v2236
    %2252 = vmatprep.subr.bf16.mxu0 0
    %2253 = vmatpush1.bf16.msra.mxu0 %v2237
    %2254 = vmatprep.subr.bf16.mxu0 0
    %2255 = vmatpush1.bf16.msra.mxu0 0
    %2256 = vmatprep.subr.bf16.mxu0 0
    %2257 = vmatpush1.bf16.msra.mxu0 0
    %2258 = vmatprep.subr.bf16.mxu0 0
    %2259 = vmatpush1.bf16.msra.mxu0 0
    %2260 = vmatprep.subr.bf16.mxu0 0
    %2261 = vmatpush1.bf16.msra.mxu0 0
    %2262 = vmatprep.subr.bf16.mxu0 0
    %2263 = vmatpush1.bf16.msra.mxu0 0
    %2264 = vmatprep.subr.bf16.mxu0 0
    %2265 = vmatpush1.bf16.msra.mxu0 0
    %2266 = vmatprep.subr.bf16.mxu0 0
    %2267 = vmatpush1.bf16.msra.mxu0 0
    %2268 = vmatprep.subr.bf16.mxu0 0
    %2269 = vmatpush1.bf16.msra.mxu0 0
    %2270 = vmatprep.mubr.bf16.mxu0 0
    %2271 = vmatmul.mubr.bf16.gmra.mrb[0].mxu0 %v2229
    %v2272 = vpop.f32.mrb[0].mxu0
    %v2273 = vadd.f32 0.0, %v2272
    %v2274 = vpop.f32.mrb[0].mxu0
    %v2275 = vpop.f32.mrb[0].mxu0
    %v2276 = vpop.f32.mrb[0].mxu0
    %2277 = vdwg.mxu0
    %s2278 = scalar_lea.vmem %s16, 16
    %v2279 = vld [vmem:[%s2278] sm:$0xff]
    %v2280 = vld [vmem:[%s2278 + $0x8] sm:$0xff]
    %s2281 = scalar_lea.vmem %s17, 128
    %v2282 = vld [vmem:[%s2281] sm:$0xff]
    %v2283 = vld [vmem:[%s2281 + $0x8] sm:$0xff]
    %v2284 = vld [vmem:[%s2281 + $0x10] sm:$0xff]
    %v2285 = vld [vmem:[%s2281 + $0x18] sm:$0xff]
    %v2286 = vld [vmem:[%s2281 + $0x20] sm:$0xff]
    %v2287 = vld [vmem:[%s2281 + $0x28] sm:$0xff]
    %v2288 = vld [vmem:[%s2281 + $0x30] sm:$0xff]
    %v2289 = vld [vmem:[%s2281 + $0x38] sm:$0xff]
    %v2290 = vld [vmem:[%s2281 + $0x40] sm:$0xff]
    %v2291 = vld [vmem:[%s2281 + $0x48] sm:$0xff]
    %v2292 = vld [vmem:[%s2281 + $0x50] sm:$0xff]
    %v2293 = vld [vmem:[%s2281 + $0x58] sm:$0xff]
    %v2294 = vld [vmem:[%s2281 + $0x60] sm:$0xff]
    %v2295 = vld [vmem:[%s2281 + $0x68] sm:$0xff]
    %v2296 = vld [vmem:[%s2281 + $0x70] sm:$0xff]
    %v2297 = vld [vmem:[%s2281 + $0x78] sm:$0xff]
    %v2298 = vpack.c.bf16 %v2283, %v2282
    %v2299 = vpack.c.bf16 %v2285, %v2284
    %v2300 = vpack.c.bf16 %v2287, %v2286
    %v2301 = vpack.c.bf16 %v2289, %v2288
    %v2302 = vpack.c.bf16 %v2291, %v2290
    %v2303 = vpack.c.bf16 %v2293, %v2292
    %v2304 = vpack.c.bf16 %v2295, %v2294
    %v2305 = vpack.c.bf16 %v2297, %v2296
    %2306 = vmatprep.subr.bf16.mxu0 0
    %2307 = vmatpush1.bf16.msra.mxu0 %v2298
    %2308 = vmatprep.subr.bf16.mxu0 0
    %2309 = vmatpush1.bf16.msra.mxu0 %v2299
    %2310 = vmatprep.subr.bf16.mxu0 0
    %2311 = vmatpush1.bf16.msra.mxu0 %v2300
    %2312 = vmatprep.subr.bf16.mxu0 0
    %2313 = vmatpush1.bf16.msra.mxu0 %v2301
    %2314 = vmatprep.subr.bf16.mxu0 0
    %2315 = vmatpush1.bf16.msra.mxu0 %v2302
    %2316 = vmatprep.subr.bf16.mxu0 0
    %2317 = vmatpush1.bf16.msra.mxu0 %v2303
    %2318 = vmatprep.subr.bf16.mxu0 0
    %2319 = vmatpush1.bf16.msra.mxu0 %v2304
    %2320 = vmatprep.subr.bf16.mxu0 0
    %2321 = vmatpush1.bf16.msra.mxu0 %v2305
    %2322 = vmatprep.subr.bf16.mxu0 0
    %2323 = vmatpush1.bf16.msra.mxu0 0
    %2324 = vmatprep.subr.bf16.mxu0 0
    %2325 = vmatpush1.bf16.msra.mxu0 0
    %2326 = vmatprep.subr.bf16.mxu0 0
    %2327 = vmatpush1.bf16.msra.mxu0 0
    %2328 = vmatprep.subr.bf16.mxu0 0
    %2329 = vmatpush1.bf16.msra.mxu0 0
    %2330 = vmatprep.subr.bf16.mxu0 0
    %2331 = vmatpush1.bf16.msra.mxu0 0
    %2332 = vmatprep.subr.bf16.mxu0 0
    %2333 = vmatpush1.bf16.msra.mxu0 0
    %2334 = vmatprep.subr.bf16.mxu0 0
    %2335 = vmatpush1.bf16.msra.mxu0 0
    %2336 = vmatprep.subr.bf16.mxu0 0
    %2337 = vmatpush1.bf16.msra.mxu0 0
    %2338 = vmatprep.mubr.bf16.mxu0 0
    %2339 = vmatmul.mubr.bf16.gmra.mrb[0].mxu0 %v2229
    %v2340 = vpop.f32.mrb[0].mxu0
    %v2341 = vadd.f32 0.0, %v2340
    %v2342 = vpop.f32.mrb[0].mxu0
    %v2343 = vpop.f32.mrb[0].mxu0
    %v2344 = vpop.f32.mrb[0].mxu0
    %2345 = vdwg.mxu0
    %v2347 = vsel %vm1113, %v2279, 0
    %v2350 = vsel %vm1113, %v2280, 0
    %2352 = vmatprep.subr.mxu0 0.0
    %2353 = vmatpush1.msra.mxu0 %v2341
    %2354 = vmatprep.subr.mxu0 0.0
    %2355 = vmatpush1.msra.mxu0 0.0
    %2356 = vmatprep.subr.mxu0 0.0
    %2357 = vmatpush1.msra.mxu0 0.0
    %2358 = vmatprep.subr.mxu0 0.0
    %2359 = vmatpush1.msra.mxu0 0.0
    %2360 = vmatprep.subr.mxu0 0.0
    %2361 = vmatpush1.msra.mxu0 0.0
    %2362 = vmatprep.subr.mxu0 0.0
    %2363 = vmatpush1.msra.mxu0 0.0
    %2364 = vmatprep.subr.mxu0 0.0
    %2365 = vmatpush1.msra.mxu0 0.0
    %2366 = vmatprep.subr.mxu0 0.0
    %2367 = vmatpush1.msra.mxu0 0.0
    %2368 = vmatprep.subr.mxu0 0.0
    %2369 = vmatpush1.msra.mxu0 0.0
    %2370 = vmatprep.subr.mxu0 0.0
    %2371 = vmatpush1.msra.mxu0 0.0
    %2372 = vmatprep.subr.mxu0 0.0
    %2373 = vmatpush1.msra.mxu0 0.0
    %2374 = vmatprep.subr.mxu0 0.0
    %2375 = vmatpush1.msra.mxu0 0.0
    %2376 = vmatprep.subr.mxu0 0.0
    %2377 = vmatpush1.msra.mxu0 0.0
    %2378 = vmatprep.subr.mxu0 0.0
    %2379 = vmatpush1.msra.mxu0 0.0
    %2380 = vmatprep.subr.mxu0 0.0
    %2381 = vmatpush1.msra.mxu0 0.0
    %2382 = vmatprep.subr.mxu0 0.0
    %2383 = vmatpush1.msra.mxu0 0.0
    %2384 = vmatprep.subr.mxu0 0.0
    %2385 = vmatpush1.msra.mxu0 0.0
    %2386 = vmatprep.subr.mxu0 0.0
    %2387 = vmatpush1.msra.mxu0 0.0
    %2388 = vmatprep.subr.mxu0 0.0
    %2389 = vmatpush1.msra.mxu0 0.0
    %2390 = vmatprep.subr.mxu0 0.0
    %2391 = vmatpush1.msra.mxu0 0.0
    %2392 = vmatprep.subr.mxu0 0.0
    %2393 = vmatpush1.msra.mxu0 0.0
    %2394 = vmatprep.subr.mxu0 0.0
    %2395 = vmatpush1.msra.mxu0 0.0
    %2396 = vmatprep.subr.mxu0 0.0
    %2397 = vmatpush1.msra.mxu0 0.0
    %2398 = vmatprep.subr.mxu0 0.0
    %2399 = vmatpush1.msra.mxu0 0.0
    %2400 = vmatprep.subr.mxu0 0.0
    %2401 = vmatpush1.msra.mxu0 0.0
    %2402 = vmatprep.subr.mxu0 0.0
    %2403 = vmatpush1.msra.mxu0 0.0
    %2404 = vmatprep.subr.mxu0 0.0
    %2405 = vmatpush1.msra.mxu0 0.0
    %2406 = vmatprep.subr.mxu0 0.0
    %2407 = vmatpush1.msra.mxu0 0.0
    %2408 = vmatprep.subr.mxu0 0.0
    %2409 = vmatpush1.msra.mxu0 0.0
    %2410 = vmatprep.subr.mxu0 0.0
    %2411 = vmatpush1.msra.mxu0 0.0
    %2412 = vmatprep.subr.mxu0 0.0
    %2413 = vmatpush1.msra.mxu0 0.0
    %2414 = vmatprep.subr.mxu0 0.0
    %2415 = vmatpush1.msra.mxu0 0.0
    %2416 = vmatprep.mubr.f32.mxu0 0.0
    %2417 = vmatmul.mubr.f32.gmra.mrb[0].mxu0 %v2347
    %v2418 = vpop.f32.mrb[0].mxu0
    %v2419 = vadd.f32 0.0, %v2418
    %v2420 = vpop.f32.mrb[0].mxu0
    %2421 = vmatprep.mubr.f32.mxu0 0.0
    %2422 = vmatmul.mubr.f32.gmra.mrb[0].mxu0 %v2350
    %v2423 = vpop.f32.mrb[0].mxu0
    %v2424 = vadd.f32 0.0, %v2423
    %v2425 = vpop.f32.mrb[0].mxu0
    %2426 = vdwg.mxu0
    %v2428 = vsel %vm1113, %v2211, 0
    %v2431 = vsel %vm1113, %v2212, 0
    %2433 = vmatprep.subr.mxu0 0.0
    %2434 = vmatpush1.msra.mxu0 %v2273
    %2435 = vmatprep.subr.mxu0 0.0
    %2436 = vmatpush1.msra.mxu0 0.0
    %2437 = vmatprep.subr.mxu0 0.0
    %2438 = vmatpush1.msra.mxu0 0.0
    %2439 = vmatprep.subr.mxu0 0.0
    %2440 = vmatpush1.msra.mxu0 0.0
    %2441 = vmatprep.subr.mxu0 0.0
    %2442 = vmatpush1.msra.mxu0 0.0
    %2443 = vmatprep.subr.mxu0 0.0
    %2444 = vmatpush1.msra.mxu0 0.0
    %2445 = vmatprep.subr.mxu0 0.0
    %2446 = vmatpush1.msra.mxu0 0.0
    %2447 = vmatprep.subr.mxu0 0.0
    %2448 = vmatpush1.msra.mxu0 0.0
    %2449 = vmatprep.subr.mxu0 0.0
    %2450 = vmatpush1.msra.mxu0 0.0
    %2451 = vmatprep.subr.mxu0 0.0
    %2452 = vmatpush1.msra.mxu0 0.0
    %2453 = vmatprep.subr.mxu0 0.0
    %2454 = vmatpush1.msra.mxu0 0.0
    %2455 = vmatprep.subr.mxu0 0.0
    %2456 = vmatpush1.msra.mxu0 0.0
    %2457 = vmatprep.subr.mxu0 0.0
    %2458 = vmatpush1.msra.mxu0 0.0
    %2459 = vmatprep.subr.mxu0 0.0
    %2460 = vmatpush1.msra.mxu0 0.0
    %2461 = vmatprep.subr.mxu0 0.0
    %2462 = vmatpush1.msra.mxu0 0.0
    %2463 = vmatprep.subr.mxu0 0.0
    %2464 = vmatpush1.msra.mxu0 0.0
    %2465 = vmatprep.subr.mxu0 0.0
    %2466 = vmatpush1.msra.mxu0 0.0
    %2467 = vmatprep.subr.mxu0 0.0
    %2468 = vmatpush1.msra.mxu0 0.0
    %2469 = vmatprep.subr.mxu0 0.0
    %2470 = vmatpush1.msra.mxu0 0.0
    %2471 = vmatprep.subr.mxu0 0.0
    %2472 = vmatpush1.msra.mxu0 0.0
    %2473 = vmatprep.subr.mxu0 0.0
    %2474 = vmatpush1.msra.mxu0 0.0
    %2475 = vmatprep.subr.mxu0 0.0
    %2476 = vmatpush1.msra.mxu0 0.0
    %2477 = vmatprep.subr.mxu0 0.0
    %2478 = vmatpush1.msra.mxu0 0.0
    %2479 = vmatprep.subr.mxu0 0.0
    %2480 = vmatpush1.msra.mxu0 0.0
    %2481 = vmatprep.subr.mxu0 0.0
    %2482 = vmatpush1.msra.mxu0 0.0
    %2483 = vmatprep.subr.mxu0 0.0
    %2484 = vmatpush1.msra.mxu0 0.0
    %2485 = vmatprep.subr.mxu0 0.0
    %2486 = vmatpush1.msra.mxu0 0.0
    %2487 = vmatprep.subr.mxu0 0.0
    %2488 = vmatpush1.msra.mxu0 0.0
    %2489 = vmatprep.subr.mxu0 0.0
    %2490 = vmatpush1.msra.mxu0 0.0
    %2491 = vmatprep.subr.mxu0 0.0
    %2492 = vmatpush1.msra.mxu0 0.0
    %2493 = vmatprep.subr.mxu0 0.0
    %2494 = vmatpush1.msra.mxu0 0.0
    %2495 = vmatprep.subr.mxu0 0.0
    %2496 = vmatpush1.msra.mxu0 0.0
    %2497 = vmatprep.mubr.f32.mxu0 0.0
    %2498 = vmatmul.mubr.f32.gmra.mrb[0].mxu0 %v2428
    %v2499 = vpop.f32.mrb[0].mxu0
    %v2500 = vadd.f32 %v2419, %v2499
    %v2501 = vpop.f32.mrb[0].mxu0
    %2502 = vmatprep.mubr.f32.mxu0 0.0
    %2503 = vmatmul.mubr.f32.gmra.mrb[0].mxu0 %v2431
    %v2504 = vpop.f32.mrb[0].mxu0
    %v2505 = vadd.f32 %v2424, %v2504
    %v2506 = vpop.f32.mrb[0].mxu0
    %2507 = vdwg.mxu0
    %s2508 = scalar_lea.vmem %s16, 32
    %v2509 = vld [vmem:[%s2508] sm:$0xff]
    %v2510 = vld [vmem:[%s2508 + $0x8] sm:$0xff]
    %s2511 = scalar_lea.vmem %s17, 256
    %v2512 = vld [vmem:[%s2511] sm:$0xff]
    %v2513 = vld [vmem:[%s2511 + $0x8] sm:$0xff]
    %v2514 = vld [vmem:[%s2511 + $0x10] sm:$0xff]
    %v2515 = vld [vmem:[%s2511 + $0x18] sm:$0xff]
    %v2516 = vld [vmem:[%s2511 + $0x20] sm:$0xff]
    %v2517 = vld [vmem:[%s2511 + $0x28] sm:$0xff]
    %v2518 = vld [vmem:[%s2511 + $0x30] sm:$0xff]
    %v2519 = vld [vmem:[%s2511 + $0x38] sm:$0xff]
    %v2520 = vld [vmem:[%s2511 + $0x40] sm:$0xff]
    %v2521 = vld [vmem:[%s2511 + $0x48] sm:$0xff]
    %v2522 = vld [vmem:[%s2511 + $0x50] sm:$0xff]
    %v2523 = vld [vmem:[%s2511 + $0x58] sm:$0xff]
    %v2524 = vld [vmem:[%s2511 + $0x60] sm:$0xff]
    %v2525 = vld [vmem:[%s2511 + $0x68] sm:$0xff]
    %v2526 = vld [vmem:[%s2511 + $0x70] sm:$0xff]
    %v2527 = vld [vmem:[%s2511 + $0x78] sm:$0xff]
    %v2528 = vpack.c.bf16 %v2513, %v2512
    %v2529 = vpack.c.bf16 %v2515, %v2514
    %v2530 = vpack.c.bf16 %v2517, %v2516
    %v2531 = vpack.c.bf16 %v2519, %v2518
    %v2532 = vpack.c.bf16 %v2521, %v2520
    %v2533 = vpack.c.bf16 %v2523, %v2522
    %v2534 = vpack.c.bf16 %v2525, %v2524
    %v2535 = vpack.c.bf16 %v2527, %v2526
    %2536 = vmatprep.subr.bf16.mxu0 0
    %2537 = vmatpush1.bf16.msra.mxu0 %v2528
    %2538 = vmatprep.subr.bf16.mxu0 0
    %2539 = vmatpush1.bf16.msra.mxu0 %v2529
    %2540 = vmatprep.subr.bf16.mxu0 0
    %2541 = vmatpush1.bf16.msra.mxu0 %v2530
    %2542 = vmatprep.subr.bf16.mxu0 0
    %2543 = vmatpush1.bf16.msra.mxu0 %v2531
    %2544 = vmatprep.subr.bf16.mxu0 0
    %2545 = vmatpush1.bf16.msra.mxu0 %v2532
    %2546 = vmatprep.subr.bf16.mxu0 0
    %2547 = vmatpush1.bf16.msra.mxu0 %v2533
    %2548 = vmatprep.subr.bf16.mxu0 0
    %2549 = vmatpush1.bf16.msra.mxu0 %v2534
    %2550 = vmatprep.subr.bf16.mxu0 0
    %2551 = vmatpush1.bf16.msra.mxu0 %v2535
    %2552 = vmatprep.subr.bf16.mxu0 0
    %2553 = vmatpush1.bf16.msra.mxu0 0
    %2554 = vmatprep.subr.bf16.mxu0 0
    %2555 = vmatpush1.bf16.msra.mxu0 0
    %2556 = vmatprep.subr.bf16.mxu0 0
    %2557 = vmatpush1.bf16.msra.mxu0 0
    %2558 = vmatprep.subr.bf16.mxu0 0
    %2559 = vmatpush1.bf16.msra.mxu0 0
    %2560 = vmatprep.subr.bf16.mxu0 0
    %2561 = vmatpush1.bf16.msra.mxu0 0
    %2562 = vmatprep.subr.bf16.mxu0 0
    %2563 = vmatpush1.bf16.msra.mxu0 0
    %2564 = vmatprep.subr.bf16.mxu0 0
    %2565 = vmatpush1.bf16.msra.mxu0 0
    %2566 = vmatprep.subr.bf16.mxu0 0
    %2567 = vmatpush1.bf16.msra.mxu0 0
    %2568 = vmatprep.mubr.bf16.mxu0 0
    %2569 = vmatmul.mubr.bf16.gmra.mrb[0].mxu0 %v2229
    %v2570 = vpop.f32.mrb[0].mxu0
    %v2571 = vadd.f32 0.0, %v2570
    %v2572 = vpop.f32.mrb[0].mxu0
    %v2573 = vpop.f32.mrb[0].mxu0
    %v2574 = vpop.f32.mrb[0].mxu0
    %2575 = vdwg.mxu0
    %v2577 = vsel %vm1113, %v2509, 0
    %v2580 = vsel %vm1113, %v2510, 0
    %2582 = vmatprep.subr.mxu0 0.0
    %2583 = vmatpush1.msra.mxu0 %v2571
    %2584 = vmatprep.subr.mxu0 0.0
    %2585 = vmatpush1.msra.mxu0 0.0
    %2586 = vmatprep.subr.mxu0 0.0
    %2587 = vmatpush1.msra.mxu0 0.0
    %2588 = vmatprep.subr.mxu0 0.0
    %2589 = vmatpush1.msra.mxu0 0.0
    %2590 = vmatprep.subr.mxu0 0.0
    %2591 = vmatpush1.msra.mxu0 0.0
    %2592 = vmatprep.subr.mxu0 0.0
    %2593 = vmatpush1.msra.mxu0 0.0
    %2594 = vmatprep.subr.mxu0 0.0
    %2595 = vmatpush1.msra.mxu0 0.0
    %2596 = vmatprep.subr.mxu0 0.0
    %2597 = vmatpush1.msra.mxu0 0.0
    %2598 = vmatprep.subr.mxu0 0.0
    %2599 = vmatpush1.msra.mxu0 0.0
    %2600 = vmatprep.subr.mxu0 0.0
    %2601 = vmatpush1.msra.mxu0 0.0
    %2602 = vmatprep.subr.mxu0 0.0
    %2603 = vmatpush1.msra.mxu0 0.0
    %2604 = vmatprep.subr.mxu0 0.0
    %2605 = vmatpush1.msra.mxu0 0.0
    %2606 = vmatprep.subr.mxu0 0.0
    %2607 = vmatpush1.msra.mxu0 0.0
    %2608 = vmatprep.subr.mxu0 0.0
    %2609 = vmatpush1.msra.mxu0 0.0
    %2610 = vmatprep.subr.mxu0 0.0
    %2611 = vmatpush1.msra.mxu0 0.0
    %2612 = vmatprep.subr.mxu0 0.0
    %2613 = vmatpush1.msra.mxu0 0.0
    %2614 = vmatprep.subr.mxu0 0.0
    %2615 = vmatpush1.msra.mxu0 0.0
    %2616 = vmatprep.subr.mxu0 0.0
    %2617 = vmatpush1.msra.mxu0 0.0
    %2618 = vmatprep.subr.mxu0 0.0
    %2619 = vmatpush1.msra.mxu0 0.0
    %2620 = vmatprep.subr.mxu0 0.0
    %2621 = vmatpush1.msra.mxu0 0.0
    %2622 = vmatprep.subr.mxu0 0.0
    %2623 = vmatpush1.msra.mxu0 0.0
    %2624 = vmatprep.subr.mxu0 0.0
    %2625 = vmatpush1.msra.mxu0 0.0
    %2626 = vmatprep.subr.mxu0 0.0
    %2627 = vmatpush1.msra.mxu0 0.0
    %2628 = vmatprep.subr.mxu0 0.0
    %2629 = vmatpush1.msra.mxu0 0.0
    %2630 = vmatprep.subr.mxu0 0.0
    %2631 = vmatpush1.msra.mxu0 0.0
    %2632 = vmatprep.subr.mxu0 0.0
    %2633 = vmatpush1.msra.mxu0 0.0
    %2634 = vmatprep.subr.mxu0 0.0
    %2635 = vmatpush1.msra.mxu0 0.0
    %2636 = vmatprep.subr.mxu0 0.0
    %2637 = vmatpush1.msra.mxu0 0.0
    %2638 = vmatprep.subr.mxu0 0.0
    %2639 = vmatpush1.msra.mxu0 0.0
    %2640 = vmatprep.subr.mxu0 0.0
    %2641 = vmatpush1.msra.mxu0 0.0
    %2642 = vmatprep.subr.mxu0 0.0
    %2643 = vmatpush1.msra.mxu0 0.0
    %2644 = vmatprep.subr.mxu0 0.0
    %2645 = vmatpush1.msra.mxu0 0.0
    %2646 = vmatprep.mubr.f32.mxu0 0.0
    %2647 = vmatmul.mubr.f32.gmra.mrb[0].mxu0 %v2577
    %v2648 = vpop.f32.mrb[0].mxu0
    %v2649 = vadd.f32 0.0, %v2648
    %v2650 = vpop.f32.mrb[0].mxu0
    %2651 = vmatprep.mubr.f32.mxu0 0.0
    %2652 = vmatmul.mubr.f32.gmra.mrb[0].mxu0 %v2580
    %v2653 = vpop.f32.mrb[0].mxu0
    %v2654 = vadd.f32 0.0, %v2653
    %v2655 = vpop.f32.mrb[0].mxu0
    %2656 = vdwg.mxu0
    %v2657 = vadd.f32 %v2500, %v2649
    %v2658 = vadd.f32 %v2505, %v2654
    %v2660 = vlaneseq
    %v2661 = vshrl.u32 %v2660, 7
    %v2662 = vsub.s32 0, %v2661
    %v2663 = vrot.slane %v2210, %v2662
    %v2665 = vadd.f32 %v2657, %v2663
    %v2666 = vadd.f32 %v2658, %v2663
    %vm2667 = vcmp.gt.f32.partialorder %v2665, 0.0
    %vm2668 = vcmp.gt.f32.partialorder %v2666, 0.0
    %v2669 = vmul.f32 %v2665, 0.01
    %v2670 = vmul.f32 %v2666, 0.01
    %v2671 = vsel %vm2667, %v2665, %v2669
    %v2672 = vsel %vm2668, %v2666, %v2670
    %v2673 = vld [vmem:[%s21] sm:$0x1]
    %v2674 = vld [vmem:[%s19] sm:$0xff]
    %v2675 = vld [vmem:[%s19 + $0x8] sm:$0xff]
    %v2676 = vld [vmem:[%s19 + $0x10] sm:$0xff]
    %v2677 = vld [vmem:[%s19 + $0x18] sm:$0xff]
    %v2678 = vld [vmem:[%s20] sm:$0xff]
    %v2679 = vld [vmem:[%s20 + $0x8] sm:$0xff]
    %v2680 = vld [vmem:[%s20 + $0x10] sm:$0xff]
    %v2681 = vld [vmem:[%s20 + $0x18] sm:$0xff]
    %v2682 = vld [vmem:[%s20 + $0x20] sm:$0xff]
    %v2683 = vld [vmem:[%s20 + $0x28] sm:$0xff]
    %v2684 = vld [vmem:[%s20 + $0x30] sm:$0xff]
    %v2685 = vld [vmem:[%s20 + $0x38] sm:$0xff]
    %v2686 = vld [vmem:[%s20 + $0x40] sm:$0xff]
    %v2687 = vld [vmem:[%s20 + $0x48] sm:$0xff]
    %v2688 = vld [vmem:[%s20 + $0x50] sm:$0xff]
    %v2689 = vld [vmem:[%s20 + $0x58] sm:$0xff]
    %v2690 = vld [vmem:[%s20 + $0x60] sm:$0xff]
    %v2691 = vld [vmem:[%s20 + $0x68] sm:$0xff]
    %v2692 = vld [vmem:[%s20 + $0x70] sm:$0xff]
    %v2693 = vld [vmem:[%s20 + $0x78] sm:$0xff]
    %v2694 = vpack.c.bf16 %v2672, %v2671
    %v2695 = vpack.c.bf16 %v2679, %v2678
    %v2696 = vpack.c.bf16 %v2681, %v2680
    %v2697 = vpack.c.bf16 %v2683, %v2682
    %v2698 = vpack.c.bf16 %v2685, %v2684
    %v2699 = vpack.c.bf16 %v2687, %v2686
    %v2700 = vpack.c.bf16 %v2689, %v2688
    %v2701 = vpack.c.bf16 %v2691, %v2690
    %v2702 = vpack.c.bf16 %v2693, %v2692
    %2703 = vmatprep.subr.bf16.mxu0 0
    %2704 = vmatpush1.bf16.msra.mxu0 %v2695
    %2705 = vmatprep.subr.bf16.mxu0 0
    %2706 = vmatpush1.bf16.msra.mxu0 %v2696
    %2707 = vmatprep.subr.bf16.mxu0 0
    %2708 = vmatpush1.bf16.msra.mxu0 %v2697
    %2709 = vmatprep.subr.bf16.mxu0 0
    %2710 = vmatpush1.bf16.msra.mxu0 %v2698
    %2711 = vmatprep.subr.bf16.mxu0 0
    %2712 = vmatpush1.bf16.msra.mxu0 %v2699
    %2713 = vmatprep.subr.bf16.mxu0 0
    %2714 = vmatpush1.bf16.msra.mxu0 %v2700
    %2715 = vmatprep.subr.bf16.mxu0 0
    %2716 = vmatpush1.bf16.msra.mxu0 %v2701
    %2717 = vmatprep.subr.bf16.mxu0 0
    %2718 = vmatpush1.bf16.msra.mxu0 %v2702
    %2719 = vmatprep.subr.bf16.mxu0 0
    %2720 = vmatpush1.bf16.msra.mxu0 0
    %2721 = vmatprep.subr.bf16.mxu0 0
    %2722 = vmatpush1.bf16.msra.mxu0 0
    %2723 = vmatprep.subr.bf16.mxu0 0
    %2724 = vmatpush1.bf16.msra.mxu0 0
    %2725 = vmatprep.subr.bf16.mxu0 0
    %2726 = vmatpush1.bf16.msra.mxu0 0
    %2727 = vmatprep.subr.bf16.mxu0 0
    %2728 = vmatpush1.bf16.msra.mxu0 0
    %2729 = vmatprep.subr.bf16.mxu0 0
    %2730 = vmatpush1.bf16.msra.mxu0 0
    %2731 = vmatprep.subr.bf16.mxu0 0
    %2732 = vmatpush1.bf16.msra.mxu0 0
    %2733 = vmatprep.subr.bf16.mxu0 0
    %2734 = vmatpush1.bf16.msra.mxu0 0
    %2735 = vmatprep.mubr.bf16.mxu0 0
    %2736 = vmatmul.mubr.bf16.gmra.mrb[0].mxu0 %v2694
    %v2737 = vpop.f32.mrb[0].mxu0
    %v2738 = vadd.f32 0.0, %v2737
    %v2739 = vpop.f32.mrb[0].mxu0
    %v2740 = vpop.f32.mrb[0].mxu0
    %v2741 = vadd.f32 0.0, %v2740
    %v2742 = vpop.f32.mrb[0].mxu0
    %2743 = vdwg.mxu0
    %s2744 = scalar_lea.vmem %s19, 32
    %v2745 = vld [vmem:[%s2744] sm:$0xff]
    %v2746 = vld [vmem:[%s2744 + $0x8] sm:$0xff]
    %v2747 = vld [vmem:[%s2744 + $0x10] sm:$0xff]
    %v2748 = vld [vmem:[%s2744 + $0x18] sm:$0xff]
    %s2749 = scalar_lea.vmem %s20, 128
    %v2750 = vld [vmem:[%s2749] sm:$0xff]
    %v2751 = vld [vmem:[%s2749 + $0x8] sm:$0xff]
    %v2752 = vld [vmem:[%s2749 + $0x10] sm:$0xff]
    %v2753 = vld [vmem:[%s2749 + $0x18] sm:$0xff]
    %v2754 = vld [vmem:[%s2749 + $0x20] sm:$0xff]
    %v2755 = vld [vmem:[%s2749 + $0x28] sm:$0xff]
    %v2756 = vld [vmem:[%s2749 + $0x30] sm:$0xff]
    %v2757 = vld [vmem:[%s2749 + $0x38] sm:$0xff]
    %v2758 = vld [vmem:[%s2749 + $0x40] sm:$0xff]
    %v2759 = vld [vmem:[%s2749 + $0x48] sm:$0xff]
    %v2760 = vld [vmem:[%s2749 + $0x50] sm:$0xff]
    %v2761 = vld [vmem:[%s2749 + $0x58] sm:$0xff]
    %v2762 = vld [vmem:[%s2749 + $0x60] sm:$0xff]
    %v2763 = vld [vmem:[%s2749 + $0x68] sm:$0xff]
    %v2764 = vld [vmem:[%s2749 + $0x70] sm:$0xff]
    %v2765 = vld [vmem:[%s2749 + $0x78] sm:$0xff]
    %v2766 = vpack.c.bf16 %v2751, %v2750
    %v2767 = vpack.c.bf16 %v2753, %v2752
    %v2768 = vpack.c.bf16 %v2755, %v2754
    %v2769 = vpack.c.bf16 %v2757, %v2756
    %v2770 = vpack.c.bf16 %v2759, %v2758
    %v2771 = vpack.c.bf16 %v2761, %v2760
    %v2772 = vpack.c.bf16 %v2763, %v2762
    %v2773 = vpack.c.bf16 %v2765, %v2764
    %2774 = vmatprep.subr.bf16.mxu0 0
    %2775 = vmatpush1.bf16.msra.mxu0 %v2766
    %2776 = vmatprep.subr.bf16.mxu0 0
    %2777 = vmatpush1.bf16.msra.mxu0 %v2767
    %2778 = vmatprep.subr.bf16.mxu0 0
    %2779 = vmatpush1.bf16.msra.mxu0 %v2768
    %2780 = vmatprep.subr.bf16.mxu0 0
    %2781 = vmatpush1.bf16.msra.mxu0 %v2769
    %2782 = vmatprep.subr.bf16.mxu0 0
    %2783 = vmatpush1.bf16.msra.mxu0 %v2770
    %2784 = vmatprep.subr.bf16.mxu0 0
    %2785 = vmatpush1.bf16.msra.mxu0 %v2771
    %2786 = vmatprep.subr.bf16.mxu0 0
    %2787 = vmatpush1.bf16.msra.mxu0 %v2772
    %2788 = vmatprep.subr.bf16.mxu0 0
    %2789 = vmatpush1.bf16.msra.mxu0 %v2773
    %2790 = vmatprep.subr.bf16.mxu0 0
    %2791 = vmatpush1.bf16.msra.mxu0 0
    %2792 = vmatprep.subr.bf16.mxu0 0
    %2793 = vmatpush1.bf16.msra.mxu0 0
    %2794 = vmatprep.subr.bf16.mxu0 0
    %2795 = vmatpush1.bf16.msra.mxu0 0
    %2796 = vmatprep.subr.bf16.mxu0 0
    %2797 = vmatpush1.bf16.msra.mxu0 0
    %2798 = vmatprep.subr.bf16.mxu0 0
    %2799 = vmatpush1.bf16.msra.mxu0 0
    %2800 = vmatprep.subr.bf16.mxu0 0
    %2801 = vmatpush1.bf16.msra.mxu0 0
    %2802 = vmatprep.subr.bf16.mxu0 0
    %2803 = vmatpush1.bf16.msra.mxu0 0
    %2804 = vmatprep.subr.bf16.mxu0 0
    %2805 = vmatpush1.bf16.msra.mxu0 0
    %2806 = vmatprep.mubr.bf16.mxu0 0
    %2807 = vmatmul.mubr.bf16.gmra.mrb[0].mxu0 %v2694
    %v2808 = vpop.f32.mrb[0].mxu0
    %v2809 = vadd.f32 0.0, %v2808
    %v2810 = vpop.f32.mrb[0].mxu0
    %v2811 = vpop.f32.mrb[0].mxu0
    %v2812 = vadd.f32 0.0, %v2811
    %v2813 = vpop.f32.mrb[0].mxu0
    %2814 = vdwg.mxu0
    %v2816 = vsel %vm681, %v2745, 0
    %v2819 = vsel %vm681, %v2746, 0
    %v2822 = vsel %vm681, %v2747, 0
    %v2825 = vsel %vm681, %v2748, 0
    %2827 = vmatprep.subr.mxu0 0.0
    %2828 = vmatpush1.msra.mxu0 %v2809
    %2829 = vmatprep.subr.mxu0 0.0
    %2830 = vmatpush1.msra.mxu0 %v2812
    %2831 = vmatprep.subr.mxu0 0.0
    %2832 = vmatpush1.msra.mxu0 0.0
    %2833 = vmatprep.subr.mxu0 0.0
    %2834 = vmatpush1.msra.mxu0 0.0
    %2835 = vmatprep.subr.mxu0 0.0
    %2836 = vmatpush1.msra.mxu0 0.0
    %2837 = vmatprep.subr.mxu0 0.0
    %2838 = vmatpush1.msra.mxu0 0.0
    %2839 = vmatprep.subr.mxu0 0.0
    %2840 = vmatpush1.msra.mxu0 0.0
    %2841 = vmatprep.subr.mxu0 0.0
    %2842 = vmatpush1.msra.mxu0 0.0
    %2843 = vmatprep.subr.mxu0 0.0
    %2844 = vmatpush1.msra.mxu0 0.0
    %2845 = vmatprep.subr.mxu0 0.0
    %2846 = vmatpush1.msra.mxu0 0.0
    %2847 = vmatprep.subr.mxu0 0.0
    %2848 = vmatpush1.msra.mxu0 0.0
    %2849 = vmatprep.subr.mxu0 0.0
    %2850 = vmatpush1.msra.mxu0 0.0
    %2851 = vmatprep.subr.mxu0 0.0
    %2852 = vmatpush1.msra.mxu0 0.0
    %2853 = vmatprep.subr.mxu0 0.0
    %2854 = vmatpush1.msra.mxu0 0.0
    %2855 = vmatprep.subr.mxu0 0.0
    %2856 = vmatpush1.msra.mxu0 0.0
    %2857 = vmatprep.subr.mxu0 0.0
    %2858 = vmatpush1.msra.mxu0 0.0
    %2859 = vmatprep.subr.mxu0 0.0
    %2860 = vmatpush1.msra.mxu0 0.0
    %2861 = vmatprep.subr.mxu0 0.0
    %2862 = vmatpush1.msra.mxu0 0.0
    %2863 = vmatprep.subr.mxu0 0.0
    %2864 = vmatpush1.msra.mxu0 0.0
    %2865 = vmatprep.subr.mxu0 0.0
    %2866 = vmatpush1.msra.mxu0 0.0
    %2867 = vmatprep.subr.mxu0 0.0
    %2868 = vmatpush1.msra.mxu0 0.0
    %2869 = vmatprep.subr.mxu0 0.0
    %2870 = vmatpush1.msra.mxu0 0.0
    %2871 = vmatprep.subr.mxu0 0.0
    %2872 = vmatpush1.msra.mxu0 0.0
    %2873 = vmatprep.subr.mxu0 0.0
    %2874 = vmatpush1.msra.mxu0 0.0
    %2875 = vmatprep.subr.mxu0 0.0
    %2876 = vmatpush1.msra.mxu0 0.0
    %2877 = vmatprep.subr.mxu0 0.0
    %2878 = vmatpush1.msra.mxu0 0.0
    %2879 = vmatprep.subr.mxu0 0.0
    %2880 = vmatpush1.msra.mxu0 0.0
    %2881 = vmatprep.subr.mxu0 0.0
    %2882 = vmatpush1.msra.mxu0 0.0
    %2883 = vmatprep.subr.mxu0 0.0
    %2884 = vmatpush1.msra.mxu0 0.0
    %2885 = vmatprep.subr.mxu0 0.0
    %2886 = vmatpush1.msra.mxu0 0.0
    %2887 = vmatprep.subr.mxu0 0.0
    %2888 = vmatpush1.msra.mxu0 0.0
    %2889 = vmatprep.subr.mxu0 0.0
    %2890 = vmatpush1.msra.mxu0 0.0
    %2891 = vmatprep.mubr.f32.mxu0 0.0
    %2892 = vmatmul.mubr.f32.gmra.mrb[0].mxu0 %v2816
    %v2893 = vpop.f32.mrb[0].mxu0
    %v2894 = vadd.f32 0.0, %v2893
    %v2895 = vpop.f32.mrb[0].mxu0
    %2896 = vmatprep.mubr.f32.mxu0 0.0
    %2897 = vmatmul.mubr.f32.gmra.mrb[0].mxu0 %v2819
    %v2898 = vpop.f32.mrb[0].mxu0
    %v2899 = vadd.f32 0.0, %v2898
    %v2900 = vpop.f32.mrb[0].mxu0
    %2901 = vmatprep.mubr.f32.mxu0 0.0
    %2902 = vmatmul.mubr.f32.gmra.mrb[0].mxu0 %v2822
    %v2903 = vpop.f32.mrb[0].mxu0
    %v2904 = vadd.f32 0.0, %v2903
    %v2905 = vpop.f32.mrb[0].mxu0
    %2906 = vmatprep.mubr.f32.mxu0 0.0
    %2907 = vmatmul.mubr.f32.gmra.mrb[0].mxu0 %v2825
    %v2908 = vpop.f32.mrb[0].mxu0
    %v2909 = vadd.f32 0.0, %v2908
    %v2910 = vpop.f32.mrb[0].mxu0
    %2911 = vdwg.mxu0
    %v2913 = vsel %vm681, %v2674, 0
    %v2916 = vsel %vm681, %v2675, 0
    %v2919 = vsel %vm681, %v2676, 0
    %v2922 = vsel %vm681, %v2677, 0
    %2924 = vmatprep.subr.mxu0 0.0
    %2925 = vmatpush1.msra.mxu0 %v2738
    %2926 = vmatprep.subr.mxu0 0.0
    %2927 = vmatpush1.msra.mxu0 %v2741
    %2928 = vmatprep.subr.mxu0 0.0
    %2929 = vmatpush1.msra.mxu0 0.0
    %2930 = vmatprep.subr.mxu0 0.0
    %2931 = vmatpush1.msra.mxu0 0.0
    %2932 = vmatprep.subr.mxu0 0.0
    %2933 = vmatpush1.msra.mxu0 0.0
    %2934 = vmatprep.subr.mxu0 0.0
    %2935 = vmatpush1.msra.mxu0 0.0
    %2936 = vmatprep.subr.mxu0 0.0
    %2937 = vmatpush1.msra.mxu0 0.0
    %2938 = vmatprep.subr.mxu0 0.0
    %2939 = vmatpush1.msra.mxu0 0.0
    %2940 = vmatprep.subr.mxu0 0.0
    %2941 = vmatpush1.msra.mxu0 0.0
    %2942 = vmatprep.subr.mxu0 0.0
    %2943 = vmatpush1.msra.mxu0 0.0
    %2944 = vmatprep.subr.mxu0 0.0
    %2945 = vmatpush1.msra.mxu0 0.0
    %2946 = vmatprep.subr.mxu0 0.0
    %2947 = vmatpush1.msra.mxu0 0.0
    %2948 = vmatprep.subr.mxu0 0.0
    %2949 = vmatpush1.msra.mxu0 0.0
    %2950 = vmatprep.subr.mxu0 0.0
    %2951 = vmatpush1.msra.mxu0 0.0
    %2952 = vmatprep.subr.mxu0 0.0
    %2953 = vmatpush1.msra.mxu0 0.0
    %2954 = vmatprep.subr.mxu0 0.0
    %2955 = vmatpush1.msra.mxu0 0.0
    %2956 = vmatprep.subr.mxu0 0.0
    %2957 = vmatpush1.msra.mxu0 0.0
    %2958 = vmatprep.subr.mxu0 0.0
    %2959 = vmatpush1.msra.mxu0 0.0
    %2960 = vmatprep.subr.mxu0 0.0
    %2961 = vmatpush1.msra.mxu0 0.0
    %2962 = vmatprep.subr.mxu0 0.0
    %2963 = vmatpush1.msra.mxu0 0.0
    %2964 = vmatprep.subr.mxu0 0.0
    %2965 = vmatpush1.msra.mxu0 0.0
    %2966 = vmatprep.subr.mxu0 0.0
    %2967 = vmatpush1.msra.mxu0 0.0
    %2968 = vmatprep.subr.mxu0 0.0
    %2969 = vmatpush1.msra.mxu0 0.0
    %2970 = vmatprep.subr.mxu0 0.0
    %2971 = vmatpush1.msra.mxu0 0.0
    %2972 = vmatprep.subr.mxu0 0.0
    %2973 = vmatpush1.msra.mxu0 0.0
    %2974 = vmatprep.subr.mxu0 0.0
    %2975 = vmatpush1.msra.mxu0 0.0
    %2976 = vmatprep.subr.mxu0 0.0
    %2977 = vmatpush1.msra.mxu0 0.0
    %2978 = vmatprep.subr.mxu0 0.0
    %2979 = vmatpush1.msra.mxu0 0.0
    %2980 = vmatprep.subr.mxu0 0.0
    %2981 = vmatpush1.msra.mxu0 0.0
    %2982 = vmatprep.subr.mxu0 0.0
    %2983 = vmatpush1.msra.mxu0 0.0
    %2984 = vmatprep.subr.mxu0 0.0
    %2985 = vmatpush1.msra.mxu0 0.0
    %2986 = vmatprep.subr.mxu0 0.0
    %2987 = vmatpush1.msra.mxu0 0.0
    %2988 = vmatprep.mubr.f32.mxu0 0.0
    %2989 = vmatmul.mubr.f32.gmra.mrb[0].mxu0 %v2913
    %v2990 = vpop.f32.mrb[0].mxu0
    %v2991 = vadd.f32 %v2894, %v2990
    %v2992 = vpop.f32.mrb[0].mxu0
    %2993 = vmatprep.mubr.f32.mxu0 0.0
    %2994 = vmatmul.mubr.f32.gmra.mrb[0].mxu0 %v2916
    %v2995 = vpop.f32.mrb[0].mxu0
    %v2996 = vadd.f32 %v2899, %v2995
    %v2997 = vpop.f32.mrb[0].mxu0
    %2998 = vmatprep.mubr.f32.mxu0 0.0
    %2999 = vmatmul.mubr.f32.gmra.mrb[0].mxu0 %v2919
    %v3000 = vpop.f32.mrb[0].mxu0
    %v3001 = vadd.f32 %v2904, %v3000
    %v3002 = vpop.f32.mrb[0].mxu0
    %3003 = vmatprep.mubr.f32.mxu0 0.0
    %3004 = vmatmul.mubr.f32.gmra.mrb[0].mxu0 %v2922
    %v3005 = vpop.f32.mrb[0].mxu0
    %v3006 = vadd.f32 %v2909, %v3005
    %v3007 = vpop.f32.mrb[0].mxu0
    %3008 = vdwg.mxu0
    %s3009 = scalar_lea.vmem %s19, 64
    %v3010 = vld [vmem:[%s3009] sm:$0xff]
    %v3011 = vld [vmem:[%s3009 + $0x8] sm:$0xff]
    %v3012 = vld [vmem:[%s3009 + $0x10] sm:$0xff]
    %v3013 = vld [vmem:[%s3009 + $0x18] sm:$0xff]
    %s3014 = scalar_lea.vmem %s20, 256
    %v3015 = vld [vmem:[%s3014] sm:$0xff]
    %v3016 = vld [vmem:[%s3014 + $0x8] sm:$0xff]
    %v3017 = vld [vmem:[%s3014 + $0x10] sm:$0xff]
    %v3018 = vld [vmem:[%s3014 + $0x18] sm:$0xff]
    %v3019 = vld [vmem:[%s3014 + $0x20] sm:$0xff]
    %v3020 = vld [vmem:[%s3014 + $0x28] sm:$0xff]
    %v3021 = vld [vmem:[%s3014 + $0x30] sm:$0xff]
    %v3022 = vld [vmem:[%s3014 + $0x38] sm:$0xff]
    %v3023 = vld [vmem:[%s3014 + $0x40] sm:$0xff]
    %v3024 = vld [vmem:[%s3014 + $0x48] sm:$0xff]
    %v3025 = vld [vmem:[%s3014 + $0x50] sm:$0xff]
    %v3026 = vld [vmem:[%s3014 + $0x58] sm:$0xff]
    %v3027 = vld [vmem:[%s3014 + $0x60] sm:$0xff]
    %v3028 = vld [vmem:[%s3014 + $0x68] sm:$0xff]
    %v3029 = vld [vmem:[%s3014 + $0x70] sm:$0xff]
    %v3030 = vld [vmem:[%s3014 + $0x78] sm:$0xff]
    %v3031 = vpack.c.bf16 %v3016, %v3015
    %v3032 = vpack.c.bf16 %v3018, %v3017
    %v3033 = vpack.c.bf16 %v3020, %v3019
    %v3034 = vpack.c.bf16 %v3022, %v3021
    %v3035 = vpack.c.bf16 %v3024, %v3023
    %v3036 = vpack.c.bf16 %v3026, %v3025
    %v3037 = vpack.c.bf16 %v3028, %v3027
    %v3038 = vpack.c.bf16 %v3030, %v3029
    %3039 = vmatprep.subr.bf16.mxu0 0
    %3040 = vmatpush1.bf16.msra.mxu0 %v3031
    %3041 = vmatprep.subr.bf16.mxu0 0
    %3042 = vmatpush1.bf16.msra.mxu0 %v3032
    %3043 = vmatprep.subr.bf16.mxu0 0
    %3044 = vmatpush1.bf16.msra.mxu0 %v3033
    %3045 = vmatprep.subr.bf16.mxu0 0
    %3046 = vmatpush1.bf16.msra.mxu0 %v3034
    %3047 = vmatprep.subr.bf16.mxu0 0
    %3048 = vmatpush1.bf16.msra.mxu0 %v3035
    %3049 = vmatprep.subr.bf16.mxu0 0
    %3050 = vmatpush1.bf16.msra.mxu0 %v3036
    %3051 = vmatprep.subr.bf16.mxu0 0
    %3052 = vmatpush1.bf16.msra.mxu0 %v3037
    %3053 = vmatprep.subr.bf16.mxu0 0
    %3054 = vmatpush1.bf16.msra.mxu0 %v3038
    %3055 = vmatprep.subr.bf16.mxu0 0
    %3056 = vmatpush1.bf16.msra.mxu0 0
    %3057 = vmatprep.subr.bf16.mxu0 0
    %3058 = vmatpush1.bf16.msra.mxu0 0
    %3059 = vmatprep.subr.bf16.mxu0 0
    %3060 = vmatpush1.bf16.msra.mxu0 0
    %3061 = vmatprep.subr.bf16.mxu0 0
    %3062 = vmatpush1.bf16.msra.mxu0 0
    %3063 = vmatprep.subr.bf16.mxu0 0
    %3064 = vmatpush1.bf16.msra.mxu0 0
    %3065 = vmatprep.subr.bf16.mxu0 0
    %3066 = vmatpush1.bf16.msra.mxu0 0
    %3067 = vmatprep.subr.bf16.mxu0 0
    %3068 = vmatpush1.bf16.msra.mxu0 0
    %3069 = vmatprep.subr.bf16.mxu0 0
    %3070 = vmatpush1.bf16.msra.mxu0 0
    %3071 = vmatprep.mubr.bf16.mxu0 0
    %3072 = vmatmul.mubr.bf16.gmra.mrb[0].mxu0 %v2694
    %v3073 = vpop.f32.mrb[0].mxu0
    %v3074 = vadd.f32 0.0, %v3073
    %v3075 = vpop.f32.mrb[0].mxu0
    %v3076 = vpop.f32.mrb[0].mxu0
    %v3077 = vadd.f32 0.0, %v3076
    %v3078 = vpop.f32.mrb[0].mxu0
    %3079 = vdwg.mxu0
    %v3081 = vsel %vm681, %v3010, 0
    %v3084 = vsel %vm681, %v3011, 0
    %v3087 = vsel %vm681, %v3012, 0
    %v3090 = vsel %vm681, %v3013, 0
    %3092 = vmatprep.subr.mxu0 0.0
    %3093 = vmatpush1.msra.mxu0 %v3074
    %3094 = vmatprep.subr.mxu0 0.0
    %3095 = vmatpush1.msra.mxu0 %v3077
    %3096 = vmatprep.subr.mxu0 0.0
    %3097 = vmatpush1.msra.mxu0 0.0
    %3098 = vmatprep.subr.mxu0 0.0
    %3099 = vmatpush1.msra.mxu0 0.0
    %3100 = vmatprep.subr.mxu0 0.0
    %3101 = vmatpush1.msra.mxu0 0.0
    %3102 = vmatprep.subr.mxu0 0.0
    %3103 = vmatpush1.msra.mxu0 0.0
    %3104 = vmatprep.subr.mxu0 0.0
    %3105 = vmatpush1.msra.mxu0 0.0
    %3106 = vmatprep.subr.mxu0 0.0
    %3107 = vmatpush1.msra.mxu0 0.0
    %3108 = vmatprep.subr.mxu0 0.0
    %3109 = vmatpush1.msra.mxu0 0.0
    %3110 = vmatprep.subr.mxu0 0.0
    %3111 = vmatpush1.msra.mxu0 0.0
    %3112 = vmatprep.subr.mxu0 0.0
    %3113 = vmatpush1.msra.mxu0 0.0
    %3114 = vmatprep.subr.mxu0 0.0
    %3115 = vmatpush1.msra.mxu0 0.0
    %3116 = vmatprep.subr.mxu0 0.0
    %3117 = vmatpush1.msra.mxu0 0.0
    %3118 = vmatprep.subr.mxu0 0.0
    %3119 = vmatpush1.msra.mxu0 0.0
    %3120 = vmatprep.subr.mxu0 0.0
    %3121 = vmatpush1.msra.mxu0 0.0
    %3122 = vmatprep.subr.mxu0 0.0
    %3123 = vmatpush1.msra.mxu0 0.0
    %3124 = vmatprep.subr.mxu0 0.0
    %3125 = vmatpush1.msra.mxu0 0.0
    %3126 = vmatprep.subr.mxu0 0.0
    %3127 = vmatpush1.msra.mxu0 0.0
    %3128 = vmatprep.subr.mxu0 0.0
    %3129 = vmatpush1.msra.mxu0 0.0
    %3130 = vmatprep.subr.mxu0 0.0
    %3131 = vmatpush1.msra.mxu0 0.0
    %3132 = vmatprep.subr.mxu0 0.0
    %3133 = vmatpush1.msra.mxu0 0.0
    %3134 = vmatprep.subr.mxu0 0.0
    %3135 = vmatpush1.msra.mxu0 0.0
    %3136 = vmatprep.subr.mxu0 0.0
    %3137 = vmatpush1.msra.mxu0 0.0
    %3138 = vmatprep.subr.mxu0 0.0
    %3139 = vmatpush1.msra.mxu0 0.0
    %3140 = vmatprep.subr.mxu0 0.0
    %3141 = vmatpush1.msra.mxu0 0.0
    %3142 = vmatprep.subr.mxu0 0.0
    %3143 = vmatpush1.msra.mxu0 0.0
    %3144 = vmatprep.subr.mxu0 0.0
    %3145 = vmatpush1.msra.mxu0 0.0
    %3146 = vmatprep.subr.mxu0 0.0
    %3147 = vmatpush1.msra.mxu0 0.0
    %3148 = vmatprep.subr.mxu0 0.0
    %3149 = vmatpush1.msra.mxu0 0.0
    %3150 = vmatprep.subr.mxu0 0.0
    %3151 = vmatpush1.msra.mxu0 0.0
    %3152 = vmatprep.subr.mxu0 0.0
    %3153 = vmatpush1.msra.mxu0 0.0
    %3154 = vmatprep.subr.mxu0 0.0
    %3155 = vmatpush1.msra.mxu0 0.0
    %3156 = vmatprep.mubr.f32.mxu0 0.0
    %3157 = vmatmul.mubr.f32.gmra.mrb[0].mxu0 %v3081
    %v3158 = vpop.f32.mrb[0].mxu0
    %v3159 = vadd.f32 0.0, %v3158
    %v3160 = vpop.f32.mrb[0].mxu0
    %3161 = vmatprep.mubr.f32.mxu0 0.0
    %3162 = vmatmul.mubr.f32.gmra.mrb[0].mxu0 %v3084
    %v3163 = vpop.f32.mrb[0].mxu0
    %v3164 = vadd.f32 0.0, %v3163
    %v3165 = vpop.f32.mrb[0].mxu0
    %3166 = vmatprep.mubr.f32.mxu0 0.0
    %3167 = vmatmul.mubr.f32.gmra.mrb[0].mxu0 %v3087
    %v3168 = vpop.f32.mrb[0].mxu0
    %v3169 = vadd.f32 0.0, %v3168
    %v3170 = vpop.f32.mrb[0].mxu0
    %3171 = vmatprep.mubr.f32.mxu0 0.0
    %3172 = vmatmul.mubr.f32.gmra.mrb[0].mxu0 %v3090
    %v3173 = vpop.f32.mrb[0].mxu0
    %v3174 = vadd.f32 0.0, %v3173
    %v3175 = vpop.f32.mrb[0].mxu0
    %3176 = vdwg.mxu0
    %v3177 = vadd.f32 %v2991, %v3159
    %v3178 = vadd.f32 %v2996, %v3164
    %v3179 = vadd.f32 %v3001, %v3169
    %v3180 = vadd.f32 %v3006, %v3174
    %v3182 = vlaneseq
    %v3183 = vshrl.u32 %v3182, 7
    %v3184 = vsub.s32 0, %v3183
    %v3185 = vrot.slane %v2673, %v3184
    %v3187 = vadd.f32 %v3177, %v3185
    %v3188 = vadd.f32 %v3178, %v3185
    %v3189 = vadd.f32 %v3179, %v3185
    %v3190 = vadd.f32 %v3180, %v3185
    %3191 = vst.msk [vmem:[%s25] sm:$0xff] %vm99, %v3187
    %3192 = vst.msk [vmem:[%s25 + $0x8] sm:$0xff] %vm99, %v3188
    %3193 = vst.msk [vmem:[%s25 + $0x10] sm:$0xff] %vm99, %v3189
    %3194 = vst.msk [vmem:[%s25 + $0x18] sm:$0xff] %vm99, %v3190
    // Predicated region
    $region90: #{baur_forward.1} parent=1 // pred_check
      _
    $region91: #{baur_forward.1} parent=1 // pred_check_branch
      %3196 = sbr.rel (0) target = $region93
    $region92: #{baur_forward.1} parent=1 // pred_region
      %s3198 = ssub.s32 32, 32
      %3199 = vsyncadd [#allocation3], %s3198
      %s3201 = sshll.u32 [#allocation2], 4
      %s3202 = int_to_ptr.vmem [resolvable:$true] %s3201
      %3204 = dma.vmem_to_hbm [thread:$0]  %s3202, 32, %s22, [#allocation3]
    $region93: #{baur_forward.1} parent=1 // pred_fallthru
      _
    // Predicated region
    $region94: #{baur_forward.1} parent=1 // pred_check
      _
    $region95: #{baur_forward.1} parent=1 // pred_check_branch
      %3206 = sbr.rel (0) target = $region97
    $region96: #{baur_forward.1} parent=1 // pred_region
      %s3208 = ssub.s32 32, 32
      %3209 = vsyncadd [#allocation5], %s3208
      %s3211 = sshll.u32 [#allocation4], 4
      %s3212 = int_to_ptr.vmem [resolvable:$true] %s3211
      %3214 = dma.vmem_to_hbm [thread:$0]  %s3212, 32, %s23, [#allocation5]
    $region97: #{baur_forward.1} parent=1 // pred_fallthru
      _
    // Predicated region
    $region98: #{baur_forward.1} parent=1 // pred_check
      _
    $region99: #{baur_forward.1} parent=1 // pred_check_branch
      %3216 = sbr.rel (0) target = $region101
    $region100: #{baur_forward.1} parent=1 // pred_region
      %s3218 = ssub.s32 32, 32
      %3219 = vsyncadd [#allocation5], %s3218
      %s3221 = sshll.u32 [#allocation6], 4
      %s3222 = int_to_ptr.vmem [resolvable:$true] %s3221
      %3224 = dma.vmem_to_hbm [thread:$0]  %s3222, 32, %s24, [#allocation5]
    $region101: #{baur_forward.1} parent=1 // pred_fallthru
      _
    // Predicated region
    $region102: #{baur_forward.1} parent=1 // pred_check
      _
    $region103: #{baur_forward.1} parent=1 // pred_check_branch
      %3226 = sbr.rel (0) target = $region105
    $region104: #{baur_forward.1} parent=1 // pred_region
      _
    $region105: #{baur_forward.1} parent=1 // pred_fallthru
      _
    // Predicated region
    $region106: #{baur_forward.1} parent=1 // pred_check
      _
    $region107: #{baur_forward.1} parent=1 // pred_check_branch
      %3228 = sbr.rel (0) target = $region109
    $region108: #{baur_forward.1} parent=1 // pred_region
      %3229 = dma.done [#allocation3], 32
    $region109: #{baur_forward.1} parent=1 // pred_fallthru
      _
    // Predicated region
    $region110: #{baur_forward.1} parent=1 // pred_check
      _
    $region111: #{baur_forward.1} parent=1 // pred_check_branch
      %3231 = sbr.rel (0) target = $region113
    $region112: #{baur_forward.1} parent=1 // pred_region
      %3232 = dma.done [#allocation5], 32
    $region113: #{baur_forward.1} parent=1 // pred_fallthru
      _
    // Predicated region
    $region114: #{baur_forward.1} parent=1 // pred_check
      _
    $region115: #{baur_forward.1} parent=1 // pred_check_branch
      %3234 = sbr.rel (0) target = $region117
    $region116: #{baur_forward.1} parent=1 // pred_region
      %3235 = dma.done [#allocation5], 32
    $region117: #{baur_forward.1} parent=1 // pred_fallthru
      _
    // Predicated region
    $region118: #{baur_forward.1} parent=1 // pred_check
      _
    $region119: #{baur_forward.1} parent=1 // pred_check_branch
      %3237 = sbr.rel (0) target = $region121
    $region120: #{baur_forward.1} parent=1 // pred_region
      _
    $region121: #{baur_forward.1} parent=1 // pred_fallthru
      _
    %3238 = vsyncpa [#allocation3], 1
    %3239 = vsyncpa [#allocation5], 1

</llo_original>
